<compile_context>
chip_gen: v5e
topology: v5e:2x2
jax: 0.10.0
libtpu: 0.0.40
codegen_flags: <defaults>
</compile_context>

<pallas_src>
import math

import jax
import jax.numpy as jnp
from jax.experimental import pallas as pl
from jax.experimental.pallas import tpu as pltpu

D_MODEL = 32
HEADS = 4
D_K = D_MODEL // HEADS
D_FF = 2048          # FeedForward default d_ff=2048 in the reference module
EPS = 1e-6
NEG_INF = -1e9


# ------------------------------ in-kernel helpers -------------------------------

def _norm(x, alpha, bias):
    """Tutorial Norm: alpha*(x-mean)/(std_unbiased + eps) + bias (per row)."""
    mean = jnp.mean(x, axis=-1, keepdims=True)
    d = x - mean
    var = jnp.sum(d * d, axis=-1, keepdims=True) * (1.0 / (D_MODEL - 1))  # ddof=1 (torch.std)
    std = jnp.sqrt(var)
    inv = pl.reciprocal(std + EPS, approx=True)          # EUP slot, keeps VALU free
    return alpha * (d * inv) + bias


def _mha(x_q, x_kv, mask, wq, bq, wk, bk, wv, bv, wo, bo):
    """Multi-head attention on one batch element.

    x_q: (Sq, D) f32, x_kv: (Sk, D) f32, mask: (1 or Sq, Sk) f32 (1=keep, 0=mask)
    wq/wk/wv: (H, D, dk) bf16, bq/bk/bv: (H, 1, dk) f32, wo: (H, dk, D) bf16, bo: (1, D) f32
    """
    Sq = x_q.shape[0]
    Sk = x_kv.shape[0]

    xq_b = jnp.broadcast_to(x_q.astype(jnp.bfloat16)[None], (HEADS, Sq, D_MODEL))
    xkv_b = jnp.broadcast_to(x_kv.astype(jnp.bfloat16)[None], (HEADS, Sk, D_MODEL))

    # Per-head projections as batched matmuls (head axis is the leading batch dim).
    q = jnp.einsum('hsd,hdf->hsf', xq_b, wq, preferred_element_type=jnp.float32) + bq
    k = jnp.einsum('hsd,hdf->hsf', xkv_b, wk, preferred_element_type=jnp.float32) + bk
    v = jnp.einsum('hsd,hdf->hsf', xkv_b, wv, preferred_element_type=jnp.float32) + bv

    scale = 1.0 / math.sqrt(D_K)
    s = jnp.einsum('hqd,hkd->hqk', q.astype(jnp.bfloat16), k.astype(jnp.bfloat16),
                   preferred_element_type=jnp.float32) * scale
    # masked_fill(mask == 0, -1e9); mask broadcasts over heads (and over queries if (1, Sk))
    s = jnp.where(mask[None] == 0.0, NEG_INF, s)
    # softmax in f32
    s = s - jnp.max(s, axis=-1, keepdims=True)
    p = jnp.exp(s)
    p = p * pl.reciprocal(jnp.sum(p, axis=-1, keepdims=True), approx=True)

    o = jnp.einsum('hqk,hkd->hqd', p.astype(jnp.bfloat16), v.astype(jnp.bfloat16),
                   preferred_element_type=jnp.float32)
    # concat(heads) @ Wo  ==  sum_h  o_h @ Wo[h]
    proj = jnp.einsum('hqd,hdf->hqf', o.astype(jnp.bfloat16), wo,
                      preferred_element_type=jnp.float32)
    return jnp.sum(proj, axis=0) + bo


def _ffn(x, w1, b1, w2, b2):
    h = jnp.dot(x.astype(jnp.bfloat16), w1, preferred_element_type=jnp.float32) + b1
    h = jnp.maximum(h, 0.0)                               # ReLU (f32)
    return jnp.dot(h.astype(jnp.bfloat16), w2, preferred_element_type=jnp.float32) + b2


# --------------------------- fused decoder-layer kernel --------------------------

def decoder_layer_kernel(
        x_ref, fe_ref, le_ref, trg_mask_ref, f_src_mask_ref, l_src_mask_ref,
        norm_a_ref, norm_b_ref,
        a1_wq, a1_bq, a1_wk, a1_bk, a1_wv, a1_bv, a1_wo, a1_bo,
        a2_wq, a2_bq, a2_wk, a2_bk, a2_wv, a2_bv, a2_wo, a2_bo,
        ff_w1, ff_b1, ff_w2, ff_b2,
        o_ref):
    x = x_ref[...]                      # (S, D) f32 — stays resident for the whole layer
    fe = fe_ref[...]                    # (Sk, D)
    le = le_ref[...]                    # (Sk, D)
    trg_m = trg_mask_ref[...]           # (S, S)
    f_m = f_src_mask_ref[...]           # (1, Sk)
    l_m = l_src_mask_ref[...]           # (1, Sk)
    na = norm_a_ref[...]                # (4, D)
    nb = norm_b_ref[...]                # (4, D)

    # dropout_1..4 are identity in eval mode.
    x2 = _norm(x, na[0:1], nb[0:1])
    x = x + _mha(x2, x2, trg_m,
                 a1_wq[...], a1_bq[...], a1_wk[...], a1_bk[...],
                 a1_wv[...], a1_bv[...], a1_wo[...], a1_bo[...])

    x2 = _norm(x, na[1:2], nb[1:2])
    x = x + _mha(x2, fe, f_m,
                 a2_wq[...], a2_bq[...], a2_wk[...], a2_bk[...],
                 a2_wv[...], a2_bv[...], a2_wo[...], a2_bo[...])

    x2 = _norm(x, na[2:3], nb[2:3])
    # attn_2 reused for the second cross-attention, faithfully matching the PyTorch forward
    # (attn_3 exists in the module but is never called — almost certainly a bug upstream).
    x = x + _mha(x2, le, l_m,
                 a2_wq[...], a2_bq[...], a2_wk[...], a2_bk[...],
                 a2_wv[...], a2_bv[...], a2_wo[...], a2_bo[...])

    x2 = _norm(x, na[3:4], nb[3:4])
    x = x + _ffn(x2, ff_w1[...], ff_b1[...], ff_w2[...], ff_b2[...])

    o_ref[...] = x


# ------------------------------ host-side wrappers -------------------------------

def _const_spec(shape):
    zeros = (0,) * len(shape)
    return pl.BlockSpec(shape, lambda b, _z=zeros: _z)


def _per_head_attn(p):
    """(D,D)/(1,D) PyTorch-style linear params -> per-head bf16/f32 kernel params."""
    def heads_w_in(w):   # (D, D) -> (H, D, dk), head h gets output cols h*dk:(h+1)*dk
        return jnp.transpose(w.reshape(D_MODEL, HEADS, D_K), (1, 0, 2)).astype(jnp.bfloat16)

    def heads_b_in(b):   # (1, D) -> (H, 1, dk)
        return b.reshape(HEADS, 1, D_K).astype(jnp.float32)

    wo_h = p["wo"].reshape(HEADS, D_K, D_MODEL).astype(jnp.bfloat16)  # rows h*dk:(h+1)*dk
    return [heads_w_in(p["wq"]), heads_b_in(p["bq"]),
            heads_w_in(p["wk"]), heads_b_in(p["bk"]),
            heads_w_in(p["wv"]), heads_b_in(p["bv"]),
            wo_h, p["bo"].astype(jnp.float32)]


def prepare_params(params):
    kp = {
        "norm_alpha": jnp.concatenate(
            [params[f"norm_{i}"]["alpha"] for i in range(1, 5)], axis=0),   # (4, D) f32
        "norm_bias": jnp.concatenate(
            [params[f"norm_{i}"]["bias"] for i in range(1, 5)], axis=0),    # (4, D) f32
        "attn_1": _per_head_attn(params["attn_1"]),
        "attn_2": _per_head_attn(params["attn_2"]),
        "ff": [params["ff"]["w1"].astype(jnp.bfloat16), params["ff"]["b1"],
               params["ff"]["w2"].astype(jnp.bfloat16), params["ff"]["b2"]],
    }
    return kp


def decoder_layer(params, x, f_e_outputs, l_e_outputs, f_src_mask, l_src_mask, trg_mask):
    B, S, D = x.shape
    Sk_f = f_e_outputs.shape[1]
    Sk_l = l_e_outputs.shape[1]
    mq_f = f_src_mask.shape[1]      # 1 (key-validity row) or S (full mask)
    mq_l = l_src_mask.shape[1]

    kp = prepare_params(params)

    attn_specs = [
        _const_spec((HEADS, D_MODEL, D_K)), _const_spec((HEADS, 1, D_K)),   # wq, bq
        _const_spec((HEADS, D_MODEL, D_K)), _const_spec((HEADS, 1, D_K)),   # wk, bk
        _const_spec((HEADS, D_MODEL, D_K)), _const_spec((HEADS, 1, D_K)),   # wv, bv
        _const_spec((HEADS, D_K, D_MODEL)), _const_spec((1, D_MODEL)),      # wo, bo
    ]

    out = pl.pallas_call(
        decoder_layer_kernel,
        out_shape=jax.ShapeDtypeStruct((B, S, D), x.dtype),
        grid=(B,),
        in_specs=[
            pl.BlockSpec((None, S, D), lambda b: (b, 0, 0)),          # x
            pl.BlockSpec((None, Sk_f, D), lambda b: (b, 0, 0)),       # f_e_outputs
            pl.BlockSpec((None, Sk_l, D), lambda b: (b, 0, 0)),       # l_e_outputs
            pl.BlockSpec((None, S, S), lambda b: (b, 0, 0)),          # trg_mask
            pl.BlockSpec((None, mq_f, Sk_f), lambda b: (b, 0, 0)),    # f_src_mask
            pl.BlockSpec((None, mq_l, Sk_l), lambda b: (b, 0, 0)),    # l_src_mask
            _const_spec((4, D_MODEL)),                                # norm alphas
            _const_spec((4, D_MODEL)),                                # norm biases
        ] + attn_specs + attn_specs + [
            _const_spec((D_MODEL, D_FF)), _const_spec((1, D_FF)),     # ff w1, b1
            _const_spec((D_FF, D_MODEL)), _const_spec((1, D_MODEL)),  # ff w2, b2
        ],
        out_specs=pl.BlockSpec((None, S, D), lambda b: (b, 0, 0)),
        compiler_params=pltpu.CompilerParams(
            dimension_semantics=("parallel",)),                       # v7x: 2 TCs share batch
    )(x, f_e_outputs, l_e_outputs, trg_mask, f_src_mask, l_src_mask,
      kp["norm_alpha"], kp["norm_bias"],
      *kp["attn_1"], *kp["attn_2"], *kp["ff"])
    return out


# ------------------------------ parameter setup ---------------------------------

def _linear_params(key, fan_in, fan_out):
    # PyTorch nn.Linear default: U(-1/sqrt(fan_in), 1/sqrt(fan_in)); weight stored as (in, out)
    kw, kb = jax.random.split(key)
    bound = 1.0 / math.sqrt(fan_in)
    w = jax.random.uniform(kw, (fan_in, fan_out), jnp.float32, -bound, bound)
    b = jax.random.uniform(kb, (1, fan_out), jnp.float32, -bound, bound)
    return w, b


def init_params(key):
    keys = jax.random.split(key, 16)
    params = {}
    for i in range(1, 5):
        params[f"norm_{i}"] = {
            "alpha": jnp.ones((1, D_MODEL), jnp.float32),
            "bias": jnp.zeros((1, D_MODEL), jnp.float32),
        }
    for idx, name in enumerate(["attn_1", "attn_2", "attn_3"]):  # attn_3: parity only (unused)
        kq, kk, kv, ko = jax.random.split(keys[idx], 4)
        wq, bq = _linear_params(kq, D_MODEL, D_MODEL)
        wk, bk = _linear_params(kk, D_MODEL, D_MODEL)
        wv, bv = _linear_params(kv, D_MODEL, D_MODEL)
        wo, bo = _linear_params(ko, D_MODEL, D_MODEL)
        params[name] = {"wq": wq, "bq": bq, "wk": wk, "bk": bk,
                        "wv": wv, "bv": bv, "wo": wo, "bo": bo}
    k1, k2 = jax.random.split(keys[4])
    w1, b1 = _linear_params(k1, D_MODEL, D_FF)
    w2, b2 = _linear_params(k2, D_FF, D_MODEL)
    params["ff"] = {"w1": w1, "b1": b1, "w2": w2, "b2": b2}
    return params


# ------------------------------------ main ---------------------------------------

if __name__ == "__main__":
    B, S, S_ENC = 2, 8, 8
    key = jax.random.PRNGKey(0)
    kx, kf, kl, kparam = jax.random.split(key, 4)

    x = jax.random.normal(kx, (B, S, D_MODEL), jnp.float32)
    f_e_outputs = jax.random.normal(kf, (B, S_ENC, D_MODEL), jnp.float32)
    l_e_outputs = jax.random.normal(kl, (B, S_ENC, D_MODEL), jnp.float32)

    # trg_mask: causal (B, S, S); src masks: (B, 1, S_enc) key-validity rows
    trg_mask = jnp.broadcast_to(jnp.tril(jnp.ones((S, S), jnp.float32)), (B, S, S))
    src_row = (jnp.arange(S_ENC) < S_ENC - 1).astype(jnp.float32)   # mask last encoder pos
    f_src_mask = jnp.broadcast_to(src_row[None, None, :], (B, 1, S_ENC))
    l_src_mask = jnp.ones((B, 1, S_ENC), jnp.float32)

    params = init_params(kparam)

    out = decoder_layer(params, x, f_e_outputs, l_e_outputs,
                        f_src_mask, l_src_mask, trg_mask)
    out = jax.block_until_ready(out)
    assert out.shape == (B, S, D_MODEL) and bool(jnp.all(jnp.isfinite(out)))
    print("KERNEL_OK")
</pallas_src>

<mosaic_0001>
module attributes {stable_mosaic.version = 11 : i64} {
  func.func @decoder_layer_kernel(%arg0: i32, %arg1: memref<1x8x32xf32, #tpu.memory_space<vmem>>, %arg2: memref<1x8x32xf32, #tpu.memory_space<vmem>>, %arg3: memref<1x8x32xf32, #tpu.memory_space<vmem>>, %arg4: memref<1x8x8xf32, #tpu.memory_space<vmem>>, %arg5: memref<1x1x8xf32, #tpu.memory_space<vmem>>, %arg6: memref<1x1x8xf32, #tpu.memory_space<vmem>>, %arg7: memref<4x32xf32, #tpu.memory_space<vmem>>, %arg8: memref<4x32xf32, #tpu.memory_space<vmem>>, %arg9: memref<4x32x8xbf16, #tpu.memory_space<vmem>>, %arg10: memref<4x1x8xf32, #tpu.memory_space<vmem>>, %arg11: memref<4x32x8xbf16, #tpu.memory_space<vmem>>, %arg12: memref<4x1x8xf32, #tpu.memory_space<vmem>>, %arg13: memref<4x32x8xbf16, #tpu.memory_space<vmem>>, %arg14: memref<4x1x8xf32, #tpu.memory_space<vmem>>, %arg15: memref<4x8x32xbf16, #tpu.memory_space<vmem>>, %arg16: memref<1x32xf32, #tpu.memory_space<vmem>>, %arg17: memref<4x32x8xbf16, #tpu.memory_space<vmem>>, %arg18: memref<4x1x8xf32, #tpu.memory_space<vmem>>, %arg19: memref<4x32x8xbf16, #tpu.memory_space<vmem>>, %arg20: memref<4x1x8xf32, #tpu.memory_space<vmem>>, %arg21: memref<4x32x8xbf16, #tpu.memory_space<vmem>>, %arg22: memref<4x1x8xf32, #tpu.memory_space<vmem>>, %arg23: memref<4x8x32xbf16, #tpu.memory_space<vmem>>, %arg24: memref<1x32xf32, #tpu.memory_space<vmem>>, %arg25: memref<32x2048xbf16, #tpu.memory_space<vmem>>, %arg26: memref<1x2048xf32, #tpu.memory_space<vmem>>, %arg27: memref<2048x32xbf16, #tpu.memory_space<vmem>>, %arg28: memref<1x32xf32, #tpu.memory_space<vmem>>, %arg29: memref<1x8x32xf32, #tpu.memory_space<vmem>>) attributes {dimension_semantics = [#tpu.dimension_semantics<parallel>], iteration_bounds = array<i64: 2>, scalar_prefetch = 0 : i64, scratch_operands = 0 : i64, tpu.core_type = #tpu.core_type<tc>, window_params = [{transform_indices = @transform_0, window_bounds = array<i64: 1, 8, 32>}, {transform_indices = @transform_1, window_bounds = array<i64: 1, 8, 32>}, {transform_indices = @transform_2, window_bounds = array<i64: 1, 8, 32>}, {transform_indices = @transform_3, window_bounds = array<i64: 1, 8, 8>}, {transform_indices = @transform_4, window_bounds = array<i64: 1, 1, 8>}, {transform_indices = @transform_5, window_bounds = array<i64: 1, 1, 8>}, {pipeline_mode = #tpu.pipeline_mode<synchronous>, transform_indices = @transform_6, window_bounds = array<i64: 4, 32>}, {pipeline_mode = #tpu.pipeline_mode<synchronous>, transform_indices = @transform_7, window_bounds = array<i64: 4, 32>}, {pipeline_mode = #tpu.pipeline_mode<synchronous>, transform_indices = @transform_8, window_bounds = array<i64: 4, 32, 8>}, {pipeline_mode = #tpu.pipeline_mode<synchronous>, transform_indices = @transform_9, window_bounds = array<i64: 4, 1, 8>}, {pipeline_mode = #tpu.pipeline_mode<synchronous>, transform_indices = @transform_10, window_bounds = array<i64: 4, 32, 8>}, {pipeline_mode = #tpu.pipeline_mode<synchronous>, transform_indices = @transform_11, window_bounds = array<i64: 4, 1, 8>}, {pipeline_mode = #tpu.pipeline_mode<synchronous>, transform_indices = @transform_12, window_bounds = array<i64: 4, 32, 8>}, {pipeline_mode = #tpu.pipeline_mode<synchronous>, transform_indices = @transform_13, window_bounds = array<i64: 4, 1, 8>}, {pipeline_mode = #tpu.pipeline_mode<synchronous>, transform_indices = @transform_14, window_bounds = array<i64: 4, 8, 32>}, {pipeline_mode = #tpu.pipeline_mode<synchronous>, transform_indices = @transform_15, window_bounds = array<i64: 1, 32>}, {pipeline_mode = #tpu.pipeline_mode<synchronous>, transform_indices = @transform_16, window_bounds = array<i64: 4, 32, 8>}, {pipeline_mode = #tpu.pipeline_mode<synchronous>, transform_indices = @transform_17, window_bounds = array<i64: 4, 1, 8>}, {pipeline_mode = #tpu.pipeline_mode<synchronous>, transform_indices = @transform_18, window_bounds = array<i64: 4, 32, 8>}, {pipeline_mode = #tpu.pipeline_mode<synchronous>, transform_indices = @transform_19, window_bounds = array<i64: 4, 1, 8>}, {pipeline_mode = #tpu.pipeline_mode<synchronous>, transform_indices = @transform_20, window_bounds = array<i64: 4, 32, 8>}, {pipeline_mode = #tpu.pipeline_mode<synchronous>, transform_indices = @transform_21, window_bounds = array<i64: 4, 1, 8>}, {pipeline_mode = #tpu.pipeline_mode<synchronous>, transform_indices = @transform_22, window_bounds = array<i64: 4, 8, 32>}, {pipeline_mode = #tpu.pipeline_mode<synchronous>, transform_indices = @transform_23, window_bounds = array<i64: 1, 32>}, {pipeline_mode = #tpu.pipeline_mode<synchronous>, transform_indices = @transform_24, window_bounds = array<i64: 32, 2048>}, {pipeline_mode = #tpu.pipeline_mode<synchronous>, transform_indices = @transform_25, window_bounds = array<i64: 1, 2048>}, {pipeline_mode = #tpu.pipeline_mode<synchronous>, transform_indices = @transform_26, window_bounds = array<i64: 2048, 32>}, {pipeline_mode = #tpu.pipeline_mode<synchronous>, transform_indices = @transform_27, window_bounds = array<i64: 1, 32>}, {transform_indices = @transform_28, window_bounds = array<i64: 1, 8, 32>}]} {
    %c0 = arith.constant 0 : index
    %c0_0 = arith.constant 0 : index
    %c0_1 = arith.constant 0 : index
    %0 = vector.load %arg1[%c0, %c0_0, %c0_1] : memref<1x8x32xf32, #tpu.memory_space<vmem>>, vector<1x8x32xf32>
    %1 = vector.shape_cast %0 : vector<1x8x32xf32> to vector<8x32xf32>
    %c0_2 = arith.constant 0 : index
    %c0_3 = arith.constant 0 : index
    %c0_4 = arith.constant 0 : index
    %2 = vector.load %arg2[%c0_2, %c0_3, %c0_4] : memref<1x8x32xf32, #tpu.memory_space<vmem>>, vector<1x8x32xf32>
    %3 = vector.shape_cast %2 : vector<1x8x32xf32> to vector<8x32xf32>
    %c0_5 = arith.constant 0 : index
    %c0_6 = arith.constant 0 : index
    %c0_7 = arith.constant 0 : index
    %4 = vector.load %arg3[%c0_5, %c0_6, %c0_7] : memref<1x8x32xf32, #tpu.memory_space<vmem>>, vector<1x8x32xf32>
    %5 = vector.shape_cast %4 : vector<1x8x32xf32> to vector<8x32xf32>
    %c0_8 = arith.constant 0 : index
    %c0_9 = arith.constant 0 : index
    %c0_10 = arith.constant 0 : index
    %6 = vector.load %arg4[%c0_8, %c0_9, %c0_10] : memref<1x8x8xf32, #tpu.memory_space<vmem>>, vector<1x8x8xf32>
    %7 = vector.shape_cast %6 : vector<1x8x8xf32> to vector<8x8xf32>
    %c0_11 = arith.constant 0 : index
    %c0_12 = arith.constant 0 : index
    %c0_13 = arith.constant 0 : index
    %8 = vector.load %arg5[%c0_11, %c0_12, %c0_13] : memref<1x1x8xf32, #tpu.memory_space<vmem>>, vector<1x1x8xf32>
    %9 = vector.shape_cast %8 : vector<1x1x8xf32> to vector<1x8xf32>
    %c0_14 = arith.constant 0 : index
    %c0_15 = arith.constant 0 : index
    %c0_16 = arith.constant 0 : index
    %10 = vector.load %arg6[%c0_14, %c0_15, %c0_16] : memref<1x1x8xf32, #tpu.memory_space<vmem>>, vector<1x1x8xf32>
    %11 = vector.shape_cast %10 : vector<1x1x8xf32> to vector<1x8xf32>
    %c0_17 = arith.constant 0 : index
    %c0_18 = arith.constant 0 : index
    %12 = vector.load %arg7[%c0_17, %c0_18] : memref<4x32xf32, #tpu.memory_space<vmem>>, vector<4x32xf32>
    %c0_19 = arith.constant 0 : index
    %c0_20 = arith.constant 0 : index
    %13 = vector.load %arg8[%c0_19, %c0_20] : memref<4x32xf32, #tpu.memory_space<vmem>>, vector<4x32xf32>
    %14 = vector.extract_strided_slice %12 {offsets = [0, 0], sizes = [1, 32], strides = [1, 1]} : vector<4x32xf32> to vector<1x32xf32>
    %15 = vector.extract_strided_slice %13 {offsets = [0, 0], sizes = [1, 32], strides = [1, 1]} : vector<4x32xf32> to vector<1x32xf32>
    %cst = arith.constant dense<0.000000e+00> : vector<8xf32>
    %16 = vector.multi_reduction <add>, %1, %cst [1] : vector<8x32xf32> to vector<8xf32>
    %17 = vector.shape_cast %16 : vector<8xf32> to vector<8x1xf32>
    %cst_21 = arith.constant 3.200000e+01 : f32
    %18 = vector.broadcast %cst_21 : f32 to vector<8x1xf32>
    %19 = arith.divf %17, %18 : vector<8x1xf32>
    %20 = vector.broadcast %19 : vector<8x1xf32> to vector<8x32xf32>
    %21 = arith.subf %1, %20 : vector<8x32xf32>
    %22 = arith.mulf %21, %21 : vector<8x32xf32>
    %cst_22 = arith.constant dense<0.000000e+00> : vector<8xf32>
    %23 = vector.multi_reduction <add>, %22, %cst_22 [1] : vector<8x32xf32> to vector<8xf32>
    %24 = vector.shape_cast %23 : vector<8xf32> to vector<8x1xf32>
    %cst_23 = arith.constant 0.0322580636 : f32
    %25 = vector.broadcast %cst_23 : f32 to vector<8x1xf32>
    %26 = arith.mulf %24, %25 : vector<8x1xf32>
    %27 = math.sqrt %26 : vector<8x1xf32>
    %cst_24 = arith.constant 9.99999997E-7 : f32
    %28 = vector.broadcast %cst_24 : f32 to vector<8x1xf32>
    %29 = arith.addf %27, %28 : vector<8x1xf32>
    %30 = tpu.reciprocal %29 {approx = true} : vector<8x1xf32> -> vector<8x1xf32>
    %31 = vector.broadcast %30 : vector<8x1xf32> to vector<8x32xf32>
    %32 = arith.mulf %21, %31 : vector<8x32xf32>
    %33 = vector.broadcast %14 : vector<1x32xf32> to vector<8x32xf32>
    %34 = arith.mulf %33, %32 : vector<8x32xf32>
    %35 = vector.broadcast %15 : vector<1x32xf32> to vector<8x32xf32>
    %36 = arith.addf %34, %35 : vector<8x32xf32>
    %c0_25 = arith.constant 0 : index
    %c0_26 = arith.constant 0 : index
    %c0_27 = arith.constant 0 : index
    %37 = vector.load %arg9[%c0_25, %c0_26, %c0_27] : memref<4x32x8xbf16, #tpu.memory_space<vmem>>, vector<4x32x8xbf16>
    %c0_28 = arith.constant 0 : index
    %c0_29 = arith.constant 0 : index
    %c0_30 = arith.constant 0 : index
    %38 = vector.load %arg10[%c0_28, %c0_29, %c0_30] : memref<4x1x8xf32, #tpu.memory_space<vmem>>, vector<4x1x8xf32>
    %c0_31 = arith.constant 0 : index
    %c0_32 = arith.constant 0 : index
    %c0_33 = arith.constant 0 : index
    %39 = vector.load %arg11[%c0_31, %c0_32, %c0_33] : memref<4x32x8xbf16, #tpu.memory_space<vmem>>, vector<4x32x8xbf16>
    %c0_34 = arith.constant 0 : index
    %c0_35 = arith.constant 0 : index
    %c0_36 = arith.constant 0 : index
    %40 = vector.load %arg12[%c0_34, %c0_35, %c0_36] : memref<4x1x8xf32, #tpu.memory_space<vmem>>, vector<4x1x8xf32>
    %c0_37 = arith.constant 0 : index
    %c0_38 = arith.constant 0 : index
    %c0_39 = arith.constant 0 : index
    %41 = vector.load %arg13[%c0_37, %c0_38, %c0_39] : memref<4x32x8xbf16, #tpu.memory_space<vmem>>, vector<4x32x8xbf16>
    %c0_40 = arith.constant 0 : index
    %c0_41 = arith.constant 0 : index
    %c0_42 = arith.constant 0 : index
    %42 = vector.load %arg14[%c0_40, %c0_41, %c0_42] : memref<4x1x8xf32, #tpu.memory_space<vmem>>, vector<4x1x8xf32>
    %c0_43 = arith.constant 0 : index
    %c0_44 = arith.constant 0 : index
    %c0_45 = arith.constant 0 : index
    %43 = vector.load %arg15[%c0_43, %c0_44, %c0_45] : memref<4x8x32xbf16, #tpu.memory_space<vmem>>, vector<4x8x32xbf16>
    %c0_46 = arith.constant 0 : index
    %c0_47 = arith.constant 0 : index
    %44 = vector.load %arg16[%c0_46, %c0_47] : memref<1x32xf32, #tpu.memory_space<vmem>>, vector<1x32xf32>
    %45 = arith.truncf %36 : vector<8x32xf32> to vector<8x32xbf16>
    %46 = vector.shape_cast %45 : vector<8x32xbf16> to vector<1x8x32xbf16>
    %47 = vector.shape_cast %46 : vector<1x8x32xbf16> to vector<1x8x32xbf16>
    %48 = vector.broadcast %47 : vector<1x8x32xbf16> to vector<4x8x32xbf16>
    %49 = arith.truncf %36 : vector<8x32xf32> to vector<8x32xbf16>
    %50 = vector.shape_cast %49 : vector<8x32xbf16> to vector<1x8x32xbf16>
    %51 = vector.shape_cast %50 : vector<1x8x32xbf16> to vector<1x8x32xbf16>
    %52 = vector.broadcast %51 : vector<1x8x32xbf16> to vector<4x8x32xbf16>
    "tpu.trace_start"() <{level = 10 : i32, message = "hsd,hdf->hsf"}> : () -> ()
    %cst_48 = arith.constant dense<0.000000e+00> : vector<4x8x8xf32>
    %53 = tpu.matmul %48, %37, %cst_48 {dimension_numbers = #tpu.dot_dimension_numbers<[2], [1], [1], [2], [0, 0, 0, 1, 1, 2], [0], [0]>} : vector<4x8x32xbf16>, vector<4x32x8xbf16>, vector<4x8x8xf32> -> vector<4x8x8xf32>
    "tpu.trace_stop"() : () -> ()
    %54 = vector.broadcast %38 : vector<4x1x8xf32> to vector<4x8x8xf32>
    %55 = arith.addf %53, %54 : vector<4x8x8xf32>
    "tpu.trace_start"() <{level = 10 : i32, message = "hsd,hdf->hsf"}> : () -> ()
    %cst_49 = arith.constant dense<0.000000e+00> : vector<4x8x8xf32>
    %56 = tpu.matmul %52, %39, %cst_49 {dimension_numbers = #tpu.dot_dimension_numbers<[2], [1], [1], [2], [0, 0, 0, 1, 1, 2], [0], [0]>} : vector<4x8x32xbf16>, vector<4x32x8xbf16>, vector<4x8x8xf32> -> vector<4x8x8xf32>
    "tpu.trace_stop"() : () -> ()
    %57 = vector.broadcast %40 : vector<4x1x8xf32> to vector<4x8x8xf32>
    %58 = arith.addf %56, %57 : vector<4x8x8xf32>
    "tpu.trace_start"() <{level = 10 : i32, message = "hsd,hdf->hsf"}> : () -> ()
    %cst_50 = arith.constant dense<0.000000e+00> : vector<4x8x8xf32>
    %59 = tpu.matmul %52, %41, %cst_50 {dimension_numbers = #tpu.dot_dimension_numbers<[2], [1], [1], [2], [0, 0, 0, 1, 1, 2], [0], [0]>} : vector<4x8x32xbf16>, vector<4x32x8xbf16>, vector<4x8x8xf32> -> vector<4x8x8xf32>
    "tpu.trace_stop"() : () -> ()
    %60 = vector.broadcast %42 : vector<4x1x8xf32> to vector<4x8x8xf32>
    %61 = arith.addf %59, %60 : vector<4x8x8xf32>
    %62 = arith.truncf %55 : vector<4x8x8xf32> to vector<4x8x8xbf16>
    %63 = arith.truncf %58 : vector<4x8x8xf32> to vector<4x8x8xbf16>
    "tpu.trace_start"() <{level = 10 : i32, message = "hqd,hkd->hqk"}> : () -> ()
    %cst_51 = arith.constant dense<0.000000e+00> : vector<4x8x8xf32>
    %64 = tpu.matmul %62, %63, %cst_51 {dimension_numbers = #tpu.dot_dimension_numbers<[2], [2], [1], [1], [0, 0, 0, 1, 1, 1], [0], [0]>} : vector<4x8x8xbf16>, vector<4x8x8xbf16>, vector<4x8x8xf32> -> vector<4x8x8xf32>
    "tpu.trace_stop"() : () -> ()
    %cst_52 = arith.constant 0.353553385 : f32
    %65 = vector.broadcast %cst_52 : f32 to vector<4x8x8xf32>
    %66 = arith.mulf %64, %65 : vector<4x8x8xf32>
    %67 = vector.shape_cast %7 : vector<8x8xf32> to vector<1x8x8xf32>
    %cst_53 = arith.constant 0.000000e+00 : f32
    %68 = vector.broadcast %cst_53 : f32 to vector<1x8x8xf32>
    %69 = arith.cmpf oeq, %67, %68 : vector<1x8x8xf32>
    %cst_54 = arith.constant -1.000000e+09 : f32
    %70 = vector.shape_cast %69 : vector<1x8x8xi1> to vector<1x8x8xi1>
    %71 = vector.broadcast %70 : vector<1x8x8xi1> to vector<4x8x8xi1>
    %72 = vector.broadcast %cst_54 : f32 to vector<4x8x8xf32>
    %73 = arith.select %71, %72, %66 : vector<4x8x8xi1>, vector<4x8x8xf32>
    %cst_55 = arith.constant dense<0xFF800000> : vector<4x8xf32>
    %74 = vector.multi_reduction <maximumf>, %73, %cst_55 [2] : vector<4x8x8xf32> to vector<4x8xf32>
    %75 = vector.shape_cast %74 : vector<4x8xf32> to vector<4x8x1xf32>
    %76 = vector.broadcast %75 : vector<4x8x1xf32> to vector<4x8x8xf32>
    %77 = arith.subf %73, %76 : vector<4x8x8xf32>
    %78 = math.exp %77 : vector<4x8x8xf32>
    %cst_56 = arith.constant dense<0.000000e+00> : vector<4x8xf32>
    %79 = vector.multi_reduction <add>, %78, %cst_56 [2] : vector<4x8x8xf32> to vector<4x8xf32>
    %80 = vector.shape_cast %79 : vector<4x8xf32> to vector<4x8x1xf32>
    %81 = tpu.reciprocal %80 {approx = true} : vector<4x8x1xf32> -> vector<4x8x1xf32>
    %82 = vector.broadcast %81 : vector<4x8x1xf32> to vector<4x8x8xf32>
    %83 = arith.mulf %78, %82 : vector<4x8x8xf32>
    %84 = arith.truncf %83 : vector<4x8x8xf32> to vector<4x8x8xbf16>
    %85 = arith.truncf %61 : vector<4x8x8xf32> to vector<4x8x8xbf16>
    "tpu.trace_start"() <{level = 10 : i32, message = "hqk,hkd->hqd"}> : () -> ()
    %cst_57 = arith.constant dense<0.000000e+00> : vector<4x8x8xf32>
    %86 = tpu.matmul %84, %85, %cst_57 {dimension_numbers = #tpu.dot_dimension_numbers<[2], [1], [1], [2], [0, 0, 0, 1, 1, 2], [0], [0]>} : vector<4x8x8xbf16>, vector<4x8x8xbf16>, vector<4x8x8xf32> -> vector<4x8x8xf32>
    "tpu.trace_stop"() : () -> ()
    %87 = arith.truncf %86 : vector<4x8x8xf32> to vector<4x8x8xbf16>
    "tpu.trace_start"() <{level = 10 : i32, message = "hqd,hdf->hqf"}> : () -> ()
    %cst_58 = arith.constant dense<0.000000e+00> : vector<4x8x32xf32>
    %88 = tpu.matmul %87, %43, %cst_58 {dimension_numbers = #tpu.dot_dimension_numbers<[2], [1], [1], [2], [0, 0, 0, 1, 1, 2], [0], [0]>} : vector<4x8x8xbf16>, vector<4x8x32xbf16>, vector<4x8x32xf32> -> vector<4x8x32xf32>
    "tpu.trace_stop"() : () -> ()
    %cst_59 = arith.constant dense<0.000000e+00> : vector<8x32xf32>
    %89 = vector.multi_reduction <add>, %88, %cst_59 [0] : vector<4x8x32xf32> to vector<8x32xf32>
    %90 = vector.broadcast %44 : vector<1x32xf32> to vector<8x32xf32>
    %91 = arith.addf %89, %90 : vector<8x32xf32>
    %92 = arith.addf %1, %91 : vector<8x32xf32>
    %93 = vector.extract_strided_slice %12 {offsets = [1, 0], sizes = [1, 32], strides = [1, 1]} : vector<4x32xf32> to vector<1x32xf32>
    %94 = vector.extract_strided_slice %13 {offsets = [1, 0], sizes = [1, 32], strides = [1, 1]} : vector<4x32xf32> to vector<1x32xf32>
    %cst_60 = arith.constant dense<0.000000e+00> : vector<8xf32>
    %95 = vector.multi_reduction <add>, %92, %cst_60 [1] : vector<8x32xf32> to vector<8xf32>
    %96 = vector.shape_cast %95 : vector<8xf32> to vector<8x1xf32>
    %cst_61 = arith.constant 3.200000e+01 : f32
    %97 = vector.broadcast %cst_61 : f32 to vector<8x1xf32>
    %98 = arith.divf %96, %97 : vector<8x1xf32>
    %99 = vector.broadcast %98 : vector<8x1xf32> to vector<8x32xf32>
    %100 = arith.subf %92, %99 : vector<8x32xf32>
    %101 = arith.mulf %100, %100 : vector<8x32xf32>
    %cst_62 = arith.constant dense<0.000000e+00> : vector<8xf32>
    %102 = vector.multi_reduction <add>, %101, %cst_62 [1] : vector<8x32xf32> to vector<8xf32>
    %103 = vector.shape_cast %102 : vector<8xf32> to vector<8x1xf32>
    %cst_63 = arith.constant 0.0322580636 : f32
    %104 = vector.broadcast %cst_63 : f32 to vector<8x1xf32>
    %105 = arith.mulf %103, %104 : vector<8x1xf32>
    %106 = math.sqrt %105 : vector<8x1xf32>
    %cst_64 = arith.constant 9.99999997E-7 : f32
    %107 = vector.broadcast %cst_64 : f32 to vector<8x1xf32>
    %108 = arith.addf %106, %107 : vector<8x1xf32>
    %109 = tpu.reciprocal %108 {approx = true} : vector<8x1xf32> -> vector<8x1xf32>
    %110 = vector.broadcast %109 : vector<8x1xf32> to vector<8x32xf32>
    %111 = arith.mulf %100, %110 : vector<8x32xf32>
    %112 = vector.broadcast %93 : vector<1x32xf32> to vector<8x32xf32>
    %113 = arith.mulf %112, %111 : vector<8x32xf32>
    %114 = vector.broadcast %94 : vector<1x32xf32> to vector<8x32xf32>
    %115 = arith.addf %113, %114 : vector<8x32xf32>
    %c0_65 = arith.constant 0 : index
    %c0_66 = arith.constant 0 : index
    %c0_67 = arith.constant 0 : index
    %116 = vector.load %arg17[%c0_65, %c0_66, %c0_67] : memref<4x32x8xbf16, #tpu.memory_space<vmem>>, vector<4x32x8xbf16>
    %c0_68 = arith.constant 0 : index
    %c0_69 = arith.constant 0 : index
    %c0_70 = arith.constant 0 : index
    %117 = vector.load %arg18[%c0_68, %c0_69, %c0_70] : memref<4x1x8xf32, #tpu.memory_space<vmem>>, vector<4x1x8xf32>
    %c0_71 = arith.constant 0 : index
    %c0_72 = arith.constant 0 : index
    %c0_73 = arith.constant 0 : index
    %118 = vector.load %arg19[%c0_71, %c0_72, %c0_73] : memref<4x32x8xbf16, #tpu.memory_space<vmem>>, vector<4x32x8xbf16>
    %c0_74 = arith.constant 0 : index
    %c0_75 = arith.constant 0 : index
    %c0_76 = arith.constant 0 : index
    %119 = vector.load %arg20[%c0_74, %c0_75, %c0_76] : memref<4x1x8xf32, #tpu.memory_space<vmem>>, vector<4x1x8xf32>
    %c0_77 = arith.constant 0 : index
    %c0_78 = arith.constant 0 : index
    %c0_79 = arith.constant 0 : index
    %120 = vector.load %arg21[%c0_77, %c0_78, %c0_79] : memref<4x32x8xbf16, #tpu.memory_space<vmem>>, vector<4x32x8xbf16>
    %c0_80 = arith.constant 0 : index
    %c0_81 = arith.constant 0 : index
    %c0_82 = arith.constant 0 : index
    %121 = vector.load %arg22[%c0_80, %c0_81, %c0_82] : memref<4x1x8xf32, #tpu.memory_space<vmem>>, vector<4x1x8xf32>
    %c0_83 = arith.constant 0 : index
    %c0_84 = arith.constant 0 : index
    %c0_85 = arith.constant 0 : index
    %122 = vector.load %arg23[%c0_83, %c0_84, %c0_85] : memref<4x8x32xbf16, #tpu.memory_space<vmem>>, vector<4x8x32xbf16>
    %c0_86 = arith.constant 0 : index
    %c0_87 = arith.constant 0 : index
    %123 = vector.load %arg24[%c0_86, %c0_87] : memref<1x32xf32, #tpu.memory_space<vmem>>, vector<1x32xf32>
    %124 = arith.truncf %115 : vector<8x32xf32> to vector<8x32xbf16>
    %125 = vector.shape_cast %124 : vector<8x32xbf16> to vector<1x8x32xbf16>
    %126 = vector.shape_cast %125 : vector<1x8x32xbf16> to vector<1x8x32xbf16>
    %127 = vector.broadcast %126 : vector<1x8x32xbf16> to vector<4x8x32xbf16>
    %128 = arith.truncf %3 : vector<8x32xf32> to vector<8x32xbf16>
    %129 = vector.shape_cast %128 : vector<8x32xbf16> to vector<1x8x32xbf16>
    %130 = vector.shape_cast %129 : vector<1x8x32xbf16> to vector<1x8x32xbf16>
    %131 = vector.broadcast %130 : vector<1x8x32xbf16> to vector<4x8x32xbf16>
    "tpu.trace_start"() <{level = 10 : i32, message = "hsd,hdf->hsf"}> : () -> ()
    %cst_88 = arith.constant dense<0.000000e+00> : vector<4x8x8xf32>
    %132 = tpu.matmul %127, %116, %cst_88 {dimension_numbers = #tpu.dot_dimension_numbers<[2], [1], [1], [2], [0, 0, 0, 1, 1, 2], [0], [0]>} : vector<4x8x32xbf16>, vector<4x32x8xbf16>, vector<4x8x8xf32> -> vector<4x8x8xf32>
    "tpu.trace_stop"() : () -> ()
    %133 = vector.broadcast %117 : vector<4x1x8xf32> to vector<4x8x8xf32>
    %134 = arith.addf %132, %133 : vector<4x8x8xf32>
    "tpu.trace_start"() <{level = 10 : i32, message = "hsd,hdf->hsf"}> : () -> ()
    %cst_89 = arith.constant dense<0.000000e+00> : vector<4x8x8xf32>
    %135 = tpu.matmul %131, %118, %cst_89 {dimension_numbers = #tpu.dot_dimension_numbers<[2], [1], [1], [2], [0, 0, 0, 1, 1, 2], [0], [0]>} : vector<4x8x32xbf16>, vector<4x32x8xbf16>, vector<4x8x8xf32> -> vector<4x8x8xf32>
    "tpu.trace_stop"() : () -> ()
    %136 = vector.broadcast %119 : vector<4x1x8xf32> to vector<4x8x8xf32>
    %137 = arith.addf %135, %136 : vector<4x8x8xf32>
    "tpu.trace_start"() <{level = 10 : i32, message = "hsd,hdf->hsf"}> : () -> ()
    %cst_90 = arith.constant dense<0.000000e+00> : vector<4x8x8xf32>
    %138 = tpu.matmul %131, %120, %cst_90 {dimension_numbers = #tpu.dot_dimension_numbers<[2], [1], [1], [2], [0, 0, 0, 1, 1, 2], [0], [0]>} : vector<4x8x32xbf16>, vector<4x32x8xbf16>, vector<4x8x8xf32> -> vector<4x8x8xf32>
    "tpu.trace_stop"() : () -> ()
    %139 = vector.broadcast %121 : vector<4x1x8xf32> to vector<4x8x8xf32>
    %140 = arith.addf %138, %139 : vector<4x8x8xf32>
    %141 = arith.truncf %134 : vector<4x8x8xf32> to vector<4x8x8xbf16>
    %142 = arith.truncf %137 : vector<4x8x8xf32> to vector<4x8x8xbf16>
    "tpu.trace_start"() <{level = 10 : i32, message = "hqd,hkd->hqk"}> : () -> ()
    %cst_91 = arith.constant dense<0.000000e+00> : vector<4x8x8xf32>
    %143 = tpu.matmul %141, %142, %cst_91 {dimension_numbers = #tpu.dot_dimension_numbers<[2], [2], [1], [1], [0, 0, 0, 1, 1, 1], [0], [0]>} : vector<4x8x8xbf16>, vector<4x8x8xbf16>, vector<4x8x8xf32> -> vector<4x8x8xf32>
    "tpu.trace_stop"() : () -> ()
    %cst_92 = arith.constant 0.353553385 : f32
    %144 = vector.broadcast %cst_92 : f32 to vector<4x8x8xf32>
    %145 = arith.mulf %143, %144 : vector<4x8x8xf32>
    %146 = vector.shape_cast %9 : vector<1x8xf32> to vector<1x1x8xf32>
    %cst_93 = arith.constant 0.000000e+00 : f32
    %147 = vector.broadcast %cst_93 : f32 to vector<1x1x8xf32>
    %148 = arith.cmpf oeq, %146, %147 : vector<1x1x8xf32>
    %cst_94 = arith.constant -1.000000e+09 : f32
    %149 = vector.shape_cast %148 : vector<1x1x8xi1> to vector<1x1x8xi1>
    %150 = vector.broadcast %149 : vector<1x1x8xi1> to vector<4x8x8xi1>
    %151 = vector.broadcast %cst_94 : f32 to vector<4x8x8xf32>
    %152 = arith.select %150, %151, %145 : vector<4x8x8xi1>, vector<4x8x8xf32>
    %cst_95 = arith.constant dense<0xFF800000> : vector<4x8xf32>
    %153 = vector.multi_reduction <maximumf>, %152, %cst_95 [2] : vector<4x8x8xf32> to vector<4x8xf32>
    %154 = vector.shape_cast %153 : vector<4x8xf32> to vector<4x8x1xf32>
    %155 = vector.broadcast %154 : vector<4x8x1xf32> to vector<4x8x8xf32>
    %156 = arith.subf %152, %155 : vector<4x8x8xf32>
    %157 = math.exp %156 : vector<4x8x8xf32>
    %cst_96 = arith.constant dense<0.000000e+00> : vector<4x8xf32>
    %158 = vector.multi_reduction <add>, %157, %cst_96 [2] : vector<4x8x8xf32> to vector<4x8xf32>
    %159 = vector.shape_cast %158 : vector<4x8xf32> to vector<4x8x1xf32>
    %160 = tpu.reciprocal %159 {approx = true} : vector<4x8x1xf32> -> vector<4x8x1xf32>
    %161 = vector.broadcast %160 : vector<4x8x1xf32> to vector<4x8x8xf32>
    %162 = arith.mulf %157, %161 : vector<4x8x8xf32>
    %163 = arith.truncf %162 : vector<4x8x8xf32> to vector<4x8x8xbf16>
    %164 = arith.truncf %140 : vector<4x8x8xf32> to vector<4x8x8xbf16>
    "tpu.trace_start"() <{level = 10 : i32, message = "hqk,hkd->hqd"}> : () -> ()
    %cst_97 = arith.constant dense<0.000000e+00> : vector<4x8x8xf32>
    %165 = tpu.matmul %163, %164, %cst_97 {dimension_numbers = #tpu.dot_dimension_numbers<[2], [1], [1], [2], [0, 0, 0, 1, 1, 2], [0], [0]>} : vector<4x8x8xbf16>, vector<4x8x8xbf16>, vector<4x8x8xf32> -> vector<4x8x8xf32>
    "tpu.trace_stop"() : () -> ()
    %166 = arith.truncf %165 : vector<4x8x8xf32> to vector<4x8x8xbf16>
    "tpu.trace_start"() <{level = 10 : i32, message = "hqd,hdf->hqf"}> : () -> ()
    %cst_98 = arith.constant dense<0.000000e+00> : vector<4x8x32xf32>
    %167 = tpu.matmul %166, %122, %cst_98 {dimension_numbers = #tpu.dot_dimension_numbers<[2], [1], [1], [2], [0, 0, 0, 1, 1, 2], [0], [0]>} : vector<4x8x8xbf16>, vector<4x8x32xbf16>, vector<4x8x32xf32> -> vector<4x8x32xf32>
    "tpu.trace_stop"() : () -> ()
    %cst_99 = arith.constant dense<0.000000e+00> : vector<8x32xf32>
    %168 = vector.multi_reduction <add>, %167, %cst_99 [0] : vector<4x8x32xf32> to vector<8x32xf32>
    %169 = vector.broadcast %123 : vector<1x32xf32> to vector<8x32xf32>
    %170 = arith.addf %168, %169 : vector<8x32xf32>
    %171 = arith.addf %92, %170 : vector<8x32xf32>
    %172 = vector.extract_strided_slice %12 {offsets = [2, 0], sizes = [1, 32], strides = [1, 1]} : vector<4x32xf32> to vector<1x32xf32>
    %173 = vector.extract_strided_slice %13 {offsets = [2, 0], sizes = [1, 32], strides = [1, 1]} : vector<4x32xf32> to vector<1x32xf32>
    %cst_100 = arith.constant dense<0.000000e+00> : vector<8xf32>
    %174 = vector.multi_reduction <add>, %171, %cst_100 [1] : vector<8x32xf32> to vector<8xf32>
    %175 = vector.shape_cast %174 : vector<8xf32> to vector<8x1xf32>
    %cst_101 = arith.constant 3.200000e+01 : f32
    %176 = vector.broadcast %cst_101 : f32 to vector<8x1xf32>
    %177 = arith.divf %175, %176 : vector<8x1xf32>
    %178 = vector.broadcast %177 : vector<8x1xf32> to vector<8x32xf32>
    %179 = arith.subf %171, %178 : vector<8x32xf32>
    %180 = arith.mulf %179, %179 : vector<8x32xf32>
    %cst_102 = arith.constant dense<0.000000e+00> : vector<8xf32>
    %181 = vector.multi_reduction <add>, %180, %cst_102 [1] : vector<8x32xf32> to vector<8xf32>
    %182 = vector.shape_cast %181 : vector<8xf32> to vector<8x1xf32>
    %cst_103 = arith.constant 0.0322580636 : f32
    %183 = vector.broadcast %cst_103 : f32 to vector<8x1xf32>
    %184 = arith.mulf %182, %183 : vector<8x1xf32>
    %185 = math.sqrt %184 : vector<8x1xf32>
    %cst_104 = arith.constant 9.99999997E-7 : f32
    %186 = vector.broadcast %cst_104 : f32 to vector<8x1xf32>
    %187 = arith.addf %185, %186 : vector<8x1xf32>
    %188 = tpu.reciprocal %187 {approx = true} : vector<8x1xf32> -> vector<8x1xf32>
    %189 = vector.broadcast %188 : vector<8x1xf32> to vector<8x32xf32>
    %190 = arith.mulf %179, %189 : vector<8x32xf32>
    %191 = vector.broadcast %172 : vector<1x32xf32> to vector<8x32xf32>
    %192 = arith.mulf %191, %190 : vector<8x32xf32>
    %193 = vector.broadcast %173 : vector<1x32xf32> to vector<8x32xf32>
    %194 = arith.addf %192, %193 : vector<8x32xf32>
    %c0_105 = arith.constant 0 : index
    %c0_106 = arith.constant 0 : index
    %c0_107 = arith.constant 0 : index
    %195 = vector.load %arg17[%c0_105, %c0_106, %c0_107] : memref<4x32x8xbf16, #tpu.memory_space<vmem>>, vector<4x32x8xbf16>
    %c0_108 = arith.constant 0 : index
    %c0_109 = arith.constant 0 : index
    %c0_110 = arith.constant 0 : index
    %196 = vector.load %arg18[%c0_108, %c0_109, %c0_110] : memref<4x1x8xf32, #tpu.memory_space<vmem>>, vector<4x1x8xf32>
    %c0_111 = arith.constant 0 : index
    %c0_112 = arith.constant 0 : index
    %c0_113 = arith.constant 0 : index
    %197 = vector.load %arg19[%c0_111, %c0_112, %c0_113] : memref<4x32x8xbf16, #tpu.memory_space<vmem>>, vector<4x32x8xbf16>
    %c0_114 = arith.constant 0 : index
    %c0_115 = arith.constant 0 : index
    %c0_116 = arith.constant 0 : index
    %198 = vector.load %arg20[%c0_114, %c0_115, %c0_116] : memref<4x1x8xf32, #tpu.memory_space<vmem>>, vector<4x1x8xf32>
    %c0_117 = arith.constant 0 : index
    %c0_118 = arith.constant 0 : index
    %c0_119 = arith.constant 0 : index
    %199 = vector.load %arg21[%c0_117, %c0_118, %c0_119] : memref<4x32x8xbf16, #tpu.memory_space<vmem>>, vector<4x32x8xbf16>
    %c0_120 = arith.constant 0 : index
    %c0_121 = arith.constant 0 : index
    %c0_122 = arith.constant 0 : index
    %200 = vector.load %arg22[%c0_120, %c0_121, %c0_122] : memref<4x1x8xf32, #tpu.memory_space<vmem>>, vector<4x1x8xf32>
    %c0_123 = arith.constant 0 : index
    %c0_124 = arith.constant 0 : index
    %c0_125 = arith.constant 0 : index
    %201 = vector.load %arg23[%c0_123, %c0_124, %c0_125] : memref<4x8x32xbf16, #tpu.memory_space<vmem>>, vector<4x8x32xbf16>
    %c0_126 = arith.constant 0 : index
    %c0_127 = arith.constant 0 : index
    %202 = vector.load %arg24[%c0_126, %c0_127] : memref<1x32xf32, #tpu.memory_space<vmem>>, vector<1x32xf32>
    %203 = arith.truncf %194 : vector<8x32xf32> to vector<8x32xbf16>
    %204 = vector.shape_cast %203 : vector<8x32xbf16> to vector<1x8x32xbf16>
    %205 = vector.shape_cast %204 : vector<1x8x32xbf16> to vector<1x8x32xbf16>
    %206 = vector.broadcast %205 : vector<1x8x32xbf16> to vector<4x8x32xbf16>
    %207 = arith.truncf %5 : vector<8x32xf32> to vector<8x32xbf16>
    %208 = vector.shape_cast %207 : vector<8x32xbf16> to vector<1x8x32xbf16>
    %209 = vector.shape_cast %208 : vector<1x8x32xbf16> to vector<1x8x32xbf16>
    %210 = vector.broadcast %209 : vector<1x8x32xbf16> to vector<4x8x32xbf16>
    "tpu.trace_start"() <{level = 10 : i32, message = "hsd,hdf->hsf"}> : () -> ()
    %cst_128 = arith.constant dense<0.000000e+00> : vector<4x8x8xf32>
    %211 = tpu.matmul %206, %195, %cst_128 {dimension_numbers = #tpu.dot_dimension_numbers<[2], [1], [1], [2], [0, 0, 0, 1, 1, 2], [0], [0]>} : vector<4x8x32xbf16>, vector<4x32x8xbf16>, vector<4x8x8xf32> -> vector<4x8x8xf32>
    "tpu.trace_stop"() : () -> ()
    %212 = vector.broadcast %196 : vector<4x1x8xf32> to vector<4x8x8xf32>
    %213 = arith.addf %211, %212 : vector<4x8x8xf32>
    "tpu.trace_start"() <{level = 10 : i32, message = "hsd,hdf->hsf"}> : () -> ()
    %cst_129 = arith.constant dense<0.000000e+00> : vector<4x8x8xf32>
    %214 = tpu.matmul %210, %197, %cst_129 {dimension_numbers = #tpu.dot_dimension_numbers<[2], [1], [1], [2], [0, 0, 0, 1, 1, 2], [0], [0]>} : vector<4x8x32xbf16>, vector<4x32x8xbf16>, vector<4x8x8xf32> -> vector<4x8x8xf32>
    "tpu.trace_stop"() : () -> ()
    %215 = vector.broadcast %198 : vector<4x1x8xf32> to vector<4x8x8xf32>
    %216 = arith.addf %214, %215 : vector<4x8x8xf32>
    "tpu.trace_start"() <{level = 10 : i32, message = "hsd,hdf->hsf"}> : () -> ()
    %cst_130 = arith.constant dense<0.000000e+00> : vector<4x8x8xf32>
    %217 = tpu.matmul %210, %199, %cst_130 {dimension_numbers = #tpu.dot_dimension_numbers<[2], [1], [1], [2], [0, 0, 0, 1, 1, 2], [0], [0]>} : vector<4x8x32xbf16>, vector<4x32x8xbf16>, vector<4x8x8xf32> -> vector<4x8x8xf32>
    "tpu.trace_stop"() : () -> ()
    %218 = vector.broadcast %200 : vector<4x1x8xf32> to vector<4x8x8xf32>
    %219 = arith.addf %217, %218 : vector<4x8x8xf32>
    %220 = arith.truncf %213 : vector<4x8x8xf32> to vector<4x8x8xbf16>
    %221 = arith.truncf %216 : vector<4x8x8xf32> to vector<4x8x8xbf16>
    "tpu.trace_start"() <{level = 10 : i32, message = "hqd,hkd->hqk"}> : () -> ()
    %cst_131 = arith.constant dense<0.000000e+00> : vector<4x8x8xf32>
    %222 = tpu.matmul %220, %221, %cst_131 {dimension_numbers = #tpu.dot_dimension_numbers<[2], [2], [1], [1], [0, 0, 0, 1, 1, 1], [0], [0]>} : vector<4x8x8xbf16>, vector<4x8x8xbf16>, vector<4x8x8xf32> -> vector<4x8x8xf32>
    "tpu.trace_stop"() : () -> ()
    %cst_132 = arith.constant 0.353553385 : f32
    %223 = vector.broadcast %cst_132 : f32 to vector<4x8x8xf32>
    %224 = arith.mulf %222, %223 : vector<4x8x8xf32>
    %225 = vector.shape_cast %11 : vector<1x8xf32> to vector<1x1x8xf32>
    %cst_133 = arith.constant 0.000000e+00 : f32
    %226 = vector.broadcast %cst_133 : f32 to vector<1x1x8xf32>
    %227 = arith.cmpf oeq, %225, %226 : vector<1x1x8xf32>
    %cst_134 = arith.constant -1.000000e+09 : f32
    %228 = vector.shape_cast %227 : vector<1x1x8xi1> to vector<1x1x8xi1>
    %229 = vector.broadcast %228 : vector<1x1x8xi1> to vector<4x8x8xi1>
    %230 = vector.broadcast %cst_134 : f32 to vector<4x8x8xf32>
    %231 = arith.select %229, %230, %224 : vector<4x8x8xi1>, vector<4x8x8xf32>
    %cst_135 = arith.constant dense<0xFF800000> : vector<4x8xf32>
    %232 = vector.multi_reduction <maximumf>, %231, %cst_135 [2] : vector<4x8x8xf32> to vector<4x8xf32>
    %233 = vector.shape_cast %232 : vector<4x8xf32> to vector<4x8x1xf32>
    %234 = vector.broadcast %233 : vector<4x8x1xf32> to vector<4x8x8xf32>
    %235 = arith.subf %231, %234 : vector<4x8x8xf32>
    %236 = math.exp %235 : vector<4x8x8xf32>
    %cst_136 = arith.constant dense<0.000000e+00> : vector<4x8xf32>
    %237 = vector.multi_reduction <add>, %236, %cst_136 [2] : vector<4x8x8xf32> to vector<4x8xf32>
    %238 = vector.shape_cast %237 : vector<4x8xf32> to vector<4x8x1xf32>
    %239 = tpu.reciprocal %238 {approx = true} : vector<4x8x1xf32> -> vector<4x8x1xf32>
    %240 = vector.broadcast %239 : vector<4x8x1xf32> to vector<4x8x8xf32>
    %241 = arith.mulf %236, %240 : vector<4x8x8xf32>
    %242 = arith.truncf %241 : vector<4x8x8xf32> to vector<4x8x8xbf16>
    %243 = arith.truncf %219 : vector<4x8x8xf32> to vector<4x8x8xbf16>
    "tpu.trace_start"() <{level = 10 : i32, message = "hqk,hkd->hqd"}> : () -> ()
    %cst_137 = arith.constant dense<0.000000e+00> : vector<4x8x8xf32>
    %244 = tpu.matmul %242, %243, %cst_137 {dimension_numbers = #tpu.dot_dimension_numbers<[2], [1], [1], [2], [0, 0, 0, 1, 1, 2], [0], [0]>} : vector<4x8x8xbf16>, vector<4x8x8xbf16>, vector<4x8x8xf32> -> vector<4x8x8xf32>
    "tpu.trace_stop"() : () -> ()
    %245 = arith.truncf %244 : vector<4x8x8xf32> to vector<4x8x8xbf16>
    "tpu.trace_start"() <{level = 10 : i32, message = "hqd,hdf->hqf"}> : () -> ()
    %cst_138 = arith.constant dense<0.000000e+00> : vector<4x8x32xf32>
    %246 = tpu.matmul %245, %201, %cst_138 {dimension_numbers = #tpu.dot_dimension_numbers<[2], [1], [1], [2], [0, 0, 0, 1, 1, 2], [0], [0]>} : vector<4x8x8xbf16>, vector<4x8x32xbf16>, vector<4x8x32xf32> -> vector<4x8x32xf32>
    "tpu.trace_stop"() : () -> ()
    %cst_139 = arith.constant dense<0.000000e+00> : vector<8x32xf32>
    %247 = vector.multi_reduction <add>, %246, %cst_139 [0] : vector<4x8x32xf32> to vector<8x32xf32>
    %248 = vector.broadcast %202 : vector<1x32xf32> to vector<8x32xf32>
    %249 = arith.addf %247, %248 : vector<8x32xf32>
    %250 = arith.addf %171, %249 : vector<8x32xf32>
    %251 = vector.extract_strided_slice %12 {offsets = [3, 0], sizes = [1, 32], strides = [1, 1]} : vector<4x32xf32> to vector<1x32xf32>
    %252 = vector.extract_strided_slice %13 {offsets = [3, 0], sizes = [1, 32], strides = [1, 1]} : vector<4x32xf32> to vector<1x32xf32>
    %cst_140 = arith.constant dense<0.000000e+00> : vector<8xf32>
    %253 = vector.multi_reduction <add>, %250, %cst_140 [1] : vector<8x32xf32> to vector<8xf32>
    %254 = vector.shape_cast %253 : vector<8xf32> to vector<8x1xf32>
    %cst_141 = arith.constant 3.200000e+01 : f32
    %255 = vector.broadcast %cst_141 : f32 to vector<8x1xf32>
    %256 = arith.divf %254, %255 : vector<8x1xf32>
    %257 = vector.broadcast %256 : vector<8x1xf32> to vector<8x32xf32>
    %258 = arith.subf %250, %257 : vector<8x32xf32>
    %259 = arith.mulf %258, %258 : vector<8x32xf32>
    %cst_142 = arith.constant dense<0.000000e+00> : vector<8xf32>
    %260 = vector.multi_reduction <add>, %259, %cst_142 [1] : vector<8x32xf32> to vector<8xf32>
    %261 = vector.shape_cast %260 : vector<8xf32> to vector<8x1xf32>
    %cst_143 = arith.constant 0.0322580636 : f32
    %262 = vector.broadcast %cst_143 : f32 to vector<8x1xf32>
    %263 = arith.mulf %261, %262 : vector<8x1xf32>
    %264 = math.sqrt %263 : vector<8x1xf32>
    %cst_144 = arith.constant 9.99999997E-7 : f32
    %265 = vector.broadcast %cst_144 : f32 to vector<8x1xf32>
    %266 = arith.addf %264, %265 : vector<8x1xf32>
    %267 = tpu.reciprocal %266 {approx = true} : vector<8x1xf32> -> vector<8x1xf32>
    %268 = vector.broadcast %267 : vector<8x1xf32> to vector<8x32xf32>
    %269 = arith.mulf %258, %268 : vector<8x32xf32>
    %270 = vector.broadcast %251 : vector<1x32xf32> to vector<8x32xf32>
    %271 = arith.mulf %270, %269 : vector<8x32xf32>
    %272 = vector.broadcast %252 : vector<1x32xf32> to vector<8x32xf32>
    %273 = arith.addf %271, %272 : vector<8x32xf32>
    %c0_145 = arith.constant 0 : index
    %c0_146 = arith.constant 0 : index
    %274 = vector.load %arg25[%c0_145, %c0_146] : memref<32x2048xbf16, #tpu.memory_space<vmem>>, vector<32x2048xbf16>
    %c0_147 = arith.constant 0 : index
    %c0_148 = arith.constant 0 : index
    %275 = vector.load %arg26[%c0_147, %c0_148] : memref<1x2048xf32, #tpu.memory_space<vmem>>, vector<1x2048xf32>
    %c0_149 = arith.constant 0 : index
    %c0_150 = arith.constant 0 : index
    %276 = vector.load %arg27[%c0_149, %c0_150] : memref<2048x32xbf16, #tpu.memory_space<vmem>>, vector<2048x32xbf16>
    %c0_151 = arith.constant 0 : index
    %c0_152 = arith.constant 0 : index
    %277 = vector.load %arg28[%c0_151, %c0_152] : memref<1x32xf32, #tpu.memory_space<vmem>>, vector<1x32xf32>
    %278 = arith.truncf %273 : vector<8x32xf32> to vector<8x32xbf16>
    %cst_153 = arith.constant dense<0.000000e+00> : vector<8x2048xf32>
    %279 = tpu.matmul %278, %274, %cst_153 {dimension_numbers = #tpu.dot_dimension_numbers<[1], [0], [0], [1], [0, 0, 1, 1], [], []>} : vector<8x32xbf16>, vector<32x2048xbf16>, vector<8x2048xf32> -> vector<8x2048xf32>
    %280 = vector.broadcast %275 : vector<1x2048xf32> to vector<8x2048xf32>
    %281 = arith.addf %279, %280 : vector<8x2048xf32>
    %cst_154 = arith.constant 0.000000e+00 : f32
    %282 = vector.broadcast %cst_154 : f32 to vector<8x2048xf32>
    %283 = arith.maximumf %281, %282 : vector<8x2048xf32>
    %284 = arith.truncf %283 : vector<8x2048xf32> to vector<8x2048xbf16>
    %cst_155 = arith.constant dense<0.000000e+00> : vector<8x32xf32>
    %285 = tpu.matmul %284, %276, %cst_155 {dimension_numbers = #tpu.dot_dimension_numbers<[1], [0], [0], [1], [0, 0, 1, 1], [], []>} : vector<8x2048xbf16>, vector<2048x32xbf16>, vector<8x32xf32> -> vector<8x32xf32>
    %286 = vector.broadcast %277 : vector<1x32xf32> to vector<8x32xf32>
    %287 = arith.addf %285, %286 : vector<8x32xf32>
    %288 = arith.addf %250, %287 : vector<8x32xf32>
    %c0_156 = arith.constant 0 : index
    %c0_157 = arith.constant 0 : index
    %c0_158 = arith.constant 0 : index
    %289 = vector.load %arg29[%c0_156, %c0_157, %c0_158] : memref<1x8x32xf32, #tpu.memory_space<vmem>>, vector<1x8x32xf32>
    %290 = vector.shape_cast %289 : vector<1x8x32xf32> to vector<8x32xf32>
    %291 = vector.shape_cast %288 : vector<8x32xf32> to vector<1x8x32xf32>
    tpu.vector_store %arg29[%c0_156, %c0_157, %c0_158], %291 {strides = array<i32>} : memref<1x8x32xf32, #tpu.memory_space<vmem>>, vector<1x8x32xf32>,
    return
  }
  func.func @transform_0(%arg0: i32) -> (i32, i32, i32) {
    %c0_i32 = arith.constant 0 : i32
    %c0_i32_0 = arith.constant 0 : i32
    %c0_i32_1 = arith.constant 0 : i32
    return %arg0, %c0_i32, %c0_i32_0 : i32, i32, i32
  }
  func.func @transform_1(%arg0: i32) -> (i32, i32, i32) {
    %c0_i32 = arith.constant 0 : i32
    %c0_i32_0 = arith.constant 0 : i32
    %c0_i32_1 = arith.constant 0 : i32
    return %arg0, %c0_i32, %c0_i32_0 : i32, i32, i32
  }
  func.func @transform_2(%arg0: i32) -> (i32, i32, i32) {
    %c0_i32 = arith.constant 0 : i32
    %c0_i32_0 = arith.constant 0 : i32
    %c0_i32_1 = arith.constant 0 : i32
    return %arg0, %c0_i32, %c0_i32_0 : i32, i32, i32
  }
  func.func @transform_3(%arg0: i32) -> (i32, i32, i32) {
    %c0_i32 = arith.constant 0 : i32
    %c0_i32_0 = arith.constant 0 : i32
    %c0_i32_1 = arith.constant 0 : i32
    return %arg0, %c0_i32, %c0_i32_0 : i32, i32, i32
  }
  func.func @transform_4(%arg0: i32) -> (i32, i32, i32) {
    %c0_i32 = arith.constant 0 : i32
    %c0_i32_0 = arith.constant 0 : i32
    %c0_i32_1 = arith.constant 0 : i32
    return %arg0, %c0_i32, %c0_i32_0 : i32, i32, i32
  }
  func.func @transform_5(%arg0: i32) -> (i32, i32, i32) {
    %c0_i32 = arith.constant 0 : i32
    %c0_i32_0 = arith.constant 0 : i32
    %c0_i32_1 = arith.constant 0 : i32
    return %arg0, %c0_i32, %c0_i32_0 : i32, i32, i32
  }
  func.func @transform_6(%arg0: i32) -> (i32, i32) {
    %c0_i32 = arith.constant 0 : i32
    %c0_i32_0 = arith.constant 0 : i32
    %c0_i32_1 = arith.constant 0 : i32
    return %c0_i32, %c0_i32_0 : i32, i32
  }
  func.func @transform_7(%arg0: i32) -> (i32, i32) {
    %c0_i32 = arith.constant 0 : i32
    %c0_i32_0 = arith.constant 0 : i32
    %c0_i32_1 = arith.constant 0 : i32
    return %c0_i32, %c0_i32_0 : i32, i32
  }
  func.func @transform_8(%arg0: i32) -> (i32, i32, i32) {
    %c0_i32 = arith.constant 0 : i32
    %c0_i32_0 = arith.constant 0 : i32
    %c0_i32_1 = arith.constant 0 : i32
    %c0_i32_2 = arith.constant 0 : i32
    return %c0_i32, %c0_i32_0, %c0_i32_1 : i32, i32, i32
  }
  func.func @transform_9(%arg0: i32) -> (i32, i32, i32) {
    %c0_i32 = arith.constant 0 : i32
    %c0_i32_0 = arith.constant 0 : i32
    %c0_i32_1 = arith.constant 0 : i32
    %c0_i32_2 = arith.constant 0 : i32
    return %c0_i32, %c0_i32_0, %c0_i32_1 : i32, i32, i32
  }
  func.func @transform_10(%arg0: i32) -> (i32, i32, i32) {
    %c0_i32 = arith.constant 0 : i32
    %c0_i32_0 = arith.constant 0 : i32
    %c0_i32_1 = arith.constant 0 : i32
    %c0_i32_2 = arith.constant 0 : i32
    return %c0_i32, %c0_i32_0, %c0_i32_1 : i32, i32, i32
  }
  func.func @transform_11(%arg0: i32) -> (i32, i32, i32) {
    %c0_i32 = arith.constant 0 : i32
    %c0_i32_0 = arith.constant 0 : i32
    %c0_i32_1 = arith.constant 0 : i32
    %c0_i32_2 = arith.constant 0 : i32
    return %c0_i32, %c0_i32_0, %c0_i32_1 : i32, i32, i32
  }
  func.func @transform_12(%arg0: i32) -> (i32, i32, i32) {
    %c0_i32 = arith.constant 0 : i32
    %c0_i32_0 = arith.constant 0 : i32
    %c0_i32_1 = arith.constant 0 : i32
    %c0_i32_2 = arith.constant 0 : i32
    return %c0_i32, %c0_i32_0, %c0_i32_1 : i32, i32, i32
  }
  func.func @transform_13(%arg0: i32) -> (i32, i32, i32) {
    %c0_i32 = arith.constant 0 : i32
    %c0_i32_0 = arith.constant 0 : i32
    %c0_i32_1 = arith.constant 0 : i32
    %c0_i32_2 = arith.constant 0 : i32
    return %c0_i32, %c0_i32_0, %c0_i32_1 : i32, i32, i32
  }
  func.func @transform_14(%arg0: i32) -> (i32, i32, i32) {
    %c0_i32 = arith.constant 0 : i32
    %c0_i32_0 = arith.constant 0 : i32
    %c0_i32_1 = arith.constant 0 : i32
    %c0_i32_2 = arith.constant 0 : i32
    return %c0_i32, %c0_i32_0, %c0_i32_1 : i32, i32, i32
  }
  func.func @transform_15(%arg0: i32) -> (i32, i32) {
    %c0_i32 = arith.constant 0 : i32
    %c0_i32_0 = arith.constant 0 : i32
    %c0_i32_1 = arith.constant 0 : i32
    return %c0_i32, %c0_i32_0 : i32, i32
  }
  func.func @transform_16(%arg0: i32) -> (i32, i32, i32) {
    %c0_i32 = arith.constant 0 : i32
    %c0_i32_0 = arith.constant 0 : i32
    %c0_i32_1 = arith.constant 0 : i32
    %c0_i32_2 = arith.constant 0 : i32
    return %c0_i32, %c0_i32_0, %c0_i32_1 : i32, i32, i32
  }
  func.func @transform_17(%arg0: i32) -> (i32, i32, i32) {
    %c0_i32 = arith.constant 0 : i32
    %c0_i32_0 = arith.constant 0 : i32
    %c0_i32_1 = arith.constant 0 : i32
    %c0_i32_2 = arith.constant 0 : i32
    return %c0_i32, %c0_i32_0, %c0_i32_1 : i32, i32, i32
  }
  func.func @transform_18(%arg0: i32) -> (i32, i32, i32) {
    %c0_i32 = arith.constant 0 : i32
    %c0_i32_0 = arith.constant 0 : i32
    %c0_i32_1 = arith.constant 0 : i32
    %c0_i32_2 = arith.constant 0 : i32
    return %c0_i32, %c0_i32_0, %c0_i32_1 : i32, i32, i32
  }
  func.func @transform_19(%arg0: i32) -> (i32, i32, i32) {
    %c0_i32 = arith.constant 0 : i32
    %c0_i32_0 = arith.constant 0 : i32
    %c0_i32_1 = arith.constant 0 : i32
    %c0_i32_2 = arith.constant 0 : i32
    return %c0_i32, %c0_i32_0, %c0_i32_1 : i32, i32, i32
  }
  func.func @transform_20(%arg0: i32) -> (i32, i32, i32) {
    %c0_i32 = arith.constant 0 : i32
    %c0_i32_0 = arith.constant 0 : i32
    %c0_i32_1 = arith.constant 0 : i32
    %c0_i32_2 = arith.constant 0 : i32
    return %c0_i32, %c0_i32_0, %c0_i32_1 : i32, i32, i32
  }
  func.func @transform_21(%arg0: i32) -> (i32, i32, i32) {
    %c0_i32 = arith.constant 0 : i32
    %c0_i32_0 = arith.constant 0 : i32
    %c0_i32_1 = arith.constant 0 : i32
    %c0_i32_2 = arith.constant 0 : i32
    return %c0_i32, %c0_i32_0, %c0_i32_1 : i32, i32, i32
  }
  func.func @transform_22(%arg0: i32) -> (i32, i32, i32) {
    %c0_i32 = arith.constant 0 : i32
    %c0_i32_0 = arith.constant 0 : i32
    %c0_i32_1 = arith.constant 0 : i32
    %c0_i32_2 = arith.constant 0 : i32
    return %c0_i32, %c0_i32_0, %c0_i32_1 : i32, i32, i32
  }
  func.func @transform_23(%arg0: i32) -> (i32, i32) {
    %c0_i32 = arith.constant 0 : i32
    %c0_i32_0 = arith.constant 0 : i32
    %c0_i32_1 = arith.constant 0 : i32
    return %c0_i32, %c0_i32_0 : i32, i32
  }
  func.func @transform_24(%arg0: i32) -> (i32, i32) {
    %c0_i32 = arith.constant 0 : i32
    %c0_i32_0 = arith.constant 0 : i32
    %c0_i32_1 = arith.constant 0 : i32
    return %c0_i32, %c0_i32_0 : i32, i32
  }
  func.func @transform_25(%arg0: i32) -> (i32, i32) {
    %c0_i32 = arith.constant 0 : i32
    %c0_i32_0 = arith.constant 0 : i32
    %c0_i32_1 = arith.constant 0 : i32
    return %c0_i32, %c0_i32_0 : i32, i32
  }
  func.func @transform_26(%arg0: i32) -> (i32, i32) {
    %c0_i32 = arith.constant 0 : i32
    %c0_i32_0 = arith.constant 0 : i32
    %c0_i32_1 = arith.constant 0 : i32
    return %c0_i32, %c0_i32_0 : i32, i32
  }
  func.func @transform_27(%arg0: i32) -> (i32, i32) {
    %c0_i32 = arith.constant 0 : i32
    %c0_i32_0 = arith.constant 0 : i32
    %c0_i32_1 = arith.constant 0 : i32
    return %c0_i32, %c0_i32_0 : i32, i32
  }
  func.func @transform_28(%arg0: i32) -> (i32, i32, i32) {
    %c0_i32 = arith.constant 0 : i32
    %c0_i32_0 = arith.constant 0 : i32
    %c0_i32_1 = arith.constant 0 : i32
    return %arg0, %c0_i32, %c0_i32_0 : i32, i32, i32
  }
}

</mosaic_0001>

<llo_original>
// kernel: tpu_custom_call.1
$region0: #{tpu_custom_call.1}
  #allocation0 [shape = 'u32[]', space=smem, size = 0x4, offset = 0x4, fixed_abs, tag = 'smem constant byte address 0x4 - core index']
  #allocation1 [shape = 'u32[72,128]{1,0:T(1,128)}', space=vmem, size = 0x9000, scoped, tag = 'internal scratch']
  %s0 = inlined_call_operand.vmem [shape: f32[2,8,32], index: 0, kind: input, shape index: {}]
  %s1 = inlined_call_operand.vmem [shape: f32[2,8,32], index: 1, kind: input, shape index: {}]
  %s2 = inlined_call_operand.vmem [shape: f32[2,8,32], index: 2, kind: input, shape index: {}]
  %s3 = inlined_call_operand.vmem [shape: f32[2,8,8], index: 3, kind: input, shape index: {}]
  %s4 = inlined_call_operand.vmem [shape: f32[2,1,8], index: 4, kind: input, shape index: {}]
  %s5 = inlined_call_operand.vmem [shape: f32[2,1,8], index: 5, kind: input, shape index: {}]
  %s6 = inlined_call_operand.vmem [shape: f32[4,32], index: 6, kind: input, shape index: {}]
  %s7 = inlined_call_operand.vmem [shape: f32[4,32], index: 7, kind: input, shape index: {}]
  %s8 = inlined_call_operand.vmem [shape: bf16[4,32,8], index: 8, kind: input, shape index: {}]
  %s9 = inlined_call_operand.vmem [shape: f32[4,1,8], index: 9, kind: input, shape index: {}]
  %s10 = inlined_call_operand.vmem [shape: bf16[4,32,8], index: 10, kind: input, shape index: {}]
  %s11 = inlined_call_operand.vmem [shape: f32[4,1,8], index: 11, kind: input, shape index: {}]
  %s12 = inlined_call_operand.vmem [shape: bf16[4,32,8], index: 12, kind: input, shape index: {}]
  %s13 = inlined_call_operand.vmem [shape: f32[4,1,8], index: 13, kind: input, shape index: {}]
  %s14 = inlined_call_operand.vmem [shape: bf16[4,8,32], index: 14, kind: input, shape index: {}]
  %s15 = inlined_call_operand.vmem [shape: f32[1,32], index: 15, kind: input, shape index: {}]
  %s16 = inlined_call_operand.vmem [shape: bf16[4,32,8], index: 16, kind: input, shape index: {}]
  %s17 = inlined_call_operand.vmem [shape: f32[4,1,8], index: 17, kind: input, shape index: {}]
  %s18 = inlined_call_operand.vmem [shape: bf16[4,32,8], index: 18, kind: input, shape index: {}]
  %s19 = inlined_call_operand.vmem [shape: f32[4,1,8], index: 19, kind: input, shape index: {}]
  %s20 = inlined_call_operand.vmem [shape: bf16[4,32,8], index: 20, kind: input, shape index: {}]
  %s21 = inlined_call_operand.vmem [shape: f32[4,1,8], index: 21, kind: input, shape index: {}]
  %s22 = inlined_call_operand.vmem [shape: bf16[4,8,32], index: 22, kind: input, shape index: {}]
  %s23 = inlined_call_operand.vmem [shape: f32[1,32], index: 23, kind: input, shape index: {}]
  %s24 = inlined_call_operand.vmem [shape: bf16[32,2048], index: 24, kind: input, shape index: {}]
  %s25 = inlined_call_operand.vmem [shape: f32[1,2048], index: 25, kind: input, shape index: {}]
  %s26 = inlined_call_operand.vmem [shape: bf16[2048,32], index: 26, kind: input, shape index: {}]
  %s27 = inlined_call_operand.vmem [shape: f32[1,32], index: 27, kind: input, shape index: {}]
  %s28 = inlined_call_operand.hbm [shape: f32[2,8,32], index: 28, kind: output, shape index: {}]
  %s29 = sld [smem:[#allocation0]]
  $region145: #{tpu_custom_call.1} parent=0
    _
  %s31 = ssub.s32 1, %s29
  %s32 = scalar_select 0, %s31, %s29
  $region1: #{tpu_custom_call.1} parent=0
    #allocation2 [shape = 'u8[8192]{0}', space=vmem, size = 0x2000, scoped, tag = 'output window, operand 0']
    #allocation3 [shape = 's32[2]{0}', space=sflag, size = 0x8, scoped, tag = 'scoped memory for tpu_custom_call.1']
    %33 = vsyncpa [#allocation3], 0
    %s34 = scalar_lea.sflag [#allocation3], 1
    %35 = vsyncpa %s34, 0
    loop: start=0, step=1, limit=4
    $region2: #{tpu_custom_call.1} parent=1 // loop_pre_header
      _
    $region3: #{tpu_custom_call.1} parent=1 // loop_header
      %s37 = sphi 0, %s41
      %p38 = scmp.ge.s32.totalorder %s37, 4
      %s47 = sphi 0, %s49
      %s50 = sphi 0, %s47
      %s51 = sphi 0, %s50
      %s67 = sphi 0, %s51
      %s73 = sphi 0, %s75
      %s76 = sphi 0, %s73
      %s77 = sphi 0, %s76
      %s93 = sphi 0, %s77
      %s99 = sphi 0, %s101
      %s102 = sphi 0, %s99
      %s103 = sphi 0, %s102
      %s119 = sphi 0, %s103
      %s125 = sphi 0, %s127
      %s128 = sphi 0, %s125
      %s129 = sphi 0, %s128
      %s145 = sphi 0, %s129
      %s151 = sphi 0, %s153
      %s154 = sphi 0, %s151
      %s155 = sphi 0, %s154
      %s171 = sphi 0, %s155
      %s177 = sphi 0, %s179
      %s180 = sphi 0, %s177
      %s181 = sphi 0, %s180
      %s197 = sphi 0, %s181
      %s201 = sphi 0, %s201
      %s203 = sphi 0, %s201
      %s204 = sphi 0, %s203
      %s218 = sphi 0, %s204
      %s222 = sphi 0, %s222
      %s224 = sphi 0, %s222
      %s225 = sphi 0, %s224
      %s239 = sphi 0, %s225
      %s243 = sphi 0, %s243
      %s245 = sphi 0, %s243
      %s246 = sphi 0, %s245
      %s260 = sphi 0, %s246
      %s264 = sphi 0, %s264
      %s266 = sphi 0, %s264
      %s267 = sphi 0, %s266
      %s281 = sphi 0, %s267
      %s285 = sphi 0, %s285
      %s287 = sphi 0, %s285
      %s288 = sphi 0, %s287
      %s302 = sphi 0, %s288
      %s306 = sphi 0, %s306
      %s308 = sphi 0, %s306
      %s309 = sphi 0, %s308
      %s323 = sphi 0, %s309
      %s327 = sphi 0, %s327
      %s329 = sphi 0, %s327
      %s330 = sphi 0, %s329
      %s344 = sphi 0, %s330
      %s348 = sphi 0, %s348
      %s350 = sphi 0, %s348
      %s351 = sphi 0, %s350
      %s365 = sphi 0, %s351
      %s369 = sphi 0, %s369
      %s371 = sphi 0, %s369
      %s372 = sphi 0, %s371
      %s386 = sphi 0, %s372
      %s390 = sphi 0, %s390
      %s392 = sphi 0, %s390
      %s393 = sphi 0, %s392
      %s407 = sphi 0, %s393
      %s411 = sphi 0, %s411
      %s413 = sphi 0, %s411
      %s414 = sphi 0, %s413
      %s428 = sphi 0, %s414
      %s432 = sphi 0, %s432
      %s434 = sphi 0, %s432
      %s435 = sphi 0, %s434
      %s449 = sphi 0, %s435
      %s453 = sphi 0, %s453
      %s455 = sphi 0, %s453
      %s456 = sphi 0, %s455
      %s470 = sphi 0, %s456
      %s474 = sphi 0, %s474
      %s476 = sphi 0, %s474
      %s477 = sphi 0, %s476
      %s491 = sphi 0, %s477
      %s495 = sphi 0, %s495
      %s497 = sphi 0, %s495
      %s498 = sphi 0, %s497
      %s512 = sphi 0, %s498
      %s516 = sphi 0, %s516
      %s518 = sphi 0, %s516
      %s519 = sphi 0, %s518
      %s533 = sphi 0, %s519
      %s537 = sphi 0, %s537
      %s539 = sphi 0, %s537
      %s540 = sphi 0, %s539
      %s554 = sphi 0, %s540
      %s558 = sphi 0, %s558
      %s560 = sphi 0, %s558
      %s561 = sphi 0, %s560
      %s575 = sphi 0, %s561
      %s579 = sphi 0, %s579
      %s581 = sphi 0, %s579
      %s582 = sphi 0, %s581
      %s596 = sphi 0, %s582
      %s600 = sphi 0, %s600
      %s602 = sphi 0, %s600
      %s603 = sphi 0, %s602
      %s617 = sphi 0, %s603
      %s621 = sphi 0, %s621
      %s623 = sphi 0, %s621
      %s624 = sphi 0, %s623
      %s638 = sphi 0, %s624
      %s642 = sphi 0, %s642
      %s644 = sphi 0, %s642
      %s645 = sphi 0, %s644
      %s659 = sphi 0, %s645
      %s665 = sphi 0, %s667
      %s668 = sphi 0, %s665
      %s669 = sphi 0, %s668
      %s685 = sphi 0, %s669
    $region4: #{tpu_custom_call.1} parent=1 // loop_header_branch
      %40 = sbr.rel (%p38) target = $region8
    $region5: #{tpu_custom_call.1} parent=1 // loop_body
      %s42 = ssub.s32 %s37, 1
      %s43 = ssub.s32 %s37, 2
      %s44 = sadd.s32 %s37, 1
      %s45 = ssub.s32 %s37, %s44
      %p46 = scmp.eq.s32.totalorder %s45, 0
      %s48 = sadd.s32 %s47, 1
      %s49 = scalar_select %p46, %s47, %s48
      %p52 = pneg %p46
      %p53 = scmp.eq.s32.totalorder %s37, 1
      %p54 = por %p52, %p53
      %p55 = scmp.ne.s32.totalorder %s47, %s50
      %p56 = scmp.eq.s32.totalorder %s37, 0
      %p57 = por %p55, %p56
      %p58 = scmp.ne.s32.totalorder %s47, %s50
      %p59 = scmp.eq.s32.totalorder %s42, 1
      %p60 = por %p58, %p59
      %p61 = scmp.ne.s32.totalorder %s50, %s51
      %p62 = scmp.eq.s32.totalorder %s42, 0
      %p63 = por %p61, %p62
      %p64 = scmp.ne.s32.totalorder %s50, %s51
      %p65 = scmp.eq.s32.totalorder %s43, 1
      %p66 = por %p64, %p65
      %p68 = scmp.ne.s32.totalorder %s51, %s67
      %p69 = scmp.eq.s32.totalorder %s43, 0
      %p70 = por %p68, %p69
      %s71 = ssub.s32 %s37, %s44
      %p72 = scmp.eq.s32.totalorder %s71, 0
      %s74 = sadd.s32 %s73, 1
      %s75 = scalar_select %p72, %s73, %s74
      %p78 = pneg %p72
      %p79 = scmp.eq.s32.totalorder %s37, 1
      %p80 = por %p78, %p79
      %p81 = scmp.ne.s32.totalorder %s73, %s76
      %p82 = scmp.eq.s32.totalorder %s37, 0
      %p83 = por %p81, %p82
      %p84 = scmp.ne.s32.totalorder %s73, %s76
      %p85 = scmp.eq.s32.totalorder %s42, 1
      %p86 = por %p84, %p85
      %p87 = scmp.ne.s32.totalorder %s76, %s77
      %p88 = scmp.eq.s32.totalorder %s42, 0
      %p89 = por %p87, %p88
      %p90 = scmp.ne.s32.totalorder %s76, %s77
      %p91 = scmp.eq.s32.totalorder %s43, 1
      %p92 = por %p90, %p91
      %p94 = scmp.ne.s32.totalorder %s77, %s93
      %p95 = scmp.eq.s32.totalorder %s43, 0
      %p96 = por %p94, %p95
      %s97 = ssub.s32 %s37, %s44
      %p98 = scmp.eq.s32.totalorder %s97, 0
      %s100 = sadd.s32 %s99, 1
      %s101 = scalar_select %p98, %s99, %s100
      %p104 = pneg %p98
      %p105 = scmp.eq.s32.totalorder %s37, 1
      %p106 = por %p104, %p105
      %p107 = scmp.ne.s32.totalorder %s99, %s102
      %p108 = scmp.eq.s32.totalorder %s37, 0
      %p109 = por %p107, %p108
      %p110 = scmp.ne.s32.totalorder %s99, %s102
      %p111 = scmp.eq.s32.totalorder %s42, 1
      %p112 = por %p110, %p111
      %p113 = scmp.ne.s32.totalorder %s102, %s103
      %p114 = scmp.eq.s32.totalorder %s42, 0
      %p115 = por %p113, %p114
      %p116 = scmp.ne.s32.totalorder %s102, %s103
      %p117 = scmp.eq.s32.totalorder %s43, 1
      %p118 = por %p116, %p117
      %p120 = scmp.ne.s32.totalorder %s103, %s119
      %p121 = scmp.eq.s32.totalorder %s43, 0
      %p122 = por %p120, %p121
      %s123 = ssub.s32 %s37, %s44
      %p124 = scmp.eq.s32.totalorder %s123, 0
      %s126 = sadd.s32 %s125, 1
      %s127 = scalar_select %p124, %s125, %s126
      %p130 = pneg %p124
      %p131 = scmp.eq.s32.totalorder %s37, 1
      %p132 = por %p130, %p131
      %p133 = scmp.ne.s32.totalorder %s125, %s128
      %p134 = scmp.eq.s32.totalorder %s37, 0
      %p135 = por %p133, %p134
      %p136 = scmp.ne.s32.totalorder %s125, %s128
      %p137 = scmp.eq.s32.totalorder %s42, 1
      %p138 = por %p136, %p137
      %p139 = scmp.ne.s32.totalorder %s128, %s129
      %p140 = scmp.eq.s32.totalorder %s42, 0
      %p141 = por %p139, %p140
      %p142 = scmp.ne.s32.totalorder %s128, %s129
      %p143 = scmp.eq.s32.totalorder %s43, 1
      %p144 = por %p142, %p143
      %p146 = scmp.ne.s32.totalorder %s129, %s145
      %p147 = scmp.eq.s32.totalorder %s43, 0
      %p148 = por %p146, %p147
      %s149 = ssub.s32 %s37, %s44
      %p150 = scmp.eq.s32.totalorder %s149, 0
      %s152 = sadd.s32 %s151, 1
      %s153 = scalar_select %p150, %s151, %s152
      %p156 = pneg %p150
      %p157 = scmp.eq.s32.totalorder %s37, 1
      %p158 = por %p156, %p157
      %p159 = scmp.ne.s32.totalorder %s151, %s154
      %p160 = scmp.eq.s32.totalorder %s37, 0
      %p161 = por %p159, %p160
      %p162 = scmp.ne.s32.totalorder %s151, %s154
      %p163 = scmp.eq.s32.totalorder %s42, 1
      %p164 = por %p162, %p163
      %p165 = scmp.ne.s32.totalorder %s154, %s155
      %p166 = scmp.eq.s32.totalorder %s42, 0
      %p167 = por %p165, %p166
      %p168 = scmp.ne.s32.totalorder %s154, %s155
      %p169 = scmp.eq.s32.totalorder %s43, 1
      %p170 = por %p168, %p169
      %p172 = scmp.ne.s32.totalorder %s155, %s171
      %p173 = scmp.eq.s32.totalorder %s43, 0
      %p174 = por %p172, %p173
      %s175 = ssub.s32 %s37, %s44
      %p176 = scmp.eq.s32.totalorder %s175, 0
      %s178 = sadd.s32 %s177, 1
      %s179 = scalar_select %p176, %s177, %s178
      %p182 = pneg %p176
      %p183 = scmp.eq.s32.totalorder %s37, 1
      %p184 = por %p182, %p183
      %p185 = scmp.ne.s32.totalorder %s177, %s180
      %p186 = scmp.eq.s32.totalorder %s37, 0
      %p187 = por %p185, %p186
      %p188 = scmp.ne.s32.totalorder %s177, %s180
      %p189 = scmp.eq.s32.totalorder %s42, 1
      %p190 = por %p188, %p189
      %p191 = scmp.ne.s32.totalorder %s180, %s181
      %p192 = scmp.eq.s32.totalorder %s42, 0
      %p193 = por %p191, %p192
      %p194 = scmp.ne.s32.totalorder %s180, %s181
      %p195 = scmp.eq.s32.totalorder %s43, 1
      %p196 = por %p194, %p195
      %p198 = scmp.ne.s32.totalorder %s181, %s197
      %p199 = scmp.eq.s32.totalorder %s43, 0
      %p200 = por %p198, %p199
      %s202 = sadd.s32 %s201, 1
      %p205 = scmp.eq.s32.totalorder %s37, 1
      %p206 = scmp.ne.s32.totalorder %s201, %s203
      %p207 = scmp.eq.s32.totalorder %s37, 0
      %p208 = por %p206, %p207
      %p209 = scmp.ne.s32.totalorder %s201, %s203
      %p210 = scmp.eq.s32.totalorder %s42, 1
      %p211 = por %p209, %p210
      %p212 = scmp.ne.s32.totalorder %s203, %s204
      %p213 = scmp.eq.s32.totalorder %s42, 0
      %p214 = por %p212, %p213
      %p215 = scmp.ne.s32.totalorder %s203, %s204
      %p216 = scmp.eq.s32.totalorder %s43, 1
      %p217 = por %p215, %p216
      %p219 = scmp.ne.s32.totalorder %s204, %s218
      %p220 = scmp.eq.s32.totalorder %s43, 0
      %p221 = por %p219, %p220
      %s223 = sadd.s32 %s222, 1
      %p226 = scmp.eq.s32.totalorder %s37, 1
      %p227 = scmp.ne.s32.totalorder %s222, %s224
      %p228 = scmp.eq.s32.totalorder %s37, 0
      %p229 = por %p227, %p228
      %p230 = scmp.ne.s32.totalorder %s222, %s224
      %p231 = scmp.eq.s32.totalorder %s42, 1
      %p232 = por %p230, %p231
      %p233 = scmp.ne.s32.totalorder %s224, %s225
      %p234 = scmp.eq.s32.totalorder %s42, 0
      %p235 = por %p233, %p234
      %p236 = scmp.ne.s32.totalorder %s224, %s225
      %p237 = scmp.eq.s32.totalorder %s43, 1
      %p238 = por %p236, %p237
      %p240 = scmp.ne.s32.totalorder %s225, %s239
      %p241 = scmp.eq.s32.totalorder %s43, 0
      %p242 = por %p240, %p241
      %s244 = sadd.s32 %s243, 1
      %p247 = scmp.eq.s32.totalorder %s37, 1
      %p248 = scmp.ne.s32.totalorder %s243, %s245
      %p249 = scmp.eq.s32.totalorder %s37, 0
      %p250 = por %p248, %p249
      %p251 = scmp.ne.s32.totalorder %s243, %s245
      %p252 = scmp.eq.s32.totalorder %s42, 1
      %p253 = por %p251, %p252
      %p254 = scmp.ne.s32.totalorder %s245, %s246
      %p255 = scmp.eq.s32.totalorder %s42, 0
      %p256 = por %p254, %p255
      %p257 = scmp.ne.s32.totalorder %s245, %s246
      %p258 = scmp.eq.s32.totalorder %s43, 1
      %p259 = por %p257, %p258
      %p261 = scmp.ne.s32.totalorder %s246, %s260
      %p262 = scmp.eq.s32.totalorder %s43, 0
      %p263 = por %p261, %p262
      %s265 = sadd.s32 %s264, 1
      %p268 = scmp.eq.s32.totalorder %s37, 1
      %p269 = scmp.ne.s32.totalorder %s264, %s266
      %p270 = scmp.eq.s32.totalorder %s37, 0
      %p271 = por %p269, %p270
      %p272 = scmp.ne.s32.totalorder %s264, %s266
      %p273 = scmp.eq.s32.totalorder %s42, 1
      %p274 = por %p272, %p273
      %p275 = scmp.ne.s32.totalorder %s266, %s267
      %p276 = scmp.eq.s32.totalorder %s42, 0
      %p277 = por %p275, %p276
      %p278 = scmp.ne.s32.totalorder %s266, %s267
      %p279 = scmp.eq.s32.totalorder %s43, 1
      %p280 = por %p278, %p279
      %p282 = scmp.ne.s32.totalorder %s267, %s281
      %p283 = scmp.eq.s32.totalorder %s43, 0
      %p284 = por %p282, %p283
      %s286 = sadd.s32 %s285, 1
      %p289 = scmp.eq.s32.totalorder %s37, 1
      %p290 = scmp.ne.s32.totalorder %s285, %s287
      %p291 = scmp.eq.s32.totalorder %s37, 0
      %p292 = por %p290, %p291
      %p293 = scmp.ne.s32.totalorder %s285, %s287
      %p294 = scmp.eq.s32.totalorder %s42, 1
      %p295 = por %p293, %p294
      %p296 = scmp.ne.s32.totalorder %s287, %s288
      %p297 = scmp.eq.s32.totalorder %s42, 0
      %p298 = por %p296, %p297
      %p299 = scmp.ne.s32.totalorder %s287, %s288
      %p300 = scmp.eq.s32.totalorder %s43, 1
      %p301 = por %p299, %p300
      %p303 = scmp.ne.s32.totalorder %s288, %s302
      %p304 = scmp.eq.s32.totalorder %s43, 0
      %p305 = por %p303, %p304
      %s307 = sadd.s32 %s306, 1
      %p310 = scmp.eq.s32.totalorder %s37, 1
      %p311 = scmp.ne.s32.totalorder %s306, %s308
      %p312 = scmp.eq.s32.totalorder %s37, 0
      %p313 = por %p311, %p312
      %p314 = scmp.ne.s32.totalorder %s306, %s308
      %p315 = scmp.eq.s32.totalorder %s42, 1
      %p316 = por %p314, %p315
      %p317 = scmp.ne.s32.totalorder %s308, %s309
      %p318 = scmp.eq.s32.totalorder %s42, 0
      %p319 = por %p317, %p318
      %p320 = scmp.ne.s32.totalorder %s308, %s309
      %p321 = scmp.eq.s32.totalorder %s43, 1
      %p322 = por %p320, %p321
      %p324 = scmp.ne.s32.totalorder %s309, %s323
      %p325 = scmp.eq.s32.totalorder %s43, 0
      %p326 = por %p324, %p325
      %s328 = sadd.s32 %s327, 1
      %p331 = scmp.eq.s32.totalorder %s37, 1
      %p332 = scmp.ne.s32.totalorder %s327, %s329
      %p333 = scmp.eq.s32.totalorder %s37, 0
      %p334 = por %p332, %p333
      %p335 = scmp.ne.s32.totalorder %s327, %s329
      %p336 = scmp.eq.s32.totalorder %s42, 1
      %p337 = por %p335, %p336
      %p338 = scmp.ne.s32.totalorder %s329, %s330
      %p339 = scmp.eq.s32.totalorder %s42, 0
      %p340 = por %p338, %p339
      %p341 = scmp.ne.s32.totalorder %s329, %s330
      %p342 = scmp.eq.s32.totalorder %s43, 1
      %p343 = por %p341, %p342
      %p345 = scmp.ne.s32.totalorder %s330, %s344
      %p346 = scmp.eq.s32.totalorder %s43, 0
      %p347 = por %p345, %p346
      %s349 = sadd.s32 %s348, 1
      %p352 = scmp.eq.s32.totalorder %s37, 1
      %p353 = scmp.ne.s32.totalorder %s348, %s350
      %p354 = scmp.eq.s32.totalorder %s37, 0
      %p355 = por %p353, %p354
      %p356 = scmp.ne.s32.totalorder %s348, %s350
      %p357 = scmp.eq.s32.totalorder %s42, 1
      %p358 = por %p356, %p357
      %p359 = scmp.ne.s32.totalorder %s350, %s351
      %p360 = scmp.eq.s32.totalorder %s42, 0
      %p361 = por %p359, %p360
      %p362 = scmp.ne.s32.totalorder %s350, %s351
      %p363 = scmp.eq.s32.totalorder %s43, 1
      %p364 = por %p362, %p363
      %p366 = scmp.ne.s32.totalorder %s351, %s365
      %p367 = scmp.eq.s32.totalorder %s43, 0
      %p368 = por %p366, %p367
      %s370 = sadd.s32 %s369, 1
      %p373 = scmp.eq.s32.totalorder %s37, 1
      %p374 = scmp.ne.s32.totalorder %s369, %s371
      %p375 = scmp.eq.s32.totalorder %s37, 0
      %p376 = por %p374, %p375
      %p377 = scmp.ne.s32.totalorder %s369, %s371
      %p378 = scmp.eq.s32.totalorder %s42, 1
      %p379 = por %p377, %p378
      %p380 = scmp.ne.s32.totalorder %s371, %s372
      %p381 = scmp.eq.s32.totalorder %s42, 0
      %p382 = por %p380, %p381
      %p383 = scmp.ne.s32.totalorder %s371, %s372
      %p384 = scmp.eq.s32.totalorder %s43, 1
      %p385 = por %p383, %p384
      %p387 = scmp.ne.s32.totalorder %s372, %s386
      %p388 = scmp.eq.s32.totalorder %s43, 0
      %p389 = por %p387, %p388
      %s391 = sadd.s32 %s390, 1
      %p394 = scmp.eq.s32.totalorder %s37, 1
      %p395 = scmp.ne.s32.totalorder %s390, %s392
      %p396 = scmp.eq.s32.totalorder %s37, 0
      %p397 = por %p395, %p396
      %p398 = scmp.ne.s32.totalorder %s390, %s392
      %p399 = scmp.eq.s32.totalorder %s42, 1
      %p400 = por %p398, %p399
      %p401 = scmp.ne.s32.totalorder %s392, %s393
      %p402 = scmp.eq.s32.totalorder %s42, 0
      %p403 = por %p401, %p402
      %p404 = scmp.ne.s32.totalorder %s392, %s393
      %p405 = scmp.eq.s32.totalorder %s43, 1
      %p406 = por %p404, %p405
      %p408 = scmp.ne.s32.totalorder %s393, %s407
      %p409 = scmp.eq.s32.totalorder %s43, 0
      %p410 = por %p408, %p409
      %s412 = sadd.s32 %s411, 1
      %p415 = scmp.eq.s32.totalorder %s37, 1
      %p416 = scmp.ne.s32.totalorder %s411, %s413
      %p417 = scmp.eq.s32.totalorder %s37, 0
      %p418 = por %p416, %p417
      %p419 = scmp.ne.s32.totalorder %s411, %s413
      %p420 = scmp.eq.s32.totalorder %s42, 1
      %p421 = por %p419, %p420
      %p422 = scmp.ne.s32.totalorder %s413, %s414
      %p423 = scmp.eq.s32.totalorder %s42, 0
      %p424 = por %p422, %p423
      %p425 = scmp.ne.s32.totalorder %s413, %s414
      %p426 = scmp.eq.s32.totalorder %s43, 1
      %p427 = por %p425, %p426
      %p429 = scmp.ne.s32.totalorder %s414, %s428
      %p430 = scmp.eq.s32.totalorder %s43, 0
      %p431 = por %p429, %p430
      %s433 = sadd.s32 %s432, 1
      %p436 = scmp.eq.s32.totalorder %s37, 1
      %p437 = scmp.ne.s32.totalorder %s432, %s434
      %p438 = scmp.eq.s32.totalorder %s37, 0
      %p439 = por %p437, %p438
      %p440 = scmp.ne.s32.totalorder %s432, %s434
      %p441 = scmp.eq.s32.totalorder %s42, 1
      %p442 = por %p440, %p441
      %p443 = scmp.ne.s32.totalorder %s434, %s435
      %p444 = scmp.eq.s32.totalorder %s42, 0
      %p445 = por %p443, %p444
      %p446 = scmp.ne.s32.totalorder %s434, %s435
      %p447 = scmp.eq.s32.totalorder %s43, 1
      %p448 = por %p446, %p447
      %p450 = scmp.ne.s32.totalorder %s435, %s449
      %p451 = scmp.eq.s32.totalorder %s43, 0
      %p452 = por %p450, %p451
      %s454 = sadd.s32 %s453, 1
      %p457 = scmp.eq.s32.totalorder %s37, 1
      %p458 = scmp.ne.s32.totalorder %s453, %s455
      %p459 = scmp.eq.s32.totalorder %s37, 0
      %p460 = por %p458, %p459
      %p461 = scmp.ne.s32.totalorder %s453, %s455
      %p462 = scmp.eq.s32.totalorder %s42, 1
      %p463 = por %p461, %p462
      %p464 = scmp.ne.s32.totalorder %s455, %s456
      %p465 = scmp.eq.s32.totalorder %s42, 0
      %p466 = por %p464, %p465
      %p467 = scmp.ne.s32.totalorder %s455, %s456
      %p468 = scmp.eq.s32.totalorder %s43, 1
      %p469 = por %p467, %p468
      %p471 = scmp.ne.s32.totalorder %s456, %s470
      %p472 = scmp.eq.s32.totalorder %s43, 0
      %p473 = por %p471, %p472
      %s475 = sadd.s32 %s474, 1
      %p478 = scmp.eq.s32.totalorder %s37, 1
      %p479 = scmp.ne.s32.totalorder %s474, %s476
      %p480 = scmp.eq.s32.totalorder %s37, 0
      %p481 = por %p479, %p480
      %p482 = scmp.ne.s32.totalorder %s474, %s476
      %p483 = scmp.eq.s32.totalorder %s42, 1
      %p484 = por %p482, %p483
      %p485 = scmp.ne.s32.totalorder %s476, %s477
      %p486 = scmp.eq.s32.totalorder %s42, 0
      %p487 = por %p485, %p486
      %p488 = scmp.ne.s32.totalorder %s476, %s477
      %p489 = scmp.eq.s32.totalorder %s43, 1
      %p490 = por %p488, %p489
      %p492 = scmp.ne.s32.totalorder %s477, %s491
      %p493 = scmp.eq.s32.totalorder %s43, 0
      %p494 = por %p492, %p493
      %s496 = sadd.s32 %s495, 1
      %p499 = scmp.eq.s32.totalorder %s37, 1
      %p500 = scmp.ne.s32.totalorder %s495, %s497
      %p501 = scmp.eq.s32.totalorder %s37, 0
      %p502 = por %p500, %p501
      %p503 = scmp.ne.s32.totalorder %s495, %s497
      %p504 = scmp.eq.s32.totalorder %s42, 1
      %p505 = por %p503, %p504
      %p506 = scmp.ne.s32.totalorder %s497, %s498
      %p507 = scmp.eq.s32.totalorder %s42, 0
      %p508 = por %p506, %p507
      %p509 = scmp.ne.s32.totalorder %s497, %s498
      %p510 = scmp.eq.s32.totalorder %s43, 1
      %p511 = por %p509, %p510
      %p513 = scmp.ne.s32.totalorder %s498, %s512
      %p514 = scmp.eq.s32.totalorder %s43, 0
      %p515 = por %p513, %p514
      %s517 = sadd.s32 %s516, 1
      %p520 = scmp.eq.s32.totalorder %s37, 1
      %p521 = scmp.ne.s32.totalorder %s516, %s518
      %p522 = scmp.eq.s32.totalorder %s37, 0
      %p523 = por %p521, %p522
      %p524 = scmp.ne.s32.totalorder %s516, %s518
      %p525 = scmp.eq.s32.totalorder %s42, 1
      %p526 = por %p524, %p525
      %p527 = scmp.ne.s32.totalorder %s518, %s519
      %p528 = scmp.eq.s32.totalorder %s42, 0
      %p529 = por %p527, %p528
      %p530 = scmp.ne.s32.totalorder %s518, %s519
      %p531 = scmp.eq.s32.totalorder %s43, 1
      %p532 = por %p530, %p531
      %p534 = scmp.ne.s32.totalorder %s519, %s533
      %p535 = scmp.eq.s32.totalorder %s43, 0
      %p536 = por %p534, %p535
      %s538 = sadd.s32 %s537, 1
      %p541 = scmp.eq.s32.totalorder %s37, 1
      %p542 = scmp.ne.s32.totalorder %s537, %s539
      %p543 = scmp.eq.s32.totalorder %s37, 0
      %p544 = por %p542, %p543
      %p545 = scmp.ne.s32.totalorder %s537, %s539
      %p546 = scmp.eq.s32.totalorder %s42, 1
      %p547 = por %p545, %p546
      %p548 = scmp.ne.s32.totalorder %s539, %s540
      %p549 = scmp.eq.s32.totalorder %s42, 0
      %p550 = por %p548, %p549
      %p551 = scmp.ne.s32.totalorder %s539, %s540
      %p552 = scmp.eq.s32.totalorder %s43, 1
      %p553 = por %p551, %p552
      %p555 = scmp.ne.s32.totalorder %s540, %s554
      %p556 = scmp.eq.s32.totalorder %s43, 0
      %p557 = por %p555, %p556
      %s559 = sadd.s32 %s558, 1
      %p562 = scmp.eq.s32.totalorder %s37, 1
      %p563 = scmp.ne.s32.totalorder %s558, %s560
      %p564 = scmp.eq.s32.totalorder %s37, 0
      %p565 = por %p563, %p564
      %p566 = scmp.ne.s32.totalorder %s558, %s560
      %p567 = scmp.eq.s32.totalorder %s42, 1
      %p568 = por %p566, %p567
      %p569 = scmp.ne.s32.totalorder %s560, %s561
      %p570 = scmp.eq.s32.totalorder %s42, 0
      %p571 = por %p569, %p570
      %p572 = scmp.ne.s32.totalorder %s560, %s561
      %p573 = scmp.eq.s32.totalorder %s43, 1
      %p574 = por %p572, %p573
      %p576 = scmp.ne.s32.totalorder %s561, %s575
      %p577 = scmp.eq.s32.totalorder %s43, 0
      %p578 = por %p576, %p577
      %s580 = sadd.s32 %s579, 1
      %p583 = scmp.eq.s32.totalorder %s37, 1
      %p584 = scmp.ne.s32.totalorder %s579, %s581
      %p585 = scmp.eq.s32.totalorder %s37, 0
      %p586 = por %p584, %p585
      %p587 = scmp.ne.s32.totalorder %s579, %s581
      %p588 = scmp.eq.s32.totalorder %s42, 1
      %p589 = por %p587, %p588
      %p590 = scmp.ne.s32.totalorder %s581, %s582
      %p591 = scmp.eq.s32.totalorder %s42, 0
      %p592 = por %p590, %p591
      %p593 = scmp.ne.s32.totalorder %s581, %s582
      %p594 = scmp.eq.s32.totalorder %s43, 1
      %p595 = por %p593, %p594
      %p597 = scmp.ne.s32.totalorder %s582, %s596
      %p598 = scmp.eq.s32.totalorder %s43, 0
      %p599 = por %p597, %p598
      %s601 = sadd.s32 %s600, 1
      %p604 = scmp.eq.s32.totalorder %s37, 1
      %p605 = scmp.ne.s32.totalorder %s600, %s602
      %p606 = scmp.eq.s32.totalorder %s37, 0
      %p607 = por %p605, %p606
      %p608 = scmp.ne.s32.totalorder %s600, %s602
      %p609 = scmp.eq.s32.totalorder %s42, 1
      %p610 = por %p608, %p609
      %p611 = scmp.ne.s32.totalorder %s602, %s603
      %p612 = scmp.eq.s32.totalorder %s42, 0
      %p613 = por %p611, %p612
      %p614 = scmp.ne.s32.totalorder %s602, %s603
      %p615 = scmp.eq.s32.totalorder %s43, 1
      %p616 = por %p614, %p615
      %p618 = scmp.ne.s32.totalorder %s603, %s617
      %p619 = scmp.eq.s32.totalorder %s43, 0
      %p620 = por %p618, %p619
      %s622 = sadd.s32 %s621, 1
      %p625 = scmp.eq.s32.totalorder %s37, 1
      %p626 = scmp.ne.s32.totalorder %s621, %s623
      %p627 = scmp.eq.s32.totalorder %s37, 0
      %p628 = por %p626, %p627
      %p629 = scmp.ne.s32.totalorder %s621, %s623
      %p630 = scmp.eq.s32.totalorder %s42, 1
      %p631 = por %p629, %p630
      %p632 = scmp.ne.s32.totalorder %s623, %s624
      %p633 = scmp.eq.s32.totalorder %s42, 0
      %p634 = por %p632, %p633
      %p635 = scmp.ne.s32.totalorder %s623, %s624
      %p636 = scmp.eq.s32.totalorder %s43, 1
      %p637 = por %p635, %p636
      %p639 = scmp.ne.s32.totalorder %s624, %s638
      %p640 = scmp.eq.s32.totalorder %s43, 0
      %p641 = por %p639, %p640
      %s643 = sadd.s32 %s642, 1
      %p646 = scmp.eq.s32.totalorder %s37, 1
      %p647 = scmp.ne.s32.totalorder %s642, %s644
      %p648 = scmp.eq.s32.totalorder %s37, 0
      %p649 = por %p647, %p648
      %p650 = scmp.ne.s32.totalorder %s642, %s644
      %p651 = scmp.eq.s32.totalorder %s42, 1
      %p652 = por %p650, %p651
      %p653 = scmp.ne.s32.totalorder %s644, %s645
      %p654 = scmp.eq.s32.totalorder %s42, 0
      %p655 = por %p653, %p654
      %p656 = scmp.ne.s32.totalorder %s644, %s645
      %p657 = scmp.eq.s32.totalorder %s43, 1
      %p658 = por %p656, %p657
      %p660 = scmp.ne.s32.totalorder %s645, %s659
      %p661 = scmp.eq.s32.totalorder %s43, 0
      %p662 = por %p660, %p661
      %s663 = ssub.s32 %s37, %s44
      %p664 = scmp.eq.s32.totalorder %s663, 0
      %s666 = sadd.s32 %s665, 1
      %s667 = scalar_select %p664, %s665, %s666
      %p670 = pneg %p664
      %p671 = scmp.eq.s32.totalorder %s37, 1
      %p672 = por %p670, %p671
      %p673 = scmp.ne.s32.totalorder %s665, %s668
      %p674 = scmp.eq.s32.totalorder %s37, 0
      %p675 = por %p673, %p674
      %p676 = scmp.ne.s32.totalorder %s665, %s668
      %p677 = scmp.eq.s32.totalorder %s42, 1
      %p678 = por %p676, %p677
      %p679 = scmp.ne.s32.totalorder %s668, %s669
      %p680 = scmp.eq.s32.totalorder %s42, 0
      %p681 = por %p679, %p680
      %p682 = scmp.ne.s32.totalorder %s668, %s669
      %p683 = scmp.eq.s32.totalorder %s43, 1
      %p684 = por %p682, %p683
      %p686 = scmp.ne.s32.totalorder %s669, %s685
      %p687 = scmp.eq.s32.totalorder %s43, 0
      %p688 = por %p686, %p687
      %p689 = scmp.le.s32.totalorder 1, %s37
      %p690 = scmp.lt.s32.totalorder %s37, 3
      %p691 = pnand %p689, %p690
      %p692 = pneg %p691
      // Predicated region
      $region9: #{tpu_custom_call.1} parent=5 // pred_check
        _
      $region10: #{tpu_custom_call.1} parent=5 // pred_check_branch
        %694 = sbr.rel (%p691) target = $region12
      $region11: #{tpu_custom_call.1} parent=5 // pred_region
        %s695 = ssub.s32 %s37, 1
        // Predicated region
        $region13: #{tpu_custom_call.1} parent=11 // pred_check
          %p696 = pneg %p214
        $region14: #{tpu_custom_call.1} parent=11 // pred_check_branch
          %698 = sbr.rel (%p696) target = $region16
        $region15: #{tpu_custom_call.1} parent=11 // pred_region
          _
        $region16: #{tpu_custom_call.1} parent=11 // pred_fallthru
          _
        // Predicated region
        $region17: #{tpu_custom_call.1} parent=11 // pred_check
          %p699 = pneg %p235
        $region18: #{tpu_custom_call.1} parent=11 // pred_check_branch
          %701 = sbr.rel (%p699) target = $region20
        $region19: #{tpu_custom_call.1} parent=11 // pred_region
          _
        $region20: #{tpu_custom_call.1} parent=11 // pred_fallthru
          _
        // Predicated region
        $region21: #{tpu_custom_call.1} parent=11 // pred_check
          %p702 = pneg %p256
        $region22: #{tpu_custom_call.1} parent=11 // pred_check_branch
          %704 = sbr.rel (%p702) target = $region24
        $region23: #{tpu_custom_call.1} parent=11 // pred_region
          _
        $region24: #{tpu_custom_call.1} parent=11 // pred_fallthru
          _
        // Predicated region
        $region25: #{tpu_custom_call.1} parent=11 // pred_check
          %p705 = pneg %p277
        $region26: #{tpu_custom_call.1} parent=11 // pred_check_branch
          %707 = sbr.rel (%p705) target = $region28
        $region27: #{tpu_custom_call.1} parent=11 // pred_region
          _
        $region28: #{tpu_custom_call.1} parent=11 // pred_fallthru
          _
        // Predicated region
        $region29: #{tpu_custom_call.1} parent=11 // pred_check
          %p708 = pneg %p298
        $region30: #{tpu_custom_call.1} parent=11 // pred_check_branch
          %710 = sbr.rel (%p708) target = $region32
        $region31: #{tpu_custom_call.1} parent=11 // pred_region
          _
        $region32: #{tpu_custom_call.1} parent=11 // pred_fallthru
          _
        // Predicated region
        $region33: #{tpu_custom_call.1} parent=11 // pred_check
          %p711 = pneg %p319
        $region34: #{tpu_custom_call.1} parent=11 // pred_check_branch
          %713 = sbr.rel (%p711) target = $region36
        $region35: #{tpu_custom_call.1} parent=11 // pred_region
          _
        $region36: #{tpu_custom_call.1} parent=11 // pred_fallthru
          _
        // Predicated region
        $region37: #{tpu_custom_call.1} parent=11 // pred_check
          %p714 = pneg %p340
        $region38: #{tpu_custom_call.1} parent=11 // pred_check_branch
          %716 = sbr.rel (%p714) target = $region40
        $region39: #{tpu_custom_call.1} parent=11 // pred_region
          _
        $region40: #{tpu_custom_call.1} parent=11 // pred_fallthru
          _
        // Predicated region
        $region41: #{tpu_custom_call.1} parent=11 // pred_check
          %p717 = pneg %p361
        $region42: #{tpu_custom_call.1} parent=11 // pred_check_branch
          %719 = sbr.rel (%p717) target = $region44
        $region43: #{tpu_custom_call.1} parent=11 // pred_region
          _
        $region44: #{tpu_custom_call.1} parent=11 // pred_fallthru
          _
        // Predicated region
        $region45: #{tpu_custom_call.1} parent=11 // pred_check
          %p720 = pneg %p382
        $region46: #{tpu_custom_call.1} parent=11 // pred_check_branch
          %722 = sbr.rel (%p720) target = $region48
        $region47: #{tpu_custom_call.1} parent=11 // pred_region
          _
        $region48: #{tpu_custom_call.1} parent=11 // pred_fallthru
          _
        // Predicated region
        $region49: #{tpu_custom_call.1} parent=11 // pred_check
          %p723 = pneg %p403
        $region50: #{tpu_custom_call.1} parent=11 // pred_check_branch
          %725 = sbr.rel (%p723) target = $region52
        $region51: #{tpu_custom_call.1} parent=11 // pred_region
          _
        $region52: #{tpu_custom_call.1} parent=11 // pred_fallthru
          _
        // Predicated region
        $region53: #{tpu_custom_call.1} parent=11 // pred_check
          %p726 = pneg %p424
        $region54: #{tpu_custom_call.1} parent=11 // pred_check_branch
          %728 = sbr.rel (%p726) target = $region56
        $region55: #{tpu_custom_call.1} parent=11 // pred_region
          _
        $region56: #{tpu_custom_call.1} parent=11 // pred_fallthru
          _
        // Predicated region
        $region57: #{tpu_custom_call.1} parent=11 // pred_check
          %p729 = pneg %p445
        $region58: #{tpu_custom_call.1} parent=11 // pred_check_branch
          %731 = sbr.rel (%p729) target = $region60
        $region59: #{tpu_custom_call.1} parent=11 // pred_region
          _
        $region60: #{tpu_custom_call.1} parent=11 // pred_fallthru
          _
        // Predicated region
        $region61: #{tpu_custom_call.1} parent=11 // pred_check
          %p732 = pneg %p466
        $region62: #{tpu_custom_call.1} parent=11 // pred_check_branch
          %734 = sbr.rel (%p732) target = $region64
        $region63: #{tpu_custom_call.1} parent=11 // pred_region
          _
        $region64: #{tpu_custom_call.1} parent=11 // pred_fallthru
          _
        // Predicated region
        $region65: #{tpu_custom_call.1} parent=11 // pred_check
          %p735 = pneg %p487
        $region66: #{tpu_custom_call.1} parent=11 // pred_check_branch
          %737 = sbr.rel (%p735) target = $region68
        $region67: #{tpu_custom_call.1} parent=11 // pred_region
          _
        $region68: #{tpu_custom_call.1} parent=11 // pred_fallthru
          _
        // Predicated region
        $region69: #{tpu_custom_call.1} parent=11 // pred_check
          %p738 = pneg %p508
        $region70: #{tpu_custom_call.1} parent=11 // pred_check_branch
          %740 = sbr.rel (%p738) target = $region72
        $region71: #{tpu_custom_call.1} parent=11 // pred_region
          _
        $region72: #{tpu_custom_call.1} parent=11 // pred_fallthru
          _
        // Predicated region
        $region73: #{tpu_custom_call.1} parent=11 // pred_check
          %p741 = pneg %p529
        $region74: #{tpu_custom_call.1} parent=11 // pred_check_branch
          %743 = sbr.rel (%p741) target = $region76
        $region75: #{tpu_custom_call.1} parent=11 // pred_region
          _
        $region76: #{tpu_custom_call.1} parent=11 // pred_fallthru
          _
        // Predicated region
        $region77: #{tpu_custom_call.1} parent=11 // pred_check
          %p744 = pneg %p550
        $region78: #{tpu_custom_call.1} parent=11 // pred_check_branch
          %746 = sbr.rel (%p744) target = $region80
        $region79: #{tpu_custom_call.1} parent=11 // pred_region
          _
        $region80: #{tpu_custom_call.1} parent=11 // pred_fallthru
          _
        // Predicated region
        $region81: #{tpu_custom_call.1} parent=11 // pred_check
          %p747 = pneg %p571
        $region82: #{tpu_custom_call.1} parent=11 // pred_check_branch
          %749 = sbr.rel (%p747) target = $region84
        $region83: #{tpu_custom_call.1} parent=11 // pred_region
          _
        $region84: #{tpu_custom_call.1} parent=11 // pred_fallthru
          _
        // Predicated region
        $region85: #{tpu_custom_call.1} parent=11 // pred_check
          %p750 = pneg %p592
        $region86: #{tpu_custom_call.1} parent=11 // pred_check_branch
          %752 = sbr.rel (%p750) target = $region88
        $region87: #{tpu_custom_call.1} parent=11 // pred_region
          _
        $region88: #{tpu_custom_call.1} parent=11 // pred_fallthru
          _
        // Predicated region
        $region89: #{tpu_custom_call.1} parent=11 // pred_check
          %p753 = pneg %p613
        $region90: #{tpu_custom_call.1} parent=11 // pred_check_branch
          %755 = sbr.rel (%p753) target = $region92
        $region91: #{tpu_custom_call.1} parent=11 // pred_region
          _
        $region92: #{tpu_custom_call.1} parent=11 // pred_fallthru
          _
        // Predicated region
        $region93: #{tpu_custom_call.1} parent=11 // pred_check
          %p756 = pneg %p634
        $region94: #{tpu_custom_call.1} parent=11 // pred_check_branch
          %758 = sbr.rel (%p756) target = $region96
        $region95: #{tpu_custom_call.1} parent=11 // pred_region
          _
        $region96: #{tpu_custom_call.1} parent=11 // pred_fallthru
          _
        // Predicated region
        $region97: #{tpu_custom_call.1} parent=11 // pred_check
          %p759 = pneg %p655
        $region98: #{tpu_custom_call.1} parent=11 // pred_check_branch
          %761 = sbr.rel (%p759) target = $region100
        $region99: #{tpu_custom_call.1} parent=11 // pred_region
          _
        $region100: #{tpu_custom_call.1} parent=11 // pred_fallthru
          _
      $region12: #{tpu_custom_call.1} parent=5 // pred_fallthru
        _
      %p762 = scmp.lt.s32.totalorder %s37, 2
      // Predicated region
      $region101: #{tpu_custom_call.1} parent=5 // pred_check
        %p763 = pneg %p762
      $region102: #{tpu_custom_call.1} parent=5 // pred_check_branch
        %765 = sbr.rel (%p763) target = $region104
      $region103: #{tpu_custom_call.1} parent=5 // pred_region
        // Predicated region
        $region105: #{tpu_custom_call.1} parent=103 // pred_check
          %p766 = pneg %p57
        $region106: #{tpu_custom_call.1} parent=103 // pred_check_branch
          %768 = sbr.rel (%p766) target = $region108
        $region107: #{tpu_custom_call.1} parent=103 // pred_region
          %p769 = scmp.lt.s32.totalorder %s37, 1
          %s770 = scalar_select %p769, %s37, 1
          %s771 = smul.addr %s770, 8
          %s772 = scalar_lea.vmem %s0, %s771
        $region108: #{tpu_custom_call.1} parent=103 // pred_fallthru
          _
        // Predicated region
        $region109: #{tpu_custom_call.1} parent=103 // pred_check
          %p773 = pneg %p83
        $region110: #{tpu_custom_call.1} parent=103 // pred_check_branch
          %775 = sbr.rel (%p773) target = $region112
        $region111: #{tpu_custom_call.1} parent=103 // pred_region
          %p776 = scmp.lt.s32.totalorder %s37, 1
          %s777 = scalar_select %p776, %s37, 1
          %s778 = smul.addr %s777, 8
          %s779 = scalar_lea.vmem %s1, %s778
        $region112: #{tpu_custom_call.1} parent=103 // pred_fallthru
          _
        // Predicated region
        $region113: #{tpu_custom_call.1} parent=103 // pred_check
          %p780 = pneg %p109
        $region114: #{tpu_custom_call.1} parent=103 // pred_check_branch
          %782 = sbr.rel (%p780) target = $region116
        $region115: #{tpu_custom_call.1} parent=103 // pred_region
          %p783 = scmp.lt.s32.totalorder %s37, 1
          %s784 = scalar_select %p783, %s37, 1
          %s785 = smul.addr %s784, 8
          %s786 = scalar_lea.vmem %s2, %s785
        $region116: #{tpu_custom_call.1} parent=103 // pred_fallthru
          _
        // Predicated region
        $region117: #{tpu_custom_call.1} parent=103 // pred_check
          %p787 = pneg %p135
        $region118: #{tpu_custom_call.1} parent=103 // pred_check_branch
          %789 = sbr.rel (%p787) target = $region120
        $region119: #{tpu_custom_call.1} parent=103 // pred_region
          %p790 = scmp.lt.s32.totalorder %s37, 1
          %s791 = scalar_select %p790, %s37, 1
          %s792 = smul.addr %s791, 8
          %s793 = scalar_lea.vmem %s3, %s792
        $region120: #{tpu_custom_call.1} parent=103 // pred_fallthru
          _
        // Predicated region
        $region121: #{tpu_custom_call.1} parent=103 // pred_check
          %p794 = pneg %p161
        $region122: #{tpu_custom_call.1} parent=103 // pred_check_branch
          %796 = sbr.rel (%p794) target = $region124
        $region123: #{tpu_custom_call.1} parent=103 // pred_region
          %p797 = scmp.lt.s32.totalorder %s37, 1
          %s798 = scalar_select %p797, %s37, 1
          %s799 = scalar_lea.vmem %s4, %s798
        $region124: #{tpu_custom_call.1} parent=103 // pred_fallthru
          _
        // Predicated region
        $region125: #{tpu_custom_call.1} parent=103 // pred_check
          %p800 = pneg %p187
        $region126: #{tpu_custom_call.1} parent=103 // pred_check_branch
          %802 = sbr.rel (%p800) target = $region128
        $region127: #{tpu_custom_call.1} parent=103 // pred_region
          %p803 = scmp.lt.s32.totalorder %s37, 1
          %s804 = scalar_select %p803, %s37, 1
          %s805 = scalar_lea.vmem %s5, %s804
        $region128: #{tpu_custom_call.1} parent=103 // pred_fallthru
          _
      $region104: #{tpu_custom_call.1} parent=5 // pred_fallthru
        _
      %p806 = scmp.le.s32.totalorder 1, %s37
      %p807 = scmp.lt.s32.totalorder %s37, 3
      %p808 = pnand %p806, %p807
      %p809 = pneg %p808
      // Predicated region
      $region129: #{tpu_custom_call.1} parent=5 // pred_check
        _
      $region130: #{tpu_custom_call.1} parent=5 // pred_check_branch
        %811 = sbr.rel (%p808) target = $region132
      $region131: #{tpu_custom_call.1} parent=5 // pred_region
        %s812 = ssub.s32 %s37, 1
        %p813 = scmp.lt.s32.totalorder %s42, 1
        %s814 = scalar_select %p813, %s42, 1
        %s815 = smul.addr %s814, 8
        %s816 = scalar_lea.vmem %s0, %s815
        %p817 = pneg %p63
        %p818 = pneg %p60
        %p819 = scmp.lt.s32.totalorder %s42, 1
        %s820 = scalar_select %p819, %s42, 1
        %s821 = smul.addr %s820, 8
        %s822 = scalar_lea.vmem %s1, %s821
        %p823 = pneg %p89
        %p824 = pneg %p86
        %p825 = scmp.lt.s32.totalorder %s42, 1
        %s826 = scalar_select %p825, %s42, 1
        %s827 = smul.addr %s826, 8
        %s828 = scalar_lea.vmem %s2, %s827
        %p829 = pneg %p115
        %p830 = pneg %p112
        %p831 = scmp.lt.s32.totalorder %s42, 1
        %s832 = scalar_select %p831, %s42, 1
        %s833 = smul.addr %s832, 8
        %s834 = scalar_lea.vmem %s3, %s833
        %p835 = pneg %p141
        %p836 = pneg %p138
        %p837 = scmp.lt.s32.totalorder %s42, 1
        %s838 = scalar_select %p837, %s42, 1
        %s839 = scalar_lea.vmem %s4, %s838
        %p840 = pneg %p167
        %p841 = pneg %p164
        %p842 = scmp.lt.s32.totalorder %s42, 1
        %s843 = scalar_select %p842, %s42, 1
        %s844 = scalar_lea.vmem %s5, %s843
        %p845 = pneg %p193
        %p846 = pneg %p190
        %p847 = pneg %p214
        %p848 = pneg %p211
        %p849 = pneg %p235
        %p850 = pneg %p232
        %p851 = pneg %p256
        %p852 = pneg %p253
        %p853 = pneg %p277
        %p854 = pneg %p274
        %p855 = pneg %p298
        %p856 = pneg %p295
        %p857 = pneg %p319
        %p858 = pneg %p316
        %p859 = pneg %p340
        %p860 = pneg %p337
        %p861 = pneg %p361
        %p862 = pneg %p358
        %p863 = pneg %p382
        %p864 = pneg %p379
        %p865 = pneg %p403
        %p866 = pneg %p400
        %p867 = pneg %p424
        %p868 = pneg %p421
        %p869 = pneg %p445
        %p870 = pneg %p442
        %p871 = pneg %p466
        %p872 = pneg %p463
        %p873 = pneg %p487
        %p874 = pneg %p484
        %p875 = pneg %p508
        %p876 = pneg %p505
        %p877 = pneg %p529
        %p878 = pneg %p526
        %p879 = pneg %p550
        %p880 = pneg %p547
        %p881 = pneg %p571
        %p882 = pneg %p568
        %p883 = pneg %p592
        %p884 = pneg %p589
        %p885 = pneg %p613
        %p886 = pneg %p610
        %p887 = pneg %p634
        %p888 = pneg %p631
        %p889 = pneg %p655
        %p890 = pneg %p652
        %p891 = pneg %p681
        %p892 = pneg %p678
        %s893 = sand.u32 %s668, 1
        %s894 = scalar_lea.sflag [#allocation3], %s893
        %s895 = sand.u32 %s668, 1
        %s896 = smul.addr %s895, 8
        %s897 = scalar_lea.vmem [#allocation2], %s896
        %p898 = scmp.lt.s32.totalorder %s42, 1
        %s899 = scalar_select %p898, %s42, 1
        %s900 = smul.addr %s899, 8
        %s901 = scalar_lea.vmem %s0, %s900
        %p902 = scmp.lt.s32.totalorder %s42, 1
        %s903 = scalar_select %p902, %s42, 1
        %s904 = smul.addr %s903, 8
        %s905 = scalar_lea.vmem %s1, %s904
        %p906 = scmp.lt.s32.totalorder %s42, 1
        %s907 = scalar_select %p906, %s42, 1
        %s908 = smul.addr %s907, 8
        %s909 = scalar_lea.vmem %s2, %s908
        %p910 = scmp.lt.s32.totalorder %s42, 1
        %s911 = scalar_select %p910, %s42, 1
        %s912 = smul.addr %s911, 8
        %s913 = scalar_lea.vmem %s3, %s912
        %p914 = scmp.lt.s32.totalorder %s42, 1
        %s915 = scalar_select %p914, %s42, 1
        %s916 = scalar_lea.vmem %s4, %s915
        %p917 = scmp.lt.s32.totalorder %s42, 1
        %s918 = scalar_select %p917, %s42, 1
        %s919 = scalar_lea.vmem %s5, %s918
        %v921 = vld [vmem:[%s901] sm:$0xff]
        %v922 = vld [vmem:[%s905] sm:$0xff]
        %v923 = vld [vmem:[%s909] sm:$0xff]
        %v924 = vld [vmem:[%s913] sm:$0xff]
        %v925 = vld [vmem:[%s916] sm:$0x1]
        %v926 = vld [vmem:[%s919] sm:$0x1]
        %v927 = vld [vmem:[%s6] sm:$0xf]
        %v928 = vld [vmem:[%s7] sm:$0xf]
        %vm929 = vcmask 261120
        %v930 = vsel %vm929, %v921, 0.0
        %931 = vadd.xlane.f32.xlu0 %v930
        %v932 = vpop.xlane.xlu0 %931
        %v933 = vrcp.pop 32.0
        %v934 = vmul.f32 32.0, %v933
        %v935 = vsub.f32 1.0, %v934
        %v936 = vmul.f32 %v933, %v935
        %v937 = vadd.f32 %v933, %v936
        %vm938 = vweird.f32 %v933
        %v939 = vsel %vm938, %v933, %v937
        %v940 = vmul.f32 %v932, %v939
        %v941 = vsub.f32 %v921, %v940
        %v942 = vmul.f32 %v941, %v941
        %v943 = vsel %vm929, %v942, 0.0
        %944 = vadd.xlane.f32.xlu0 %v943
        %v945 = vpop.xlane.xlu0 %944
        %v946 = vmul.f32 %v945, 0.032258064
        %v947 = vrsqrt.pop %v946
        %v948 = vmul.f32 %v947, %v946
        %v949 = vmul.f32 %v948, %v947
        %v950 = vmul.f32 0.5, %v949
        %v951 = vsub.f32 1.5, %v950
        %v952 = vmul.f32 %v947, %v951
        %v953 = vmul.f32 %v946, %v952
        %vm954 = vcmp.eq.f32.partialorder %v946, inf
        %v955 = vsel %vm954, %v946, %v953
        %vm956 = vcmp.eq.f32.partialorder %v946, 0.0
        %v957 = vand.u32 %v946, 2147483648
        %v958 = vsel %vm956, %v957, %v955
        %v959 = vadd.f32 %v958, 1e-06
        %v960 = vrcp.pop %v959
        %v961 = vmul.f32 %v941, %v960
        %v962 = vperm.slane %v927, 0
        %v963 = vmul.f32 %v962, %v961
        %v964 = vperm.slane %v928, 0
        %v965 = vadd.f32 %v963, %v964
        %v966 = vld [vmem:[%s8] sm:$0xf]
        %v967 = vld [vmem:[%s8 + $0x4] sm:$0xf]
        %v968 = vld [vmem:[%s8 + $0x8] sm:$0xf]
        %v969 = vld [vmem:[%s8 + $0xc] sm:$0xf]
        %v970 = vld [vmem:[%s8 + $0x10] sm:$0xf]
        %v971 = vld [vmem:[%s8 + $0x14] sm:$0xf]
        %v972 = vld [vmem:[%s8 + $0x18] sm:$0xf]
        %v973 = vld [vmem:[%s8 + $0x1c] sm:$0xf]
        %v974 = vld [vmem:[%s8 + $0x20] sm:$0xf]
        %v975 = vld [vmem:[%s8 + $0x24] sm:$0xf]
        %v976 = vld [vmem:[%s8 + $0x28] sm:$0xf]
        %v977 = vld [vmem:[%s8 + $0x2c] sm:$0xf]
        %v978 = vld [vmem:[%s8 + $0x30] sm:$0xf]
        %v979 = vld [vmem:[%s8 + $0x34] sm:$0xf]
        %v980 = vld [vmem:[%s8 + $0x38] sm:$0xf]
        %v981 = vld [vmem:[%s8 + $0x3c] sm:$0xf]
        %v982 = vld [vmem:[%s9] sm:$0x1]
        %v983 = vld [vmem:[%s9 + $0x1] sm:$0x1]
        %v984 = vld [vmem:[%s9 + $0x2] sm:$0x1]
        %v985 = vld [vmem:[%s9 + $0x3] sm:$0x1]
        %v986 = vld [vmem:[%s10] sm:$0xf]
        %v987 = vld [vmem:[%s10 + $0x4] sm:$0xf]
        %v988 = vld [vmem:[%s10 + $0x8] sm:$0xf]
        %v989 = vld [vmem:[%s10 + $0xc] sm:$0xf]
        %v990 = vld [vmem:[%s10 + $0x10] sm:$0xf]
        %v991 = vld [vmem:[%s10 + $0x14] sm:$0xf]
        %v992 = vld [vmem:[%s10 + $0x18] sm:$0xf]
        %v993 = vld [vmem:[%s10 + $0x1c] sm:$0xf]
        %v994 = vld [vmem:[%s10 + $0x20] sm:$0xf]
        %v995 = vld [vmem:[%s10 + $0x24] sm:$0xf]
        %v996 = vld [vmem:[%s10 + $0x28] sm:$0xf]
        %v997 = vld [vmem:[%s10 + $0x2c] sm:$0xf]
        %v998 = vld [vmem:[%s10 + $0x30] sm:$0xf]
        %v999 = vld [vmem:[%s10 + $0x34] sm:$0xf]
        %v1000 = vld [vmem:[%s10 + $0x38] sm:$0xf]
        %v1001 = vld [vmem:[%s10 + $0x3c] sm:$0xf]
        %v1002 = vld [vmem:[%s11] sm:$0x1]
        %v1003 = vld [vmem:[%s11 + $0x1] sm:$0x1]
        %v1004 = vld [vmem:[%s11 + $0x2] sm:$0x1]
        %v1005 = vld [vmem:[%s11 + $0x3] sm:$0x1]
        %v1006 = vld [vmem:[%s12] sm:$0xf]
        %v1007 = vld [vmem:[%s12 + $0x4] sm:$0xf]
        %v1008 = vld [vmem:[%s12 + $0x8] sm:$0xf]
        %v1009 = vld [vmem:[%s12 + $0xc] sm:$0xf]
        %v1010 = vld [vmem:[%s12 + $0x10] sm:$0xf]
        %v1011 = vld [vmem:[%s12 + $0x14] sm:$0xf]
        %v1012 = vld [vmem:[%s12 + $0x18] sm:$0xf]
        %v1013 = vld [vmem:[%s12 + $0x1c] sm:$0xf]
        %v1014 = vld [vmem:[%s12 + $0x20] sm:$0xf]
        %v1015 = vld [vmem:[%s12 + $0x24] sm:$0xf]
        %v1016 = vld [vmem:[%s12 + $0x28] sm:$0xf]
        %v1017 = vld [vmem:[%s12 + $0x2c] sm:$0xf]
        %v1018 = vld [vmem:[%s12 + $0x30] sm:$0xf]
        %v1019 = vld [vmem:[%s12 + $0x34] sm:$0xf]
        %v1020 = vld [vmem:[%s12 + $0x38] sm:$0xf]
        %v1021 = vld [vmem:[%s12 + $0x3c] sm:$0xf]
        %v1022 = vld [vmem:[%s13] sm:$0x1]
        %v1023 = vld [vmem:[%s13 + $0x1] sm:$0x1]
        %v1024 = vld [vmem:[%s13 + $0x2] sm:$0x1]
        %v1025 = vld [vmem:[%s13 + $0x3] sm:$0x1]
        %v1026 = vld [vmem:[%s14] sm:$0xf]
        %v1027 = vld [vmem:[%s14 + $0x4] sm:$0xf]
        %v1028 = vld [vmem:[%s14 + $0x8] sm:$0xf]
        %v1029 = vld [vmem:[%s14 + $0xc] sm:$0xf]
        %v1030 = vld [vmem:[%s15] sm:$0x1]
        %v1031 = vpack.c.bf16 %v965, %v965
        %v1036 = vperm.slane %v982, 0
        %v1037 = vperm.slane %v983, 0
        %v1038 = vperm.slane %v984, 0
        %v1039 = vperm.slane %v985, 0
        %v1048 = vunpack.c.l.b16 %v966
        %v1049 = vunpack.c.l.b16 %v967
        %v1050 = vunpack.c.l.b16 %v968
        %v1051 = vunpack.c.l.b16 %v969
        %v1052 = vpack.c.b16 %v1049, %v1048
        %v1053 = vpack.c.b16 %v1051, %v1050
        %v1057 = vsel %vm929, %v1031, 0
        %1059 = vmatpush.bf16.msra.mxu0 0
        %1060 = vmatpush.bf16.msra.mxu0 0
        %1061 = vmatpush.bf16.msra.mxu0 0
        %1062 = vmatpush.bf16.msra.mxu0 0
        %1063 = vmatpush.bf16.msra.mxu0 0
        %1064 = vmatpush.bf16.msra.mxu0 0
        %1065 = vmatpush.bf16.msra.mxu0 %v1053
        %1066 = vmatpush.bf16.msra.mxu0 %v1052
        %1067 = vmatmul.bf16.gmra.mxu0 %v1057
        %v1068 = vpop.f32.mrf.mxu0
        %v1069 = vadd.f32 %v1036, %v1068
        %v1070 = vpop.f32.mrf.mxu0
        %1071 = vdwg.mxu0
        %v1076 = vunpack.c.l.b16 %v970
        %v1077 = vunpack.c.l.b16 %v971
        %v1078 = vunpack.c.l.b16 %v972
        %v1079 = vunpack.c.l.b16 %v973
        %v1080 = vpack.c.b16 %v1077, %v1076
        %v1081 = vpack.c.b16 %v1079, %v1078
        %1084 = vmatpush.bf16.msra.mxu0 0
        %1085 = vmatpush.bf16.msra.mxu0 0
        %1086 = vmatpush.bf16.msra.mxu0 0
        %1087 = vmatpush.bf16.msra.mxu0 0
        %1088 = vmatpush.bf16.msra.mxu0 0
        %1089 = vmatpush.bf16.msra.mxu0 0
        %1090 = vmatpush.bf16.msra.mxu0 %v1081
        %1091 = vmatpush.bf16.msra.mxu0 %v1080
        %1092 = vmatmul.bf16.gmra.mxu0 %v1057
        %v1093 = vpop.f32.mrf.mxu0
        %v1094 = vadd.f32 %v1037, %v1093
        %v1095 = vpop.f32.mrf.mxu0
        %1096 = vdwg.mxu0
        %v1101 = vunpack.c.l.b16 %v974
        %v1102 = vunpack.c.l.b16 %v975
        %v1103 = vunpack.c.l.b16 %v976
        %v1104 = vunpack.c.l.b16 %v977
        %v1105 = vpack.c.b16 %v1102, %v1101
        %v1106 = vpack.c.b16 %v1104, %v1103
        %1109 = vmatpush.bf16.msra.mxu0 0
        %1110 = vmatpush.bf16.msra.mxu0 0
        %1111 = vmatpush.bf16.msra.mxu0 0
        %1112 = vmatpush.bf16.msra.mxu0 0
        %1113 = vmatpush.bf16.msra.mxu0 0
        %1114 = vmatpush.bf16.msra.mxu0 0
        %1115 = vmatpush.bf16.msra.mxu0 %v1106
        %1116 = vmatpush.bf16.msra.mxu0 %v1105
        %1117 = vmatmul.bf16.gmra.mxu0 %v1057
        %v1118 = vpop.f32.mrf.mxu0
        %v1119 = vadd.f32 %v1038, %v1118
        %v1120 = vpop.f32.mrf.mxu0
        %1121 = vdwg.mxu0
        %v1126 = vunpack.c.l.b16 %v978
        %v1127 = vunpack.c.l.b16 %v979
        %v1128 = vunpack.c.l.b16 %v980
        %v1129 = vunpack.c.l.b16 %v981
        %v1130 = vpack.c.b16 %v1127, %v1126
        %v1131 = vpack.c.b16 %v1129, %v1128
        %1134 = vmatpush.bf16.msra.mxu0 0
        %1135 = vmatpush.bf16.msra.mxu0 0
        %1136 = vmatpush.bf16.msra.mxu0 0
        %1137 = vmatpush.bf16.msra.mxu0 0
        %1138 = vmatpush.bf16.msra.mxu0 0
        %1139 = vmatpush.bf16.msra.mxu0 0
        %1140 = vmatpush.bf16.msra.mxu0 %v1131
        %1141 = vmatpush.bf16.msra.mxu0 %v1130
        %1142 = vmatmul.bf16.gmra.mxu0 %v1057
        %v1143 = vpop.f32.mrf.mxu0
        %v1144 = vadd.f32 %v1039, %v1143
        %v1145 = vpop.f32.mrf.mxu0
        %1146 = vdwg.mxu0
        %v1151 = vperm.slane %v1002, 0
        %v1152 = vperm.slane %v1003, 0
        %v1153 = vperm.slane %v1004, 0
        %v1154 = vperm.slane %v1005, 0
        %v1163 = vunpack.c.l.b16 %v986
        %v1164 = vunpack.c.l.b16 %v987
        %v1165 = vunpack.c.l.b16 %v988
        %v1166 = vunpack.c.l.b16 %v989
        %v1167 = vpack.c.b16 %v1164, %v1163
        %v1168 = vpack.c.b16 %v1166, %v1165
        %1171 = vmatpush.bf16.msra.mxu0 0
        %1172 = vmatpush.bf16.msra.mxu0 0
        %1173 = vmatpush.bf16.msra.mxu0 0
        %1174 = vmatpush.bf16.msra.mxu0 0
        %1175 = vmatpush.bf16.msra.mxu0 0
        %1176 = vmatpush.bf16.msra.mxu0 0
        %1177 = vmatpush.bf16.msra.mxu0 %v1168
        %1178 = vmatpush.bf16.msra.mxu0 %v1167
        %1179 = vmatmul.bf16.gmra.mxu0 %v1057
        %v1180 = vpop.f32.mrf.mxu0
        %v1181 = vadd.f32 %v1151, %v1180
        %v1182 = vpop.f32.mrf.mxu0
        %1183 = vdwg.mxu0
        %v1188 = vunpack.c.l.b16 %v990
        %v1189 = vunpack.c.l.b16 %v991
        %v1190 = vunpack.c.l.b16 %v992
        %v1191 = vunpack.c.l.b16 %v993
        %v1192 = vpack.c.b16 %v1189, %v1188
        %v1193 = vpack.c.b16 %v1191, %v1190
        %1196 = vmatpush.bf16.msra.mxu0 0
        %1197 = vmatpush.bf16.msra.mxu0 0
        %1198 = vmatpush.bf16.msra.mxu0 0
        %1199 = vmatpush.bf16.msra.mxu0 0
        %1200 = vmatpush.bf16.msra.mxu0 0
        %1201 = vmatpush.bf16.msra.mxu0 0
        %1202 = vmatpush.bf16.msra.mxu0 %v1193
        %1203 = vmatpush.bf16.msra.mxu0 %v1192
        %1204 = vmatmul.bf16.gmra.mxu0 %v1057
        %v1205 = vpop.f32.mrf.mxu0
        %v1206 = vadd.f32 %v1152, %v1205
        %v1207 = vpop.f32.mrf.mxu0
        %1208 = vdwg.mxu0
        %v1213 = vunpack.c.l.b16 %v994
        %v1214 = vunpack.c.l.b16 %v995
        %v1215 = vunpack.c.l.b16 %v996
        %v1216 = vunpack.c.l.b16 %v997
        %v1217 = vpack.c.b16 %v1214, %v1213
        %v1218 = vpack.c.b16 %v1216, %v1215
        %1221 = vmatpush.bf16.msra.mxu0 0
        %1222 = vmatpush.bf16.msra.mxu0 0
        %1223 = vmatpush.bf16.msra.mxu0 0
        %1224 = vmatpush.bf16.msra.mxu0 0
        %1225 = vmatpush.bf16.msra.mxu0 0
        %1226 = vmatpush.bf16.msra.mxu0 0
        %1227 = vmatpush.bf16.msra.mxu0 %v1218
        %1228 = vmatpush.bf16.msra.mxu0 %v1217
        %1229 = vmatmul.bf16.gmra.mxu0 %v1057
        %v1230 = vpop.f32.mrf.mxu0
        %v1231 = vadd.f32 %v1153, %v1230
        %v1232 = vpop.f32.mrf.mxu0
        %1233 = vdwg.mxu0
        %v1238 = vunpack.c.l.b16 %v998
        %v1239 = vunpack.c.l.b16 %v999
        %v1240 = vunpack.c.l.b16 %v1000
        %v1241 = vunpack.c.l.b16 %v1001
        %v1242 = vpack.c.b16 %v1239, %v1238
        %v1243 = vpack.c.b16 %v1241, %v1240
        %1246 = vmatpush.bf16.msra.mxu0 0
        %1247 = vmatpush.bf16.msra.mxu0 0
        %1248 = vmatpush.bf16.msra.mxu0 0
        %1249 = vmatpush.bf16.msra.mxu0 0
        %1250 = vmatpush.bf16.msra.mxu0 0
        %1251 = vmatpush.bf16.msra.mxu0 0
        %1252 = vmatpush.bf16.msra.mxu0 %v1243
        %1253 = vmatpush.bf16.msra.mxu0 %v1242
        %1254 = vmatmul.bf16.gmra.mxu0 %v1057
        %v1255 = vpop.f32.mrf.mxu0
        %v1256 = vadd.f32 %v1154, %v1255
        %v1257 = vpop.f32.mrf.mxu0
        %1258 = vdwg.mxu0
        %v1263 = vperm.slane %v1022, 0
        %v1264 = vperm.slane %v1023, 0
        %v1265 = vperm.slane %v1024, 0
        %v1266 = vperm.slane %v1025, 0
        %v1275 = vunpack.c.l.b16 %v1006
        %v1276 = vunpack.c.l.b16 %v1007
        %v1277 = vunpack.c.l.b16 %v1008
        %v1278 = vunpack.c.l.b16 %v1009
        %v1279 = vpack.c.b16 %v1276, %v1275
        %v1280 = vpack.c.b16 %v1278, %v1277
        %1283 = vmatpush.bf16.msra.mxu0 0
        %1284 = vmatpush.bf16.msra.mxu0 0
        %1285 = vmatpush.bf16.msra.mxu0 0
        %1286 = vmatpush.bf16.msra.mxu0 0
        %1287 = vmatpush.bf16.msra.mxu0 0
        %1288 = vmatpush.bf16.msra.mxu0 0
        %1289 = vmatpush.bf16.msra.mxu0 %v1280
        %1290 = vmatpush.bf16.msra.mxu0 %v1279
        %1291 = vmatmul.bf16.gmra.mxu0 %v1057
        %v1292 = vpop.f32.mrf.mxu0
        %v1293 = vadd.f32 %v1263, %v1292
        %v1294 = vpop.f32.mrf.mxu0
        %1295 = vdwg.mxu0
        %v1300 = vunpack.c.l.b16 %v1010
        %v1301 = vunpack.c.l.b16 %v1011
        %v1302 = vunpack.c.l.b16 %v1012
        %v1303 = vunpack.c.l.b16 %v1013
        %v1304 = vpack.c.b16 %v1301, %v1300
        %v1305 = vpack.c.b16 %v1303, %v1302
        %1308 = vmatpush.bf16.msra.mxu0 0
        %1309 = vmatpush.bf16.msra.mxu0 0
        %1310 = vmatpush.bf16.msra.mxu0 0
        %1311 = vmatpush.bf16.msra.mxu0 0
        %1312 = vmatpush.bf16.msra.mxu0 0
        %1313 = vmatpush.bf16.msra.mxu0 0
        %1314 = vmatpush.bf16.msra.mxu0 %v1305
        %1315 = vmatpush.bf16.msra.mxu0 %v1304
        %1316 = vmatmul.bf16.gmra.mxu0 %v1057
        %v1317 = vpop.f32.mrf.mxu0
        %v1318 = vadd.f32 %v1264, %v1317
        %v1319 = vpop.f32.mrf.mxu0
        %1320 = vdwg.mxu0
        %v1325 = vunpack.c.l.b16 %v1014
        %v1326 = vunpack.c.l.b16 %v1015
        %v1327 = vunpack.c.l.b16 %v1016
        %v1328 = vunpack.c.l.b16 %v1017
        %v1329 = vpack.c.b16 %v1326, %v1325
        %v1330 = vpack.c.b16 %v1328, %v1327
        %1333 = vmatpush.bf16.msra.mxu0 0
        %1334 = vmatpush.bf16.msra.mxu0 0
        %1335 = vmatpush.bf16.msra.mxu0 0
        %1336 = vmatpush.bf16.msra.mxu0 0
        %1337 = vmatpush.bf16.msra.mxu0 0
        %1338 = vmatpush.bf16.msra.mxu0 0
        %1339 = vmatpush.bf16.msra.mxu0 %v1330
        %1340 = vmatpush.bf16.msra.mxu0 %v1329
        %1341 = vmatmul.bf16.gmra.mxu0 %v1057
        %v1342 = vpop.f32.mrf.mxu0
        %v1343 = vadd.f32 %v1265, %v1342
        %v1344 = vpop.f32.mrf.mxu0
        %1345 = vdwg.mxu0
        %v1350 = vunpack.c.l.b16 %v1018
        %v1351 = vunpack.c.l.b16 %v1019
        %v1352 = vunpack.c.l.b16 %v1020
        %v1353 = vunpack.c.l.b16 %v1021
        %v1354 = vpack.c.b16 %v1351, %v1350
        %v1355 = vpack.c.b16 %v1353, %v1352
        %1358 = vmatpush.bf16.msra.mxu0 0
        %1359 = vmatpush.bf16.msra.mxu0 0
        %1360 = vmatpush.bf16.msra.mxu0 0
        %1361 = vmatpush.bf16.msra.mxu0 0
        %1362 = vmatpush.bf16.msra.mxu0 0
        %1363 = vmatpush.bf16.msra.mxu0 0
        %1364 = vmatpush.bf16.msra.mxu0 %v1355
        %1365 = vmatpush.bf16.msra.mxu0 %v1354
        %1366 = vmatmul.bf16.gmra.mxu0 %v1057
        %v1367 = vpop.f32.mrf.mxu0
        %v1368 = vadd.f32 %v1266, %v1367
        %v1369 = vpop.f32.mrf.mxu0
        %1370 = vdwg.mxu0
        %v1371 = vpack.c.bf16 %v1069, %v1069
        %v1372 = vpack.c.bf16 %v1094, %v1094
        %v1373 = vpack.c.bf16 %v1119, %v1119
        %v1374 = vpack.c.bf16 %v1144, %v1144
        %v1375 = vpack.c.bf16 %v1181, %v1181
        %v1376 = vpack.c.bf16 %v1206, %v1206
        %v1377 = vpack.c.bf16 %v1231, %v1231
        %v1378 = vpack.c.bf16 %v1256, %v1256
        %vm1379 = vcmask 64512
        %v1381 = vsel %vm1379, %v1371, 0
        %v1384 = vsel %vm1379, %v1375, 0
        %1386 = vmatpush.bf16.xpose.msra.mxu0 0
        %1387 = vmatpush.bf16.xpose.msra.mxu0 0
        %1388 = vmatpush.bf16.xpose.msra.mxu0 0
        %1389 = vmatpush.bf16.xpose.msra.mxu0 0
        %1390 = vmatpush.bf16.xpose.msra.mxu0 0
        %1391 = vmatpush.bf16.xpose.msra.mxu0 0
        %1392 = vmatpush.bf16.xpose.msra.mxu0 0
        %1393 = vmatpush.bf16.xpose.msra.mxu0 %v1384
        %1394 = vmatmul.bf16.gmra.mxu0 %v1381
        %v1395 = vpop.f32.mrf.mxu0
        %v1396 = vadd.f32 0.0, %v1395
        %v1397 = vpop.f32.mrf.mxu0
        %1398 = vdwg.mxu0
        %v1400 = vsel %vm1379, %v1372, 0
        %v1403 = vsel %vm1379, %v1376, 0
        %1405 = vmatpush.bf16.xpose.msra.mxu0 0
        %1406 = vmatpush.bf16.xpose.msra.mxu0 0
        %1407 = vmatpush.bf16.xpose.msra.mxu0 0
        %1408 = vmatpush.bf16.xpose.msra.mxu0 0
        %1409 = vmatpush.bf16.xpose.msra.mxu0 0
        %1410 = vmatpush.bf16.xpose.msra.mxu0 0
        %1411 = vmatpush.bf16.xpose.msra.mxu0 0
        %1412 = vmatpush.bf16.xpose.msra.mxu0 %v1403
        %1413 = vmatmul.bf16.gmra.mxu0 %v1400
        %v1414 = vpop.f32.mrf.mxu0
        %v1415 = vadd.f32 0.0, %v1414
        %v1416 = vpop.f32.mrf.mxu0
        %1417 = vdwg.mxu0
        %v1419 = vsel %vm1379, %v1373, 0
        %v1422 = vsel %vm1379, %v1377, 0
        %1424 = vmatpush.bf16.xpose.msra.mxu0 0
        %1425 = vmatpush.bf16.xpose.msra.mxu0 0
        %1426 = vmatpush.bf16.xpose.msra.mxu0 0
        %1427 = vmatpush.bf16.xpose.msra.mxu0 0
        %1428 = vmatpush.bf16.xpose.msra.mxu0 0
        %1429 = vmatpush.bf16.xpose.msra.mxu0 0
        %1430 = vmatpush.bf16.xpose.msra.mxu0 0
        %1431 = vmatpush.bf16.xpose.msra.mxu0 %v1422
        %1432 = vmatmul.bf16.gmra.mxu0 %v1419
        %v1433 = vpop.f32.mrf.mxu0
        %v1434 = vadd.f32 0.0, %v1433
        %v1435 = vpop.f32.mrf.mxu0
        %1436 = vdwg.mxu0
        %v1438 = vsel %vm1379, %v1374, 0
        %v1441 = vsel %vm1379, %v1378, 0
        %1443 = vmatpush.bf16.xpose.msra.mxu0 0
        %1444 = vmatpush.bf16.xpose.msra.mxu0 0
        %1445 = vmatpush.bf16.xpose.msra.mxu0 0
        %1446 = vmatpush.bf16.xpose.msra.mxu0 0
        %1447 = vmatpush.bf16.xpose.msra.mxu0 0
        %1448 = vmatpush.bf16.xpose.msra.mxu0 0
        %1449 = vmatpush.bf16.xpose.msra.mxu0 0
        %1450 = vmatpush.bf16.xpose.msra.mxu0 %v1441
        %1451 = vmatmul.bf16.gmra.mxu0 %v1438
        %v1452 = vpop.f32.mrf.mxu0
        %v1453 = vadd.f32 0.0, %v1452
        %v1454 = vpop.f32.mrf.mxu0
        %1455 = vdwg.mxu0
        %v1456 = vmul.f32 %v1396, 0.35355338
        %v1457 = vmul.f32 %v1415, 0.35355338
        %v1458 = vmul.f32 %v1434, 0.35355338
        %v1459 = vmul.f32 %v1453, 0.35355338
        %vm1460 = vcmp.eq.f32.partialorder %v924, 0.0
        %v1461 = vsel %vm1460, 1, 0
        %vm1462 = vcmp.eq.s32.totalorder %v1461, 1
        %v1463 = vsel %vm1462, -1e+09, %v1456
        %v1464 = vsel %vm1462, -1e+09, %v1457
        %v1465 = vsel %vm1462, -1e+09, %v1458
        %v1466 = vsel %vm1462, -1e+09, %v1459
        %v1467 = vsel %vm1379, %v1463, -inf
        %1468 = vmax.xlane.f32.xlu0 %v1467
        %v1469 = vpop.xlane.xlu0 %1468
        %v1470 = vsel %vm1379, %v1464, -inf
        %1471 = vmax.xlane.f32.xlu0 %v1470
        %v1472 = vpop.xlane.xlu0 %1471
        %v1473 = vsel %vm1379, %v1465, -inf
        %1474 = vmax.xlane.f32.xlu0 %v1473
        %v1475 = vpop.xlane.xlu0 %1474
        %v1476 = vsel %vm1379, %v1466, -inf
        %1477 = vmax.xlane.f32.xlu0 %v1476
        %v1478 = vpop.xlane.xlu0 %1477
        %v1479 = vsub.f32 %v1463, %v1469
        %v1480 = vsub.f32 %v1464, %v1472
        %v1481 = vsub.f32 %v1465, %v1475
        %v1482 = vsub.f32 %v1466, %v1478
        %v1483 = vmul.f32 %v1479, 1.442695
        %v1484 = vpow.pop %v1483
        %v1485 = vmul.f32 %v1480, 1.442695
        %v1486 = vpow.pop %v1485
        %v1487 = vmul.f32 %v1481, 1.442695
        %v1488 = vpow.pop %v1487
        %v1489 = vmul.f32 %v1482, 1.442695
        %v1490 = vpow.pop %v1489
        %v1491 = vsel %vm1379, %v1484, 0.0
        %1492 = vadd.xlane.f32.xlu0 %v1491
        %v1493 = vpop.xlane.xlu0 %1492
        %v1494 = vsel %vm1379, %v1486, 0.0
        %1495 = vadd.xlane.f32.xlu0 %v1494
        %v1496 = vpop.xlane.xlu0 %1495
        %v1497 = vsel %vm1379, %v1488, 0.0
        %1498 = vadd.xlane.f32.xlu0 %v1497
        %v1499 = vpop.xlane.xlu0 %1498
        %v1500 = vsel %vm1379, %v1490, 0.0
        %1501 = vadd.xlane.f32.xlu0 %v1500
        %v1502 = vpop.xlane.xlu0 %1501
        %v1503 = vrcp.pop %v1493
        %v1504 = vrcp.pop %v1496
        %v1505 = vrcp.pop %v1499
        %v1506 = vrcp.pop %v1502
        %v1507 = vmul.f32 %v1484, %v1503
        %v1508 = vmul.f32 %v1486, %v1504
        %v1509 = vmul.f32 %v1488, %v1505
        %v1510 = vmul.f32 %v1490, %v1506
        %v1511 = vpack.c.bf16 %v1507, %v1507
        %v1512 = vpack.c.bf16 %v1508, %v1508
        %v1513 = vpack.c.bf16 %v1509, %v1509
        %v1514 = vpack.c.bf16 %v1510, %v1510
        %v1515 = vpack.c.bf16 %v1293, %v1293
        %v1516 = vpack.c.bf16 %v1318, %v1318
        %v1517 = vpack.c.bf16 %v1343, %v1343
        %v1518 = vpack.c.bf16 %v1368, %v1368
        %v1520 = vsel %vm1379, %v1511, 0
        %vm1522 = vcmask 1043456
        %v1524 = vsel %vm1522, %v1515, 0
        %1526 = vmatpush.bf16.msra.mxu0 0
        %1527 = vmatpush.bf16.msra.mxu0 0
        %1528 = vmatpush.bf16.msra.mxu0 0
        %1529 = vmatpush.bf16.msra.mxu0 0
        %1530 = vmatpush.bf16.msra.mxu0 0
        %1531 = vmatpush.bf16.msra.mxu0 0
        %1532 = vmatpush.bf16.msra.mxu0 0
        %1533 = vmatpush.bf16.msra.mxu0 %v1524
        %1534 = vmatmul.bf16.gmra.mxu0 %v1520
        %v1535 = vpop.f32.mrf.mxu0
        %v1536 = vadd.f32 0.0, %v1535
        %v1537 = vpop.f32.mrf.mxu0
        %1538 = vdwg.mxu0
        %v1540 = vsel %vm1379, %v1512, 0
        %v1543 = vsel %vm1522, %v1516, 0
        %1545 = vmatpush.bf16.msra.mxu0 0
        %1546 = vmatpush.bf16.msra.mxu0 0
        %1547 = vmatpush.bf16.msra.mxu0 0
        %1548 = vmatpush.bf16.msra.mxu0 0
        %1549 = vmatpush.bf16.msra.mxu0 0
        %1550 = vmatpush.bf16.msra.mxu0 0
        %1551 = vmatpush.bf16.msra.mxu0 0
        %1552 = vmatpush.bf16.msra.mxu0 %v1543
        %1553 = vmatmul.bf16.gmra.mxu0 %v1540
        %v1554 = vpop.f32.mrf.mxu0
        %v1555 = vadd.f32 0.0, %v1554
        %v1556 = vpop.f32.mrf.mxu0
        %1557 = vdwg.mxu0
        %v1559 = vsel %vm1379, %v1513, 0
        %v1562 = vsel %vm1522, %v1517, 0
        %1564 = vmatpush.bf16.msra.mxu0 0
        %1565 = vmatpush.bf16.msra.mxu0 0
        %1566 = vmatpush.bf16.msra.mxu0 0
        %1567 = vmatpush.bf16.msra.mxu0 0
        %1568 = vmatpush.bf16.msra.mxu0 0
        %1569 = vmatpush.bf16.msra.mxu0 0
        %1570 = vmatpush.bf16.msra.mxu0 0
        %1571 = vmatpush.bf16.msra.mxu0 %v1562
        %1572 = vmatmul.bf16.gmra.mxu0 %v1559
        %v1573 = vpop.f32.mrf.mxu0
        %v1574 = vadd.f32 0.0, %v1573
        %v1575 = vpop.f32.mrf.mxu0
        %1576 = vdwg.mxu0
        %v1578 = vsel %vm1379, %v1514, 0
        %v1581 = vsel %vm1522, %v1518, 0
        %1583 = vmatpush.bf16.msra.mxu0 0
        %1584 = vmatpush.bf16.msra.mxu0 0
        %1585 = vmatpush.bf16.msra.mxu0 0
        %1586 = vmatpush.bf16.msra.mxu0 0
        %1587 = vmatpush.bf16.msra.mxu0 0
        %1588 = vmatpush.bf16.msra.mxu0 0
        %1589 = vmatpush.bf16.msra.mxu0 0
        %1590 = vmatpush.bf16.msra.mxu0 %v1581
        %1591 = vmatmul.bf16.gmra.mxu0 %v1578
        %v1592 = vpop.f32.mrf.mxu0
        %v1593 = vadd.f32 0.0, %v1592
        %v1594 = vpop.f32.mrf.mxu0
        %1595 = vdwg.mxu0
        %v1596 = vpack.c.bf16 %v1536, %v1536
        %v1597 = vpack.c.bf16 %v1555, %v1555
        %v1598 = vpack.c.bf16 %v1574, %v1574
        %v1599 = vpack.c.bf16 %v1593, %v1593
        %v1601 = vsel %vm1379, %v1596, 0
        %v1604 = vsel %vm1522, %v1026, 0
        %1606 = vmatpush.bf16.msra.mxu0 0
        %1607 = vmatpush.bf16.msra.mxu0 0
        %1608 = vmatpush.bf16.msra.mxu0 0
        %1609 = vmatpush.bf16.msra.mxu0 0
        %1610 = vmatpush.bf16.msra.mxu0 0
        %1611 = vmatpush.bf16.msra.mxu0 0
        %1612 = vmatpush.bf16.msra.mxu0 0
        %1613 = vmatpush.bf16.msra.mxu0 %v1604
        %1614 = vmatmul.bf16.gmra.mxu0 %v1601
        %v1615 = vpop.f32.mrf.mxu0
        %v1616 = vadd.f32 0.0, %v1615
        %v1617 = vpop.f32.mrf.mxu0
        %1618 = vdwg.mxu0
        %v1620 = vsel %vm1379, %v1597, 0
        %v1623 = vsel %vm1522, %v1027, 0
        %1625 = vmatpush.bf16.msra.mxu0 0
        %1626 = vmatpush.bf16.msra.mxu0 0
        %1627 = vmatpush.bf16.msra.mxu0 0
        %1628 = vmatpush.bf16.msra.mxu0 0
        %1629 = vmatpush.bf16.msra.mxu0 0
        %1630 = vmatpush.bf16.msra.mxu0 0
        %1631 = vmatpush.bf16.msra.mxu0 0
        %1632 = vmatpush.bf16.msra.mxu0 %v1623
        %1633 = vmatmul.bf16.gmra.mxu0 %v1620
        %v1634 = vpop.f32.mrf.mxu0
        %v1635 = vadd.f32 0.0, %v1634
        %v1636 = vpop.f32.mrf.mxu0
        %1637 = vdwg.mxu0
        %v1639 = vsel %vm1379, %v1598, 0
        %v1642 = vsel %vm1522, %v1028, 0
        %1644 = vmatpush.bf16.msra.mxu0 0
        %1645 = vmatpush.bf16.msra.mxu0 0
        %1646 = vmatpush.bf16.msra.mxu0 0
        %1647 = vmatpush.bf16.msra.mxu0 0
        %1648 = vmatpush.bf16.msra.mxu0 0
        %1649 = vmatpush.bf16.msra.mxu0 0
        %1650 = vmatpush.bf16.msra.mxu0 0
        %1651 = vmatpush.bf16.msra.mxu0 %v1642
        %1652 = vmatmul.bf16.gmra.mxu0 %v1639
        %v1653 = vpop.f32.mrf.mxu0
        %v1654 = vadd.f32 0.0, %v1653
        %v1655 = vpop.f32.mrf.mxu0
        %1656 = vdwg.mxu0
        %v1658 = vsel %vm1379, %v1599, 0
        %v1661 = vsel %vm1522, %v1029, 0
        %1663 = vmatpush.bf16.msra.mxu0 0
        %1664 = vmatpush.bf16.msra.mxu0 0
        %1665 = vmatpush.bf16.msra.mxu0 0
        %1666 = vmatpush.bf16.msra.mxu0 0
        %1667 = vmatpush.bf16.msra.mxu0 0
        %1668 = vmatpush.bf16.msra.mxu0 0
        %1669 = vmatpush.bf16.msra.mxu0 0
        %1670 = vmatpush.bf16.msra.mxu0 %v1661
        %1671 = vmatmul.bf16.gmra.mxu0 %v1658
        %v1672 = vpop.f32.mrf.mxu0
        %v1673 = vadd.f32 0.0, %v1672
        %v1674 = vpop.f32.mrf.mxu0
        %1675 = vdwg.mxu0
        %v1676 = vsel %vm929, %v1616, 0.0
        %v1677 = vsel %vm929, %v1635, 0.0
        %v1678 = vadd.f32 %v1676, %v1677
        %v1679 = vsel %vm929, %v1654, 0.0
        %v1680 = vadd.f32 %v1678, %v1679
        %v1681 = vsel %vm929, %v1673, 0.0
        %v1682 = vadd.f32 %v1680, %v1681
        %v1684 = vperm.slane %v1030, 0
        %v1686 = vadd.f32 %v1682, %v1684
        %v1687 = vadd.f32 %v921, %v1686
        %v1688 = vsel %vm929, %v1687, 0.0
        %1689 = vadd.xlane.f32.xlu0 %v1688
        %v1690 = vpop.xlane.xlu0 %1689
        %v1691 = vmul.f32 %v1690, %v939
        %v1692 = vsub.f32 %v1687, %v1691
        %v1693 = vmul.f32 %v1692, %v1692
        %v1694 = vsel %vm929, %v1693, 0.0
        %1695 = vadd.xlane.f32.xlu0 %v1694
        %v1696 = vpop.xlane.xlu0 %1695
        %v1697 = vmul.f32 %v1696, 0.032258064
        %v1698 = vrsqrt.pop %v1697
        %v1699 = vmul.f32 %v1698, %v1697
        %v1700 = vmul.f32 %v1699, %v1698
        %v1701 = vmul.f32 0.5, %v1700
        %v1702 = vsub.f32 1.5, %v1701
        %v1703 = vmul.f32 %v1698, %v1702
        %v1704 = vmul.f32 %v1697, %v1703
        %vm1705 = vcmp.eq.f32.partialorder %v1697, inf
        %v1706 = vsel %vm1705, %v1697, %v1704
        %vm1707 = vcmp.eq.f32.partialorder %v1697, 0.0
        %v1708 = vand.u32 %v1697, 2147483648
        %v1709 = vsel %vm1707, %v1708, %v1706
        %v1710 = vadd.f32 %v1709, 1e-06
        %v1711 = vrcp.pop %v1710
        %v1712 = vmul.f32 %v1692, %v1711
        %v1713 = vperm.slane %v927, 1
        %v1714 = vmul.f32 %v1713, %v1712
        %v1715 = vperm.slane %v928, 1
        %v1716 = vadd.f32 %v1714, %v1715
        %v1717 = vld [vmem:[%s16] sm:$0xf]
        %v1718 = vld [vmem:[%s16 + $0x4] sm:$0xf]
        %v1719 = vld [vmem:[%s16 + $0x8] sm:$0xf]
        %v1720 = vld [vmem:[%s16 + $0xc] sm:$0xf]
        %v1721 = vld [vmem:[%s16 + $0x10] sm:$0xf]
        %v1722 = vld [vmem:[%s16 + $0x14] sm:$0xf]
        %v1723 = vld [vmem:[%s16 + $0x18] sm:$0xf]
        %v1724 = vld [vmem:[%s16 + $0x1c] sm:$0xf]
        %v1725 = vld [vmem:[%s16 + $0x20] sm:$0xf]
        %v1726 = vld [vmem:[%s16 + $0x24] sm:$0xf]
        %v1727 = vld [vmem:[%s16 + $0x28] sm:$0xf]
        %v1728 = vld [vmem:[%s16 + $0x2c] sm:$0xf]
        %v1729 = vld [vmem:[%s16 + $0x30] sm:$0xf]
        %v1730 = vld [vmem:[%s16 + $0x34] sm:$0xf]
        %v1731 = vld [vmem:[%s16 + $0x38] sm:$0xf]
        %v1732 = vld [vmem:[%s16 + $0x3c] sm:$0xf]
        %v1733 = vld [vmem:[%s17] sm:$0x1]
        %v1734 = vld [vmem:[%s17 + $0x1] sm:$0x1]
        %v1735 = vld [vmem:[%s17 + $0x2] sm:$0x1]
        %v1736 = vld [vmem:[%s17 + $0x3] sm:$0x1]
        %v1737 = vld [vmem:[%s18] sm:$0xf]
        %v1738 = vld [vmem:[%s18 + $0x4] sm:$0xf]
        %v1739 = vld [vmem:[%s18 + $0x8] sm:$0xf]
        %v1740 = vld [vmem:[%s18 + $0xc] sm:$0xf]
        %v1741 = vld [vmem:[%s18 + $0x10] sm:$0xf]
        %v1742 = vld [vmem:[%s18 + $0x14] sm:$0xf]
        %v1743 = vld [vmem:[%s18 + $0x18] sm:$0xf]
        %v1744 = vld [vmem:[%s18 + $0x1c] sm:$0xf]
        %v1745 = vld [vmem:[%s18 + $0x20] sm:$0xf]
        %v1746 = vld [vmem:[%s18 + $0x24] sm:$0xf]
        %v1747 = vld [vmem:[%s18 + $0x28] sm:$0xf]
        %v1748 = vld [vmem:[%s18 + $0x2c] sm:$0xf]
        %v1749 = vld [vmem:[%s18 + $0x30] sm:$0xf]
        %v1750 = vld [vmem:[%s18 + $0x34] sm:$0xf]
        %v1751 = vld [vmem:[%s18 + $0x38] sm:$0xf]
        %v1752 = vld [vmem:[%s18 + $0x3c] sm:$0xf]
        %v1753 = vld [vmem:[%s19] sm:$0x1]
        %v1754 = vld [vmem:[%s19 + $0x1] sm:$0x1]
        %v1755 = vld [vmem:[%s19 + $0x2] sm:$0x1]
        %v1756 = vld [vmem:[%s19 + $0x3] sm:$0x1]
        %v1757 = vld [vmem:[%s20] sm:$0xf]
        %v1758 = vld [vmem:[%s20 + $0x4] sm:$0xf]
        %v1759 = vld [vmem:[%s20 + $0x8] sm:$0xf]
        %v1760 = vld [vmem:[%s20 + $0xc] sm:$0xf]
        %v1761 = vld [vmem:[%s20 + $0x10] sm:$0xf]
        %v1762 = vld [vmem:[%s20 + $0x14] sm:$0xf]
        %v1763 = vld [vmem:[%s20 + $0x18] sm:$0xf]
        %v1764 = vld [vmem:[%s20 + $0x1c] sm:$0xf]
        %v1765 = vld [vmem:[%s20 + $0x20] sm:$0xf]
        %v1766 = vld [vmem:[%s20 + $0x24] sm:$0xf]
        %v1767 = vld [vmem:[%s20 + $0x28] sm:$0xf]
        %v1768 = vld [vmem:[%s20 + $0x2c] sm:$0xf]
        %v1769 = vld [vmem:[%s20 + $0x30] sm:$0xf]
        %v1770 = vld [vmem:[%s20 + $0x34] sm:$0xf]
        %v1771 = vld [vmem:[%s20 + $0x38] sm:$0xf]
        %v1772 = vld [vmem:[%s20 + $0x3c] sm:$0xf]
        %v1773 = vld [vmem:[%s21] sm:$0x1]
        %v1774 = vld [vmem:[%s21 + $0x1] sm:$0x1]
        %v1775 = vld [vmem:[%s21 + $0x2] sm:$0x1]
        %v1776 = vld [vmem:[%s21 + $0x3] sm:$0x1]
        %v1777 = vld [vmem:[%s22] sm:$0xf]
        %v1778 = vld [vmem:[%s22 + $0x4] sm:$0xf]
        %v1779 = vld [vmem:[%s22 + $0x8] sm:$0xf]
        %v1780 = vld [vmem:[%s22 + $0xc] sm:$0xf]
        %v1781 = vld [vmem:[%s23] sm:$0x1]
        %v1782 = vpack.c.bf16 %v1716, %v1716
        %v1783 = vpack.c.bf16 %v922, %v922
        %v1788 = vperm.slane %v1733, 0
        %v1789 = vperm.slane %v1734, 0
        %v1790 = vperm.slane %v1735, 0
        %v1791 = vperm.slane %v1736, 0
        %v1800 = vunpack.c.l.b16 %v1717
        %v1801 = vunpack.c.l.b16 %v1718
        %v1802 = vunpack.c.l.b16 %v1719
        %v1803 = vunpack.c.l.b16 %v1720
        %v1804 = vpack.c.b16 %v1801, %v1800
        %v1805 = vpack.c.b16 %v1803, %v1802
        %v1809 = vsel %vm929, %v1782, 0
        %1811 = vmatpush.bf16.msra.mxu0 0
        %1812 = vmatpush.bf16.msra.mxu0 0
        %1813 = vmatpush.bf16.msra.mxu0 0
        %1814 = vmatpush.bf16.msra.mxu0 0
        %1815 = vmatpush.bf16.msra.mxu0 0
        %1816 = vmatpush.bf16.msra.mxu0 0
        %1817 = vmatpush.bf16.msra.mxu0 %v1805
        %1818 = vmatpush.bf16.msra.mxu0 %v1804
        %1819 = vmatmul.bf16.gmra.mxu0 %v1809
        %v1820 = vpop.f32.mrf.mxu0
        %v1821 = vadd.f32 %v1788, %v1820
        %v1822 = vpop.f32.mrf.mxu0
        %1823 = vdwg.mxu0
        %v1828 = vunpack.c.l.b16 %v1721
        %v1829 = vunpack.c.l.b16 %v1722
        %v1830 = vunpack.c.l.b16 %v1723
        %v1831 = vunpack.c.l.b16 %v1724
        %v1832 = vpack.c.b16 %v1829, %v1828
        %v1833 = vpack.c.b16 %v1831, %v1830
        %1836 = vmatpush.bf16.msra.mxu0 0
        %1837 = vmatpush.bf16.msra.mxu0 0
        %1838 = vmatpush.bf16.msra.mxu0 0
        %1839 = vmatpush.bf16.msra.mxu0 0
        %1840 = vmatpush.bf16.msra.mxu0 0
        %1841 = vmatpush.bf16.msra.mxu0 0
        %1842 = vmatpush.bf16.msra.mxu0 %v1833
        %1843 = vmatpush.bf16.msra.mxu0 %v1832
        %1844 = vmatmul.bf16.gmra.mxu0 %v1809
        %v1845 = vpop.f32.mrf.mxu0
        %v1846 = vadd.f32 %v1789, %v1845
        %v1847 = vpop.f32.mrf.mxu0
        %1848 = vdwg.mxu0
        %v1853 = vunpack.c.l.b16 %v1725
        %v1854 = vunpack.c.l.b16 %v1726
        %v1855 = vunpack.c.l.b16 %v1727
        %v1856 = vunpack.c.l.b16 %v1728
        %v1857 = vpack.c.b16 %v1854, %v1853
        %v1858 = vpack.c.b16 %v1856, %v1855
        %1861 = vmatpush.bf16.msra.mxu0 0
        %1862 = vmatpush.bf16.msra.mxu0 0
        %1863 = vmatpush.bf16.msra.mxu0 0
        %1864 = vmatpush.bf16.msra.mxu0 0
        %1865 = vmatpush.bf16.msra.mxu0 0
        %1866 = vmatpush.bf16.msra.mxu0 0
        %1867 = vmatpush.bf16.msra.mxu0 %v1858
        %1868 = vmatpush.bf16.msra.mxu0 %v1857
        %1869 = vmatmul.bf16.gmra.mxu0 %v1809
        %v1870 = vpop.f32.mrf.mxu0
        %v1871 = vadd.f32 %v1790, %v1870
        %v1872 = vpop.f32.mrf.mxu0
        %1873 = vdwg.mxu0
        %v1878 = vunpack.c.l.b16 %v1729
        %v1879 = vunpack.c.l.b16 %v1730
        %v1880 = vunpack.c.l.b16 %v1731
        %v1881 = vunpack.c.l.b16 %v1732
        %v1882 = vpack.c.b16 %v1879, %v1878
        %v1883 = vpack.c.b16 %v1881, %v1880
        %1886 = vmatpush.bf16.msra.mxu0 0
        %1887 = vmatpush.bf16.msra.mxu0 0
        %1888 = vmatpush.bf16.msra.mxu0 0
        %1889 = vmatpush.bf16.msra.mxu0 0
        %1890 = vmatpush.bf16.msra.mxu0 0
        %1891 = vmatpush.bf16.msra.mxu0 0
        %1892 = vmatpush.bf16.msra.mxu0 %v1883
        %1893 = vmatpush.bf16.msra.mxu0 %v1882
        %1894 = vmatmul.bf16.gmra.mxu0 %v1809
        %v1895 = vpop.f32.mrf.mxu0
        %v1896 = vadd.f32 %v1791, %v1895
        %v1897 = vpop.f32.mrf.mxu0
        %1898 = vdwg.mxu0
        %v1903 = vperm.slane %v1753, 0
        %v1904 = vperm.slane %v1754, 0
        %v1905 = vperm.slane %v1755, 0
        %v1906 = vperm.slane %v1756, 0
        %v1915 = vunpack.c.l.b16 %v1737
        %v1916 = vunpack.c.l.b16 %v1738
        %v1917 = vunpack.c.l.b16 %v1739
        %v1918 = vunpack.c.l.b16 %v1740
        %v1919 = vpack.c.b16 %v1916, %v1915
        %v1920 = vpack.c.b16 %v1918, %v1917
        %v1924 = vsel %vm929, %v1783, 0
        %1926 = vmatpush.bf16.msra.mxu0 0
        %1927 = vmatpush.bf16.msra.mxu0 0
        %1928 = vmatpush.bf16.msra.mxu0 0
        %1929 = vmatpush.bf16.msra.mxu0 0
        %1930 = vmatpush.bf16.msra.mxu0 0
        %1931 = vmatpush.bf16.msra.mxu0 0
        %1932 = vmatpush.bf16.msra.mxu0 %v1920
        %1933 = vmatpush.bf16.msra.mxu0 %v1919
        %1934 = vmatmul.bf16.gmra.mxu0 %v1924
        %v1935 = vpop.f32.mrf.mxu0
        %v1936 = vadd.f32 %v1903, %v1935
        %v1937 = vpop.f32.mrf.mxu0
        %1938 = vdwg.mxu0
        %v1943 = vunpack.c.l.b16 %v1741
        %v1944 = vunpack.c.l.b16 %v1742
        %v1945 = vunpack.c.l.b16 %v1743
        %v1946 = vunpack.c.l.b16 %v1744
        %v1947 = vpack.c.b16 %v1944, %v1943
        %v1948 = vpack.c.b16 %v1946, %v1945
        %1951 = vmatpush.bf16.msra.mxu0 0
        %1952 = vmatpush.bf16.msra.mxu0 0
        %1953 = vmatpush.bf16.msra.mxu0 0
        %1954 = vmatpush.bf16.msra.mxu0 0
        %1955 = vmatpush.bf16.msra.mxu0 0
        %1956 = vmatpush.bf16.msra.mxu0 0
        %1957 = vmatpush.bf16.msra.mxu0 %v1948
        %1958 = vmatpush.bf16.msra.mxu0 %v1947
        %1959 = vmatmul.bf16.gmra.mxu0 %v1924
        %v1960 = vpop.f32.mrf.mxu0
        %v1961 = vadd.f32 %v1904, %v1960
        %v1962 = vpop.f32.mrf.mxu0
        %1963 = vdwg.mxu0
        %v1968 = vunpack.c.l.b16 %v1745
        %v1969 = vunpack.c.l.b16 %v1746
        %v1970 = vunpack.c.l.b16 %v1747
        %v1971 = vunpack.c.l.b16 %v1748
        %v1972 = vpack.c.b16 %v1969, %v1968
        %v1973 = vpack.c.b16 %v1971, %v1970
        %1976 = vmatpush.bf16.msra.mxu0 0
        %1977 = vmatpush.bf16.msra.mxu0 0
        %1978 = vmatpush.bf16.msra.mxu0 0
        %1979 = vmatpush.bf16.msra.mxu0 0
        %1980 = vmatpush.bf16.msra.mxu0 0
        %1981 = vmatpush.bf16.msra.mxu0 0
        %1982 = vmatpush.bf16.msra.mxu0 %v1973
        %1983 = vmatpush.bf16.msra.mxu0 %v1972
        %1984 = vmatmul.bf16.gmra.mxu0 %v1924
        %v1985 = vpop.f32.mrf.mxu0
        %v1986 = vadd.f32 %v1905, %v1985
        %v1987 = vpop.f32.mrf.mxu0
        %1988 = vdwg.mxu0
        %v1993 = vunpack.c.l.b16 %v1749
        %v1994 = vunpack.c.l.b16 %v1750
        %v1995 = vunpack.c.l.b16 %v1751
        %v1996 = vunpack.c.l.b16 %v1752
        %v1997 = vpack.c.b16 %v1994, %v1993
        %v1998 = vpack.c.b16 %v1996, %v1995
        %2001 = vmatpush.bf16.msra.mxu0 0
        %2002 = vmatpush.bf16.msra.mxu0 0
        %2003 = vmatpush.bf16.msra.mxu0 0
        %2004 = vmatpush.bf16.msra.mxu0 0
        %2005 = vmatpush.bf16.msra.mxu0 0
        %2006 = vmatpush.bf16.msra.mxu0 0
        %2007 = vmatpush.bf16.msra.mxu0 %v1998
        %2008 = vmatpush.bf16.msra.mxu0 %v1997
        %2009 = vmatmul.bf16.gmra.mxu0 %v1924
        %v2010 = vpop.f32.mrf.mxu0
        %v2011 = vadd.f32 %v1906, %v2010
        %v2012 = vpop.f32.mrf.mxu0
        %2013 = vdwg.mxu0
        %v2018 = vperm.slane %v1773, 0
        %v2019 = vperm.slane %v1774, 0
        %v2020 = vperm.slane %v1775, 0
        %v2021 = vperm.slane %v1776, 0
        %v2030 = vunpack.c.l.b16 %v1757
        %v2031 = vunpack.c.l.b16 %v1758
        %v2032 = vunpack.c.l.b16 %v1759
        %v2033 = vunpack.c.l.b16 %v1760
        %v2034 = vpack.c.b16 %v2031, %v2030
        %v2035 = vpack.c.b16 %v2033, %v2032
        %2038 = vmatpush.bf16.msra.mxu0 0
        %2039 = vmatpush.bf16.msra.mxu0 0
        %2040 = vmatpush.bf16.msra.mxu0 0
        %2041 = vmatpush.bf16.msra.mxu0 0
        %2042 = vmatpush.bf16.msra.mxu0 0
        %2043 = vmatpush.bf16.msra.mxu0 0
        %2044 = vmatpush.bf16.msra.mxu0 %v2035
        %2045 = vmatpush.bf16.msra.mxu0 %v2034
        %2046 = vmatmul.bf16.gmra.mxu0 %v1924
        %v2047 = vpop.f32.mrf.mxu0
        %v2048 = vadd.f32 %v2018, %v2047
        %v2049 = vpop.f32.mrf.mxu0
        %2050 = vdwg.mxu0
        %v2055 = vunpack.c.l.b16 %v1761
        %v2056 = vunpack.c.l.b16 %v1762
        %v2057 = vunpack.c.l.b16 %v1763
        %v2058 = vunpack.c.l.b16 %v1764
        %v2059 = vpack.c.b16 %v2056, %v2055
        %v2060 = vpack.c.b16 %v2058, %v2057
        %2063 = vmatpush.bf16.msra.mxu0 0
        %2064 = vmatpush.bf16.msra.mxu0 0
        %2065 = vmatpush.bf16.msra.mxu0 0
        %2066 = vmatpush.bf16.msra.mxu0 0
        %2067 = vmatpush.bf16.msra.mxu0 0
        %2068 = vmatpush.bf16.msra.mxu0 0
        %2069 = vmatpush.bf16.msra.mxu0 %v2060
        %2070 = vmatpush.bf16.msra.mxu0 %v2059
        %2071 = vmatmul.bf16.gmra.mxu0 %v1924
        %v2072 = vpop.f32.mrf.mxu0
        %v2073 = vadd.f32 %v2019, %v2072
        %v2074 = vpop.f32.mrf.mxu0
        %2075 = vdwg.mxu0
        %v2080 = vunpack.c.l.b16 %v1765
        %v2081 = vunpack.c.l.b16 %v1766
        %v2082 = vunpack.c.l.b16 %v1767
        %v2083 = vunpack.c.l.b16 %v1768
        %v2084 = vpack.c.b16 %v2081, %v2080
        %v2085 = vpack.c.b16 %v2083, %v2082
        %2088 = vmatpush.bf16.msra.mxu0 0
        %2089 = vmatpush.bf16.msra.mxu0 0
        %2090 = vmatpush.bf16.msra.mxu0 0
        %2091 = vmatpush.bf16.msra.mxu0 0
        %2092 = vmatpush.bf16.msra.mxu0 0
        %2093 = vmatpush.bf16.msra.mxu0 0
        %2094 = vmatpush.bf16.msra.mxu0 %v2085
        %2095 = vmatpush.bf16.msra.mxu0 %v2084
        %2096 = vmatmul.bf16.gmra.mxu0 %v1924
        %v2097 = vpop.f32.mrf.mxu0
        %v2098 = vadd.f32 %v2020, %v2097
        %v2099 = vpop.f32.mrf.mxu0
        %2100 = vdwg.mxu0
        %v2105 = vunpack.c.l.b16 %v1769
        %v2106 = vunpack.c.l.b16 %v1770
        %v2107 = vunpack.c.l.b16 %v1771
        %v2108 = vunpack.c.l.b16 %v1772
        %v2109 = vpack.c.b16 %v2106, %v2105
        %v2110 = vpack.c.b16 %v2108, %v2107
        %2113 = vmatpush.bf16.msra.mxu0 0
        %2114 = vmatpush.bf16.msra.mxu0 0
        %2115 = vmatpush.bf16.msra.mxu0 0
        %2116 = vmatpush.bf16.msra.mxu0 0
        %2117 = vmatpush.bf16.msra.mxu0 0
        %2118 = vmatpush.bf16.msra.mxu0 0
        %2119 = vmatpush.bf16.msra.mxu0 %v2110
        %2120 = vmatpush.bf16.msra.mxu0 %v2109
        %2121 = vmatmul.bf16.gmra.mxu0 %v1924
        %v2122 = vpop.f32.mrf.mxu0
        %v2123 = vadd.f32 %v2021, %v2122
        %v2124 = vpop.f32.mrf.mxu0
        %2125 = vdwg.mxu0
        %v2126 = vpack.c.bf16 %v1821, %v1821
        %v2127 = vpack.c.bf16 %v1846, %v1846
        %v2128 = vpack.c.bf16 %v1871, %v1871
        %v2129 = vpack.c.bf16 %v1896, %v1896
        %v2130 = vpack.c.bf16 %v1936, %v1936
        %v2131 = vpack.c.bf16 %v1961, %v1961
        %v2132 = vpack.c.bf16 %v1986, %v1986
        %v2133 = vpack.c.bf16 %v2011, %v2011
        %v2135 = vsel %vm1379, %v2126, 0
        %v2138 = vsel %vm1379, %v2130, 0
        %2140 = vmatpush.bf16.xpose.msra.mxu0 0
        %2141 = vmatpush.bf16.xpose.msra.mxu0 0
        %2142 = vmatpush.bf16.xpose.msra.mxu0 0
        %2143 = vmatpush.bf16.xpose.msra.mxu0 0
        %2144 = vmatpush.bf16.xpose.msra.mxu0 0
        %2145 = vmatpush.bf16.xpose.msra.mxu0 0
        %2146 = vmatpush.bf16.xpose.msra.mxu0 0
        %2147 = vmatpush.bf16.xpose.msra.mxu0 %v2138
        %2148 = vmatmul.bf16.gmra.mxu0 %v2135
        %v2149 = vpop.f32.mrf.mxu0
        %v2150 = vadd.f32 0.0, %v2149
        %v2151 = vpop.f32.mrf.mxu0
        %2152 = vdwg.mxu0
        %v2154 = vsel %vm1379, %v2127, 0
        %v2157 = vsel %vm1379, %v2131, 0
        %2159 = vmatpush.bf16.xpose.msra.mxu0 0
        %2160 = vmatpush.bf16.xpose.msra.mxu0 0
        %2161 = vmatpush.bf16.xpose.msra.mxu0 0
        %2162 = vmatpush.bf16.xpose.msra.mxu0 0
        %2163 = vmatpush.bf16.xpose.msra.mxu0 0
        %2164 = vmatpush.bf16.xpose.msra.mxu0 0
        %2165 = vmatpush.bf16.xpose.msra.mxu0 0
        %2166 = vmatpush.bf16.xpose.msra.mxu0 %v2157
        %2167 = vmatmul.bf16.gmra.mxu0 %v2154
        %v2168 = vpop.f32.mrf.mxu0
        %v2169 = vadd.f32 0.0, %v2168
        %v2170 = vpop.f32.mrf.mxu0
        %2171 = vdwg.mxu0
        %v2173 = vsel %vm1379, %v2128, 0
        %v2176 = vsel %vm1379, %v2132, 0
        %2178 = vmatpush.bf16.xpose.msra.mxu0 0
        %2179 = vmatpush.bf16.xpose.msra.mxu0 0
        %2180 = vmatpush.bf16.xpose.msra.mxu0 0
        %2181 = vmatpush.bf16.xpose.msra.mxu0 0
        %2182 = vmatpush.bf16.xpose.msra.mxu0 0
        %2183 = vmatpush.bf16.xpose.msra.mxu0 0
        %2184 = vmatpush.bf16.xpose.msra.mxu0 0
        %2185 = vmatpush.bf16.xpose.msra.mxu0 %v2176
        %2186 = vmatmul.bf16.gmra.mxu0 %v2173
        %v2187 = vpop.f32.mrf.mxu0
        %v2188 = vadd.f32 0.0, %v2187
        %v2189 = vpop.f32.mrf.mxu0
        %2190 = vdwg.mxu0
        %v2192 = vsel %vm1379, %v2129, 0
        %v2195 = vsel %vm1379, %v2133, 0
        %2197 = vmatpush.bf16.xpose.msra.mxu0 0
        %2198 = vmatpush.bf16.xpose.msra.mxu0 0
        %2199 = vmatpush.bf16.xpose.msra.mxu0 0
        %2200 = vmatpush.bf16.xpose.msra.mxu0 0
        %2201 = vmatpush.bf16.xpose.msra.mxu0 0
        %2202 = vmatpush.bf16.xpose.msra.mxu0 0
        %2203 = vmatpush.bf16.xpose.msra.mxu0 0
        %2204 = vmatpush.bf16.xpose.msra.mxu0 %v2195
        %2205 = vmatmul.bf16.gmra.mxu0 %v2192
        %v2206 = vpop.f32.mrf.mxu0
        %v2207 = vadd.f32 0.0, %v2206
        %v2208 = vpop.f32.mrf.mxu0
        %2209 = vdwg.mxu0
        %v2210 = vmul.f32 %v2150, 0.35355338
        %v2211 = vmul.f32 %v2169, 0.35355338
        %v2212 = vmul.f32 %v2188, 0.35355338
        %v2213 = vmul.f32 %v2207, 0.35355338
        %vm2214 = vcmp.eq.f32.partialorder %v925, 0.0
        %v2215 = vsel %vm2214, 1, 0
        %v2216 = vperm.slane %v2215, 0
        %vm2217 = vcmp.eq.s32.totalorder %v2216, 1
        %v2218 = vsel %vm2217, -1e+09, %v2210
        %v2219 = vsel %vm2217, -1e+09, %v2211
        %v2220 = vsel %vm2217, -1e+09, %v2212
        %v2221 = vsel %vm2217, -1e+09, %v2213
        %v2222 = vsel %vm1379, %v2218, -inf
        %2223 = vmax.xlane.f32.xlu0 %v2222
        %v2224 = vpop.xlane.xlu0 %2223
        %v2225 = vsel %vm1379, %v2219, -inf
        %2226 = vmax.xlane.f32.xlu0 %v2225
        %v2227 = vpop.xlane.xlu0 %2226
        %v2228 = vsel %vm1379, %v2220, -inf
        %2229 = vmax.xlane.f32.xlu0 %v2228
        %v2230 = vpop.xlane.xlu0 %2229
        %v2231 = vsel %vm1379, %v2221, -inf
        %2232 = vmax.xlane.f32.xlu0 %v2231
        %v2233 = vpop.xlane.xlu0 %2232
        %v2234 = vsub.f32 %v2218, %v2224
        %v2235 = vsub.f32 %v2219, %v2227
        %v2236 = vsub.f32 %v2220, %v2230
        %v2237 = vsub.f32 %v2221, %v2233
        %v2238 = vmul.f32 %v2234, 1.442695
        %v2239 = vpow.pop %v2238
        %v2240 = vmul.f32 %v2235, 1.442695
        %v2241 = vpow.pop %v2240
        %v2242 = vmul.f32 %v2236, 1.442695
        %v2243 = vpow.pop %v2242
        %v2244 = vmul.f32 %v2237, 1.442695
        %v2245 = vpow.pop %v2244
        %v2246 = vsel %vm1379, %v2239, 0.0
        %2247 = vadd.xlane.f32.xlu0 %v2246
        %v2248 = vpop.xlane.xlu0 %2247
        %v2249 = vsel %vm1379, %v2241, 0.0
        %2250 = vadd.xlane.f32.xlu0 %v2249
        %v2251 = vpop.xlane.xlu0 %2250
        %v2252 = vsel %vm1379, %v2243, 0.0
        %2253 = vadd.xlane.f32.xlu0 %v2252
        %v2254 = vpop.xlane.xlu0 %2253
        %v2255 = vsel %vm1379, %v2245, 0.0
        %2256 = vadd.xlane.f32.xlu0 %v2255
        %v2257 = vpop.xlane.xlu0 %2256
        %v2258 = vrcp.pop %v2248
        %v2259 = vrcp.pop %v2251
        %v2260 = vrcp.pop %v2254
        %v2261 = vrcp.pop %v2257
        %v2262 = vmul.f32 %v2239, %v2258
        %v2263 = vmul.f32 %v2241, %v2259
        %v2264 = vmul.f32 %v2243, %v2260
        %v2265 = vmul.f32 %v2245, %v2261
        %v2266 = vpack.c.bf16 %v2262, %v2262
        %v2267 = vpack.c.bf16 %v2263, %v2263
        %v2268 = vpack.c.bf16 %v2264, %v2264
        %v2269 = vpack.c.bf16 %v2265, %v2265
        %v2270 = vpack.c.bf16 %v2048, %v2048
        %v2271 = vpack.c.bf16 %v2073, %v2073
        %v2272 = vpack.c.bf16 %v2098, %v2098
        %v2273 = vpack.c.bf16 %v2123, %v2123
        %v2275 = vsel %vm1379, %v2266, 0
        %v2278 = vsel %vm1522, %v2270, 0
        %2280 = vmatpush.bf16.msra.mxu0 0
        %2281 = vmatpush.bf16.msra.mxu0 0
        %2282 = vmatpush.bf16.msra.mxu0 0
        %2283 = vmatpush.bf16.msra.mxu0 0
        %2284 = vmatpush.bf16.msra.mxu0 0
        %2285 = vmatpush.bf16.msra.mxu0 0
        %2286 = vmatpush.bf16.msra.mxu0 0
        %2287 = vmatpush.bf16.msra.mxu0 %v2278
        %2288 = vmatmul.bf16.gmra.mxu0 %v2275
        %v2289 = vpop.f32.mrf.mxu0
        %v2290 = vadd.f32 0.0, %v2289
        %v2291 = vpop.f32.mrf.mxu0
        %2292 = vdwg.mxu0
        %v2294 = vsel %vm1379, %v2267, 0
        %v2297 = vsel %vm1522, %v2271, 0
        %2299 = vmatpush.bf16.msra.mxu0 0
        %2300 = vmatpush.bf16.msra.mxu0 0
        %2301 = vmatpush.bf16.msra.mxu0 0
        %2302 = vmatpush.bf16.msra.mxu0 0
        %2303 = vmatpush.bf16.msra.mxu0 0
        %2304 = vmatpush.bf16.msra.mxu0 0
        %2305 = vmatpush.bf16.msra.mxu0 0
        %2306 = vmatpush.bf16.msra.mxu0 %v2297
        %2307 = vmatmul.bf16.gmra.mxu0 %v2294
        %v2308 = vpop.f32.mrf.mxu0
        %v2309 = vadd.f32 0.0, %v2308
        %v2310 = vpop.f32.mrf.mxu0
        %2311 = vdwg.mxu0
        %v2313 = vsel %vm1379, %v2268, 0
        %v2316 = vsel %vm1522, %v2272, 0
        %2318 = vmatpush.bf16.msra.mxu0 0
        %2319 = vmatpush.bf16.msra.mxu0 0
        %2320 = vmatpush.bf16.msra.mxu0 0
        %2321 = vmatpush.bf16.msra.mxu0 0
        %2322 = vmatpush.bf16.msra.mxu0 0
        %2323 = vmatpush.bf16.msra.mxu0 0
        %2324 = vmatpush.bf16.msra.mxu0 0
        %2325 = vmatpush.bf16.msra.mxu0 %v2316
        %2326 = vmatmul.bf16.gmra.mxu0 %v2313
        %v2327 = vpop.f32.mrf.mxu0
        %v2328 = vadd.f32 0.0, %v2327
        %v2329 = vpop.f32.mrf.mxu0
        %2330 = vdwg.mxu0
        %v2332 = vsel %vm1379, %v2269, 0
        %v2335 = vsel %vm1522, %v2273, 0
        %2337 = vmatpush.bf16.msra.mxu0 0
        %2338 = vmatpush.bf16.msra.mxu0 0
        %2339 = vmatpush.bf16.msra.mxu0 0
        %2340 = vmatpush.bf16.msra.mxu0 0
        %2341 = vmatpush.bf16.msra.mxu0 0
        %2342 = vmatpush.bf16.msra.mxu0 0
        %2343 = vmatpush.bf16.msra.mxu0 0
        %2344 = vmatpush.bf16.msra.mxu0 %v2335
        %2345 = vmatmul.bf16.gmra.mxu0 %v2332
        %v2346 = vpop.f32.mrf.mxu0
        %v2347 = vadd.f32 0.0, %v2346
        %v2348 = vpop.f32.mrf.mxu0
        %2349 = vdwg.mxu0
        %v2350 = vpack.c.bf16 %v2290, %v2290
        %v2351 = vpack.c.bf16 %v2309, %v2309
        %v2352 = vpack.c.bf16 %v2328, %v2328
        %v2353 = vpack.c.bf16 %v2347, %v2347
        %v2355 = vsel %vm1379, %v2350, 0
        %v2358 = vsel %vm1522, %v1777, 0
        %2360 = vmatpush.bf16.msra.mxu0 0
        %2361 = vmatpush.bf16.msra.mxu0 0
        %2362 = vmatpush.bf16.msra.mxu0 0
        %2363 = vmatpush.bf16.msra.mxu0 0
        %2364 = vmatpush.bf16.msra.mxu0 0
        %2365 = vmatpush.bf16.msra.mxu0 0
        %2366 = vmatpush.bf16.msra.mxu0 0
        %2367 = vmatpush.bf16.msra.mxu0 %v2358
        %2368 = vmatmul.bf16.gmra.mxu0 %v2355
        %v2369 = vpop.f32.mrf.mxu0
        %v2370 = vadd.f32 0.0, %v2369
        %v2371 = vpop.f32.mrf.mxu0
        %2372 = vdwg.mxu0
        %v2374 = vsel %vm1379, %v2351, 0
        %v2377 = vsel %vm1522, %v1778, 0
        %2379 = vmatpush.bf16.msra.mxu0 0
        %2380 = vmatpush.bf16.msra.mxu0 0
        %2381 = vmatpush.bf16.msra.mxu0 0
        %2382 = vmatpush.bf16.msra.mxu0 0
        %2383 = vmatpush.bf16.msra.mxu0 0
        %2384 = vmatpush.bf16.msra.mxu0 0
        %2385 = vmatpush.bf16.msra.mxu0 0
        %2386 = vmatpush.bf16.msra.mxu0 %v2377
        %2387 = vmatmul.bf16.gmra.mxu0 %v2374
        %v2388 = vpop.f32.mrf.mxu0
        %v2389 = vadd.f32 0.0, %v2388
        %v2390 = vpop.f32.mrf.mxu0
        %2391 = vdwg.mxu0
        %v2393 = vsel %vm1379, %v2352, 0
        %v2396 = vsel %vm1522, %v1779, 0
        %2398 = vmatpush.bf16.msra.mxu0 0
        %2399 = vmatpush.bf16.msra.mxu0 0
        %2400 = vmatpush.bf16.msra.mxu0 0
        %2401 = vmatpush.bf16.msra.mxu0 0
        %2402 = vmatpush.bf16.msra.mxu0 0
        %2403 = vmatpush.bf16.msra.mxu0 0
        %2404 = vmatpush.bf16.msra.mxu0 0
        %2405 = vmatpush.bf16.msra.mxu0 %v2396
        %2406 = vmatmul.bf16.gmra.mxu0 %v2393
        %v2407 = vpop.f32.mrf.mxu0
        %v2408 = vadd.f32 0.0, %v2407
        %v2409 = vpop.f32.mrf.mxu0
        %2410 = vdwg.mxu0
        %v2412 = vsel %vm1379, %v2353, 0
        %v2415 = vsel %vm1522, %v1780, 0
        %2417 = vmatpush.bf16.msra.mxu0 0
        %2418 = vmatpush.bf16.msra.mxu0 0
        %2419 = vmatpush.bf16.msra.mxu0 0
        %2420 = vmatpush.bf16.msra.mxu0 0
        %2421 = vmatpush.bf16.msra.mxu0 0
        %2422 = vmatpush.bf16.msra.mxu0 0
        %2423 = vmatpush.bf16.msra.mxu0 0
        %2424 = vmatpush.bf16.msra.mxu0 %v2415
        %2425 = vmatmul.bf16.gmra.mxu0 %v2412
        %v2426 = vpop.f32.mrf.mxu0
        %v2427 = vadd.f32 0.0, %v2426
        %v2428 = vpop.f32.mrf.mxu0
        %2429 = vdwg.mxu0
        %v2430 = vsel %vm929, %v2370, 0.0
        %v2431 = vsel %vm929, %v2389, 0.0
        %v2432 = vadd.f32 %v2430, %v2431
        %v2433 = vsel %vm929, %v2408, 0.0
        %v2434 = vadd.f32 %v2432, %v2433
        %v2435 = vsel %vm929, %v2427, 0.0
        %v2436 = vadd.f32 %v2434, %v2435
        %v2438 = vperm.slane %v1781, 0
        %v2440 = vadd.f32 %v2436, %v2438
        %v2441 = vadd.f32 %v1687, %v2440
        %v2442 = vsel %vm929, %v2441, 0.0
        %2443 = vadd.xlane.f32.xlu0 %v2442
        %v2444 = vpop.xlane.xlu0 %2443
        %v2445 = vmul.f32 %v2444, %v939
        %v2446 = vsub.f32 %v2441, %v2445
        %v2447 = vmul.f32 %v2446, %v2446
        %v2448 = vsel %vm929, %v2447, 0.0
        %2449 = vadd.xlane.f32.xlu0 %v2448
        %v2450 = vpop.xlane.xlu0 %2449
        %v2451 = vmul.f32 %v2450, 0.032258064
        %v2452 = vrsqrt.pop %v2451
        %v2453 = vmul.f32 %v2452, %v2451
        %v2454 = vmul.f32 %v2453, %v2452
        %v2455 = vmul.f32 0.5, %v2454
        %v2456 = vsub.f32 1.5, %v2455
        %v2457 = vmul.f32 %v2452, %v2456
        %v2458 = vmul.f32 %v2451, %v2457
        %vm2459 = vcmp.eq.f32.partialorder %v2451, inf
        %v2460 = vsel %vm2459, %v2451, %v2458
        %vm2461 = vcmp.eq.f32.partialorder %v2451, 0.0
        %v2462 = vand.u32 %v2451, 2147483648
        %v2463 = vsel %vm2461, %v2462, %v2460
        %v2464 = vadd.f32 %v2463, 1e-06
        %v2465 = vrcp.pop %v2464
        %v2466 = vmul.f32 %v2446, %v2465
        %v2467 = vperm.slane %v927, 2
        %v2468 = vmul.f32 %v2467, %v2466
        %v2469 = vperm.slane %v928, 2
        %v2470 = vadd.f32 %v2468, %v2469
        %v2471 = vld [vmem:[%s16] sm:$0xf]
        %v2472 = vld [vmem:[%s16 + $0x4] sm:$0xf]
        %v2473 = vld [vmem:[%s16 + $0x8] sm:$0xf]
        %v2474 = vld [vmem:[%s16 + $0xc] sm:$0xf]
        %v2475 = vld [vmem:[%s16 + $0x10] sm:$0xf]
        %v2476 = vld [vmem:[%s16 + $0x14] sm:$0xf]
        %v2477 = vld [vmem:[%s16 + $0x18] sm:$0xf]
        %v2478 = vld [vmem:[%s16 + $0x1c] sm:$0xf]
        %v2479 = vld [vmem:[%s16 + $0x20] sm:$0xf]
        %v2480 = vld [vmem:[%s16 + $0x24] sm:$0xf]
        %v2481 = vld [vmem:[%s16 + $0x28] sm:$0xf]
        %v2482 = vld [vmem:[%s16 + $0x2c] sm:$0xf]
        %v2483 = vld [vmem:[%s16 + $0x30] sm:$0xf]
        %v2484 = vld [vmem:[%s16 + $0x34] sm:$0xf]
        %v2485 = vld [vmem:[%s16 + $0x38] sm:$0xf]
        %v2486 = vld [vmem:[%s16 + $0x3c] sm:$0xf]
        %v2487 = vld [vmem:[%s17] sm:$0x1]
        %v2488 = vld [vmem:[%s17 + $0x1] sm:$0x1]
        %v2489 = vld [vmem:[%s17 + $0x2] sm:$0x1]
        %v2490 = vld [vmem:[%s17 + $0x3] sm:$0x1]
        %v2491 = vld [vmem:[%s18] sm:$0xf]
        %v2492 = vld [vmem:[%s18 + $0x4] sm:$0xf]
        %v2493 = vld [vmem:[%s18 + $0x8] sm:$0xf]
        %v2494 = vld [vmem:[%s18 + $0xc] sm:$0xf]
        %v2495 = vld [vmem:[%s18 + $0x10] sm:$0xf]
        %v2496 = vld [vmem:[%s18 + $0x14] sm:$0xf]
        %v2497 = vld [vmem:[%s18 + $0x18] sm:$0xf]
        %v2498 = vld [vmem:[%s18 + $0x1c] sm:$0xf]
        %v2499 = vld [vmem:[%s18 + $0x20] sm:$0xf]
        %v2500 = vld [vmem:[%s18 + $0x24] sm:$0xf]
        %v2501 = vld [vmem:[%s18 + $0x28] sm:$0xf]
        %v2502 = vld [vmem:[%s18 + $0x2c] sm:$0xf]
        %v2503 = vld [vmem:[%s18 + $0x30] sm:$0xf]
        %v2504 = vld [vmem:[%s18 + $0x34] sm:$0xf]
        %v2505 = vld [vmem:[%s18 + $0x38] sm:$0xf]
        %v2506 = vld [vmem:[%s18 + $0x3c] sm:$0xf]
        %v2507 = vld [vmem:[%s19] sm:$0x1]
        %v2508 = vld [vmem:[%s19 + $0x1] sm:$0x1]
        %v2509 = vld [vmem:[%s19 + $0x2] sm:$0x1]
        %v2510 = vld [vmem:[%s19 + $0x3] sm:$0x1]
        %v2511 = vld [vmem:[%s20] sm:$0xf]
        %v2512 = vld [vmem:[%s20 + $0x4] sm:$0xf]
        %v2513 = vld [vmem:[%s20 + $0x8] sm:$0xf]
        %v2514 = vld [vmem:[%s20 + $0xc] sm:$0xf]
        %v2515 = vld [vmem:[%s20 + $0x10] sm:$0xf]
        %v2516 = vld [vmem:[%s20 + $0x14] sm:$0xf]
        %v2517 = vld [vmem:[%s20 + $0x18] sm:$0xf]
        %v2518 = vld [vmem:[%s20 + $0x1c] sm:$0xf]
        %v2519 = vld [vmem:[%s20 + $0x20] sm:$0xf]
        %v2520 = vld [vmem:[%s20 + $0x24] sm:$0xf]
        %v2521 = vld [vmem:[%s20 + $0x28] sm:$0xf]
        %v2522 = vld [vmem:[%s20 + $0x2c] sm:$0xf]
        %v2523 = vld [vmem:[%s20 + $0x30] sm:$0xf]
        %v2524 = vld [vmem:[%s20 + $0x34] sm:$0xf]
        %v2525 = vld [vmem:[%s20 + $0x38] sm:$0xf]
        %v2526 = vld [vmem:[%s20 + $0x3c] sm:$0xf]
        %v2527 = vld [vmem:[%s21] sm:$0x1]
        %v2528 = vld [vmem:[%s21 + $0x1] sm:$0x1]
        %v2529 = vld [vmem:[%s21 + $0x2] sm:$0x1]
        %v2530 = vld [vmem:[%s21 + $0x3] sm:$0x1]
        %v2531 = vld [vmem:[%s22] sm:$0xf]
        %v2532 = vld [vmem:[%s22 + $0x4] sm:$0xf]
        %v2533 = vld [vmem:[%s22 + $0x8] sm:$0xf]
        %v2534 = vld [vmem:[%s22 + $0xc] sm:$0xf]
        %v2535 = vld [vmem:[%s23] sm:$0x1]
        %v2536 = vpack.c.bf16 %v2470, %v2470
        %v2537 = vpack.c.bf16 %v923, %v923
        %v2542 = vperm.slane %v2487, 0
        %v2543 = vperm.slane %v2488, 0
        %v2544 = vperm.slane %v2489, 0
        %v2545 = vperm.slane %v2490, 0
        %v2554 = vunpack.c.l.b16 %v2471
        %v2555 = vunpack.c.l.b16 %v2472
        %v2556 = vunpack.c.l.b16 %v2473
        %v2557 = vunpack.c.l.b16 %v2474
        %v2558 = vpack.c.b16 %v2555, %v2554
        %v2559 = vpack.c.b16 %v2557, %v2556
        %v2563 = vsel %vm929, %v2536, 0
        %2565 = vmatpush.bf16.msra.mxu0 0
        %2566 = vmatpush.bf16.msra.mxu0 0
        %2567 = vmatpush.bf16.msra.mxu0 0
        %2568 = vmatpush.bf16.msra.mxu0 0
        %2569 = vmatpush.bf16.msra.mxu0 0
        %2570 = vmatpush.bf16.msra.mxu0 0
        %2571 = vmatpush.bf16.msra.mxu0 %v2559
        %2572 = vmatpush.bf16.msra.mxu0 %v2558
        %2573 = vmatmul.bf16.gmra.mxu0 %v2563
        %v2574 = vpop.f32.mrf.mxu0
        %v2575 = vadd.f32 %v2542, %v2574
        %v2576 = vpop.f32.mrf.mxu0
        %2577 = vdwg.mxu0
        %v2582 = vunpack.c.l.b16 %v2475
        %v2583 = vunpack.c.l.b16 %v2476
        %v2584 = vunpack.c.l.b16 %v2477
        %v2585 = vunpack.c.l.b16 %v2478
        %v2586 = vpack.c.b16 %v2583, %v2582
        %v2587 = vpack.c.b16 %v2585, %v2584
        %2590 = vmatpush.bf16.msra.mxu0 0
        %2591 = vmatpush.bf16.msra.mxu0 0
        %2592 = vmatpush.bf16.msra.mxu0 0
        %2593 = vmatpush.bf16.msra.mxu0 0
        %2594 = vmatpush.bf16.msra.mxu0 0
        %2595 = vmatpush.bf16.msra.mxu0 0
        %2596 = vmatpush.bf16.msra.mxu0 %v2587
        %2597 = vmatpush.bf16.msra.mxu0 %v2586
        %2598 = vmatmul.bf16.gmra.mxu0 %v2563
        %v2599 = vpop.f32.mrf.mxu0
        %v2600 = vadd.f32 %v2543, %v2599
        %v2601 = vpop.f32.mrf.mxu0
        %2602 = vdwg.mxu0
        %v2607 = vunpack.c.l.b16 %v2479
        %v2608 = vunpack.c.l.b16 %v2480
        %v2609 = vunpack.c.l.b16 %v2481
        %v2610 = vunpack.c.l.b16 %v2482
        %v2611 = vpack.c.b16 %v2608, %v2607
        %v2612 = vpack.c.b16 %v2610, %v2609
        %2615 = vmatpush.bf16.msra.mxu0 0
        %2616 = vmatpush.bf16.msra.mxu0 0
        %2617 = vmatpush.bf16.msra.mxu0 0
        %2618 = vmatpush.bf16.msra.mxu0 0
        %2619 = vmatpush.bf16.msra.mxu0 0
        %2620 = vmatpush.bf16.msra.mxu0 0
        %2621 = vmatpush.bf16.msra.mxu0 %v2612
        %2622 = vmatpush.bf16.msra.mxu0 %v2611
        %2623 = vmatmul.bf16.gmra.mxu0 %v2563
        %v2624 = vpop.f32.mrf.mxu0
        %v2625 = vadd.f32 %v2544, %v2624
        %v2626 = vpop.f32.mrf.mxu0
        %2627 = vdwg.mxu0
        %v2632 = vunpack.c.l.b16 %v2483
        %v2633 = vunpack.c.l.b16 %v2484
        %v2634 = vunpack.c.l.b16 %v2485
        %v2635 = vunpack.c.l.b16 %v2486
        %v2636 = vpack.c.b16 %v2633, %v2632
        %v2637 = vpack.c.b16 %v2635, %v2634
        %2640 = vmatpush.bf16.msra.mxu0 0
        %2641 = vmatpush.bf16.msra.mxu0 0
        %2642 = vmatpush.bf16.msra.mxu0 0
        %2643 = vmatpush.bf16.msra.mxu0 0
        %2644 = vmatpush.bf16.msra.mxu0 0
        %2645 = vmatpush.bf16.msra.mxu0 0
        %2646 = vmatpush.bf16.msra.mxu0 %v2637
        %2647 = vmatpush.bf16.msra.mxu0 %v2636
        %2648 = vmatmul.bf16.gmra.mxu0 %v2563
        %v2649 = vpop.f32.mrf.mxu0
        %v2650 = vadd.f32 %v2545, %v2649
        %v2651 = vpop.f32.mrf.mxu0
        %2652 = vdwg.mxu0
        %v2657 = vperm.slane %v2507, 0
        %v2658 = vperm.slane %v2508, 0
        %v2659 = vperm.slane %v2509, 0
        %v2660 = vperm.slane %v2510, 0
        %v2669 = vunpack.c.l.b16 %v2491
        %v2670 = vunpack.c.l.b16 %v2492
        %v2671 = vunpack.c.l.b16 %v2493
        %v2672 = vunpack.c.l.b16 %v2494
        %v2673 = vpack.c.b16 %v2670, %v2669
        %v2674 = vpack.c.b16 %v2672, %v2671
        %v2678 = vsel %vm929, %v2537, 0
        %2680 = vmatpush.bf16.msra.mxu0 0
        %2681 = vmatpush.bf16.msra.mxu0 0
        %2682 = vmatpush.bf16.msra.mxu0 0
        %2683 = vmatpush.bf16.msra.mxu0 0
        %2684 = vmatpush.bf16.msra.mxu0 0
        %2685 = vmatpush.bf16.msra.mxu0 0
        %2686 = vmatpush.bf16.msra.mxu0 %v2674
        %2687 = vmatpush.bf16.msra.mxu0 %v2673
        %2688 = vmatmul.bf16.gmra.mxu0 %v2678
        %v2689 = vpop.f32.mrf.mxu0
        %v2690 = vadd.f32 %v2657, %v2689
        %v2691 = vpop.f32.mrf.mxu0
        %2692 = vdwg.mxu0
        %v2697 = vunpack.c.l.b16 %v2495
        %v2698 = vunpack.c.l.b16 %v2496
        %v2699 = vunpack.c.l.b16 %v2497
        %v2700 = vunpack.c.l.b16 %v2498
        %v2701 = vpack.c.b16 %v2698, %v2697
        %v2702 = vpack.c.b16 %v2700, %v2699
        %2705 = vmatpush.bf16.msra.mxu0 0
        %2706 = vmatpush.bf16.msra.mxu0 0
        %2707 = vmatpush.bf16.msra.mxu0 0
        %2708 = vmatpush.bf16.msra.mxu0 0
        %2709 = vmatpush.bf16.msra.mxu0 0
        %2710 = vmatpush.bf16.msra.mxu0 0
        %2711 = vmatpush.bf16.msra.mxu0 %v2702
        %2712 = vmatpush.bf16.msra.mxu0 %v2701
        %2713 = vmatmul.bf16.gmra.mxu0 %v2678
        %v2714 = vpop.f32.mrf.mxu0
        %v2715 = vadd.f32 %v2658, %v2714
        %v2716 = vpop.f32.mrf.mxu0
        %2717 = vdwg.mxu0
        %v2722 = vunpack.c.l.b16 %v2499
        %v2723 = vunpack.c.l.b16 %v2500
        %v2724 = vunpack.c.l.b16 %v2501
        %v2725 = vunpack.c.l.b16 %v2502
        %v2726 = vpack.c.b16 %v2723, %v2722
        %v2727 = vpack.c.b16 %v2725, %v2724
        %2730 = vmatpush.bf16.msra.mxu0 0
        %2731 = vmatpush.bf16.msra.mxu0 0
        %2732 = vmatpush.bf16.msra.mxu0 0
        %2733 = vmatpush.bf16.msra.mxu0 0
        %2734 = vmatpush.bf16.msra.mxu0 0
        %2735 = vmatpush.bf16.msra.mxu0 0
        %2736 = vmatpush.bf16.msra.mxu0 %v2727
        %2737 = vmatpush.bf16.msra.mxu0 %v2726
        %2738 = vmatmul.bf16.gmra.mxu0 %v2678
        %v2739 = vpop.f32.mrf.mxu0
        %v2740 = vadd.f32 %v2659, %v2739
        %v2741 = vpop.f32.mrf.mxu0
        %2742 = vdwg.mxu0
        %v2747 = vunpack.c.l.b16 %v2503
        %v2748 = vunpack.c.l.b16 %v2504
        %v2749 = vunpack.c.l.b16 %v2505
        %v2750 = vunpack.c.l.b16 %v2506
        %v2751 = vpack.c.b16 %v2748, %v2747
        %v2752 = vpack.c.b16 %v2750, %v2749
        %2755 = vmatpush.bf16.msra.mxu0 0
        %2756 = vmatpush.bf16.msra.mxu0 0
        %2757 = vmatpush.bf16.msra.mxu0 0
        %2758 = vmatpush.bf16.msra.mxu0 0
        %2759 = vmatpush.bf16.msra.mxu0 0
        %2760 = vmatpush.bf16.msra.mxu0 0
        %2761 = vmatpush.bf16.msra.mxu0 %v2752
        %2762 = vmatpush.bf16.msra.mxu0 %v2751
        %2763 = vmatmul.bf16.gmra.mxu0 %v2678
        %v2764 = vpop.f32.mrf.mxu0
        %v2765 = vadd.f32 %v2660, %v2764
        %v2766 = vpop.f32.mrf.mxu0
        %2767 = vdwg.mxu0
        %v2772 = vperm.slane %v2527, 0
        %v2773 = vperm.slane %v2528, 0
        %v2774 = vperm.slane %v2529, 0
        %v2775 = vperm.slane %v2530, 0
        %v2784 = vunpack.c.l.b16 %v2511
        %v2785 = vunpack.c.l.b16 %v2512
        %v2786 = vunpack.c.l.b16 %v2513
        %v2787 = vunpack.c.l.b16 %v2514
        %v2788 = vpack.c.b16 %v2785, %v2784
        %v2789 = vpack.c.b16 %v2787, %v2786
        %2792 = vmatpush.bf16.msra.mxu0 0
        %2793 = vmatpush.bf16.msra.mxu0 0
        %2794 = vmatpush.bf16.msra.mxu0 0
        %2795 = vmatpush.bf16.msra.mxu0 0
        %2796 = vmatpush.bf16.msra.mxu0 0
        %2797 = vmatpush.bf16.msra.mxu0 0
        %2798 = vmatpush.bf16.msra.mxu0 %v2789
        %2799 = vmatpush.bf16.msra.mxu0 %v2788
        %2800 = vmatmul.bf16.gmra.mxu0 %v2678
        %v2801 = vpop.f32.mrf.mxu0
        %v2802 = vadd.f32 %v2772, %v2801
        %v2803 = vpop.f32.mrf.mxu0
        %2804 = vdwg.mxu0
        %v2809 = vunpack.c.l.b16 %v2515
        %v2810 = vunpack.c.l.b16 %v2516
        %v2811 = vunpack.c.l.b16 %v2517
        %v2812 = vunpack.c.l.b16 %v2518
        %v2813 = vpack.c.b16 %v2810, %v2809
        %v2814 = vpack.c.b16 %v2812, %v2811
        %2817 = vmatpush.bf16.msra.mxu0 0
        %2818 = vmatpush.bf16.msra.mxu0 0
        %2819 = vmatpush.bf16.msra.mxu0 0
        %2820 = vmatpush.bf16.msra.mxu0 0
        %2821 = vmatpush.bf16.msra.mxu0 0
        %2822 = vmatpush.bf16.msra.mxu0 0
        %2823 = vmatpush.bf16.msra.mxu0 %v2814
        %2824 = vmatpush.bf16.msra.mxu0 %v2813
        %2825 = vmatmul.bf16.gmra.mxu0 %v2678
        %v2826 = vpop.f32.mrf.mxu0
        %v2827 = vadd.f32 %v2773, %v2826
        %v2828 = vpop.f32.mrf.mxu0
        %2829 = vdwg.mxu0
        %v2834 = vunpack.c.l.b16 %v2519
        %v2835 = vunpack.c.l.b16 %v2520
        %v2836 = vunpack.c.l.b16 %v2521
        %v2837 = vunpack.c.l.b16 %v2522
        %v2838 = vpack.c.b16 %v2835, %v2834
        %v2839 = vpack.c.b16 %v2837, %v2836
        %2842 = vmatpush.bf16.msra.mxu0 0
        %2843 = vmatpush.bf16.msra.mxu0 0
        %2844 = vmatpush.bf16.msra.mxu0 0
        %2845 = vmatpush.bf16.msra.mxu0 0
        %2846 = vmatpush.bf16.msra.mxu0 0
        %2847 = vmatpush.bf16.msra.mxu0 0
        %2848 = vmatpush.bf16.msra.mxu0 %v2839
        %2849 = vmatpush.bf16.msra.mxu0 %v2838
        %2850 = vmatmul.bf16.gmra.mxu0 %v2678
        %v2851 = vpop.f32.mrf.mxu0
        %v2852 = vadd.f32 %v2774, %v2851
        %v2853 = vpop.f32.mrf.mxu0
        %2854 = vdwg.mxu0
        %v2859 = vunpack.c.l.b16 %v2523
        %v2860 = vunpack.c.l.b16 %v2524
        %v2861 = vunpack.c.l.b16 %v2525
        %v2862 = vunpack.c.l.b16 %v2526
        %v2863 = vpack.c.b16 %v2860, %v2859
        %v2864 = vpack.c.b16 %v2862, %v2861
        %2867 = vmatpush.bf16.msra.mxu0 0
        %2868 = vmatpush.bf16.msra.mxu0 0
        %2869 = vmatpush.bf16.msra.mxu0 0
        %2870 = vmatpush.bf16.msra.mxu0 0
        %2871 = vmatpush.bf16.msra.mxu0 0
        %2872 = vmatpush.bf16.msra.mxu0 0
        %2873 = vmatpush.bf16.msra.mxu0 %v2864
        %2874 = vmatpush.bf16.msra.mxu0 %v2863
        %2875 = vmatmul.bf16.gmra.mxu0 %v2678
        %v2876 = vpop.f32.mrf.mxu0
        %v2877 = vadd.f32 %v2775, %v2876
        %v2878 = vpop.f32.mrf.mxu0
        %2879 = vdwg.mxu0
        %v2880 = vpack.c.bf16 %v2575, %v2575
        %v2881 = vpack.c.bf16 %v2600, %v2600
        %v2882 = vpack.c.bf16 %v2625, %v2625
        %v2883 = vpack.c.bf16 %v2650, %v2650
        %v2884 = vpack.c.bf16 %v2690, %v2690
        %v2885 = vpack.c.bf16 %v2715, %v2715
        %v2886 = vpack.c.bf16 %v2740, %v2740
        %v2887 = vpack.c.bf16 %v2765, %v2765
        %v2889 = vsel %vm1379, %v2880, 0
        %v2892 = vsel %vm1379, %v2884, 0
        %2894 = vmatpush.bf16.xpose.msra.mxu0 0
        %2895 = vmatpush.bf16.xpose.msra.mxu0 0
        %2896 = vmatpush.bf16.xpose.msra.mxu0 0
        %2897 = vmatpush.bf16.xpose.msra.mxu0 0
        %2898 = vmatpush.bf16.xpose.msra.mxu0 0
        %2899 = vmatpush.bf16.xpose.msra.mxu0 0
        %2900 = vmatpush.bf16.xpose.msra.mxu0 0
        %2901 = vmatpush.bf16.xpose.msra.mxu0 %v2892
        %2902 = vmatmul.bf16.gmra.mxu0 %v2889
        %v2903 = vpop.f32.mrf.mxu0
        %v2904 = vadd.f32 0.0, %v2903
        %v2905 = vpop.f32.mrf.mxu0
        %2906 = vdwg.mxu0
        %v2908 = vsel %vm1379, %v2881, 0
        %v2911 = vsel %vm1379, %v2885, 0
        %2913 = vmatpush.bf16.xpose.msra.mxu0 0
        %2914 = vmatpush.bf16.xpose.msra.mxu0 0
        %2915 = vmatpush.bf16.xpose.msra.mxu0 0
        %2916 = vmatpush.bf16.xpose.msra.mxu0 0
        %2917 = vmatpush.bf16.xpose.msra.mxu0 0
        %2918 = vmatpush.bf16.xpose.msra.mxu0 0
        %2919 = vmatpush.bf16.xpose.msra.mxu0 0
        %2920 = vmatpush.bf16.xpose.msra.mxu0 %v2911
        %2921 = vmatmul.bf16.gmra.mxu0 %v2908
        %v2922 = vpop.f32.mrf.mxu0
        %v2923 = vadd.f32 0.0, %v2922
        %v2924 = vpop.f32.mrf.mxu0
        %2925 = vdwg.mxu0
        %v2927 = vsel %vm1379, %v2882, 0
        %v2930 = vsel %vm1379, %v2886, 0
        %2932 = vmatpush.bf16.xpose.msra.mxu0 0
        %2933 = vmatpush.bf16.xpose.msra.mxu0 0
        %2934 = vmatpush.bf16.xpose.msra.mxu0 0
        %2935 = vmatpush.bf16.xpose.msra.mxu0 0
        %2936 = vmatpush.bf16.xpose.msra.mxu0 0
        %2937 = vmatpush.bf16.xpose.msra.mxu0 0
        %2938 = vmatpush.bf16.xpose.msra.mxu0 0
        %2939 = vmatpush.bf16.xpose.msra.mxu0 %v2930
        %2940 = vmatmul.bf16.gmra.mxu0 %v2927
        %v2941 = vpop.f32.mrf.mxu0
        %v2942 = vadd.f32 0.0, %v2941
        %v2943 = vpop.f32.mrf.mxu0
        %2944 = vdwg.mxu0
        %v2946 = vsel %vm1379, %v2883, 0
        %v2949 = vsel %vm1379, %v2887, 0
        %2951 = vmatpush.bf16.xpose.msra.mxu0 0
        %2952 = vmatpush.bf16.xpose.msra.mxu0 0
        %2953 = vmatpush.bf16.xpose.msra.mxu0 0
        %2954 = vmatpush.bf16.xpose.msra.mxu0 0
        %2955 = vmatpush.bf16.xpose.msra.mxu0 0
        %2956 = vmatpush.bf16.xpose.msra.mxu0 0
        %2957 = vmatpush.bf16.xpose.msra.mxu0 0
        %2958 = vmatpush.bf16.xpose.msra.mxu0 %v2949
        %2959 = vmatmul.bf16.gmra.mxu0 %v2946
        %v2960 = vpop.f32.mrf.mxu0
        %v2961 = vadd.f32 0.0, %v2960
        %v2962 = vpop.f32.mrf.mxu0
        %2963 = vdwg.mxu0
        %v2964 = vmul.f32 %v2904, 0.35355338
        %v2965 = vmul.f32 %v2923, 0.35355338
        %v2966 = vmul.f32 %v2942, 0.35355338
        %v2967 = vmul.f32 %v2961, 0.35355338
        %vm2968 = vcmp.eq.f32.partialorder %v926, 0.0
        %v2969 = vsel %vm2968, 1, 0
        %v2970 = vperm.slane %v2969, 0
        %vm2971 = vcmp.eq.s32.totalorder %v2970, 1
        %v2972 = vsel %vm2971, -1e+09, %v2964
        %v2973 = vsel %vm2971, -1e+09, %v2965
        %v2974 = vsel %vm2971, -1e+09, %v2966
        %v2975 = vsel %vm2971, -1e+09, %v2967
        %v2976 = vsel %vm1379, %v2972, -inf
        %2977 = vmax.xlane.f32.xlu0 %v2976
        %v2978 = vpop.xlane.xlu0 %2977
        %v2979 = vsel %vm1379, %v2973, -inf
        %2980 = vmax.xlane.f32.xlu0 %v2979
        %v2981 = vpop.xlane.xlu0 %2980
        %v2982 = vsel %vm1379, %v2974, -inf
        %2983 = vmax.xlane.f32.xlu0 %v2982
        %v2984 = vpop.xlane.xlu0 %2983
        %v2985 = vsel %vm1379, %v2975, -inf
        %2986 = vmax.xlane.f32.xlu0 %v2985
        %v2987 = vpop.xlane.xlu0 %2986
        %v2988 = vsub.f32 %v2972, %v2978
        %v2989 = vsub.f32 %v2973, %v2981
        %v2990 = vsub.f32 %v2974, %v2984
        %v2991 = vsub.f32 %v2975, %v2987
        %v2992 = vmul.f32 %v2988, 1.442695
        %v2993 = vpow.pop %v2992
        %v2994 = vmul.f32 %v2989, 1.442695
        %v2995 = vpow.pop %v2994
        %v2996 = vmul.f32 %v2990, 1.442695
        %v2997 = vpow.pop %v2996
        %v2998 = vmul.f32 %v2991, 1.442695
        %v2999 = vpow.pop %v2998
        %v3000 = vsel %vm1379, %v2993, 0.0
        %3001 = vadd.xlane.f32.xlu0 %v3000
        %v3002 = vpop.xlane.xlu0 %3001
        %v3003 = vsel %vm1379, %v2995, 0.0
        %3004 = vadd.xlane.f32.xlu0 %v3003
        %v3005 = vpop.xlane.xlu0 %3004
        %v3006 = vsel %vm1379, %v2997, 0.0
        %3007 = vadd.xlane.f32.xlu0 %v3006
        %v3008 = vpop.xlane.xlu0 %3007
        %v3009 = vsel %vm1379, %v2999, 0.0
        %3010 = vadd.xlane.f32.xlu0 %v3009
        %v3011 = vpop.xlane.xlu0 %3010
        %v3012 = vrcp.pop %v3002
        %v3013 = vrcp.pop %v3005
        %v3014 = vrcp.pop %v3008
        %v3015 = vrcp.pop %v3011
        %v3016 = vmul.f32 %v2993, %v3012
        %v3017 = vmul.f32 %v2995, %v3013
        %v3018 = vmul.f32 %v2997, %v3014
        %v3019 = vmul.f32 %v2999, %v3015
        %v3020 = vpack.c.bf16 %v3016, %v3016
        %v3021 = vpack.c.bf16 %v3017, %v3017
        %v3022 = vpack.c.bf16 %v3018, %v3018
        %v3023 = vpack.c.bf16 %v3019, %v3019
        %v3024 = vpack.c.bf16 %v2802, %v2802
        %v3025 = vpack.c.bf16 %v2827, %v2827
        %v3026 = vpack.c.bf16 %v2852, %v2852
        %v3027 = vpack.c.bf16 %v2877, %v2877
        %v3029 = vsel %vm1379, %v3020, 0
        %v3032 = vsel %vm1522, %v3024, 0
        %3034 = vmatpush.bf16.msra.mxu0 0
        %3035 = vmatpush.bf16.msra.mxu0 0
        %3036 = vmatpush.bf16.msra.mxu0 0
        %3037 = vmatpush.bf16.msra.mxu0 0
        %3038 = vmatpush.bf16.msra.mxu0 0
        %3039 = vmatpush.bf16.msra.mxu0 0
        %3040 = vmatpush.bf16.msra.mxu0 0
        %3041 = vmatpush.bf16.msra.mxu0 %v3032
        %3042 = vmatmul.bf16.gmra.mxu0 %v3029
        %v3043 = vpop.f32.mrf.mxu0
        %v3044 = vadd.f32 0.0, %v3043
        %v3045 = vpop.f32.mrf.mxu0
        %3046 = vdwg.mxu0
        %v3048 = vsel %vm1379, %v3021, 0
        %v3051 = vsel %vm1522, %v3025, 0
        %3053 = vmatpush.bf16.msra.mxu0 0
        %3054 = vmatpush.bf16.msra.mxu0 0
        %3055 = vmatpush.bf16.msra.mxu0 0
        %3056 = vmatpush.bf16.msra.mxu0 0
        %3057 = vmatpush.bf16.msra.mxu0 0
        %3058 = vmatpush.bf16.msra.mxu0 0
        %3059 = vmatpush.bf16.msra.mxu0 0
        %3060 = vmatpush.bf16.msra.mxu0 %v3051
        %3061 = vmatmul.bf16.gmra.mxu0 %v3048
        %v3062 = vpop.f32.mrf.mxu0
        %v3063 = vadd.f32 0.0, %v3062
        %v3064 = vpop.f32.mrf.mxu0
        %3065 = vdwg.mxu0
        %v3067 = vsel %vm1379, %v3022, 0
        %v3070 = vsel %vm1522, %v3026, 0
        %3072 = vmatpush.bf16.msra.mxu0 0
        %3073 = vmatpush.bf16.msra.mxu0 0
        %3074 = vmatpush.bf16.msra.mxu0 0
        %3075 = vmatpush.bf16.msra.mxu0 0
        %3076 = vmatpush.bf16.msra.mxu0 0
        %3077 = vmatpush.bf16.msra.mxu0 0
        %3078 = vmatpush.bf16.msra.mxu0 0
        %3079 = vmatpush.bf16.msra.mxu0 %v3070
        %3080 = vmatmul.bf16.gmra.mxu0 %v3067
        %v3081 = vpop.f32.mrf.mxu0
        %v3082 = vadd.f32 0.0, %v3081
        %v3083 = vpop.f32.mrf.mxu0
        %3084 = vdwg.mxu0
        %v3086 = vsel %vm1379, %v3023, 0
        %v3089 = vsel %vm1522, %v3027, 0
        %3091 = vmatpush.bf16.msra.mxu0 0
        %3092 = vmatpush.bf16.msra.mxu0 0
        %3093 = vmatpush.bf16.msra.mxu0 0
        %3094 = vmatpush.bf16.msra.mxu0 0
        %3095 = vmatpush.bf16.msra.mxu0 0
        %3096 = vmatpush.bf16.msra.mxu0 0
        %3097 = vmatpush.bf16.msra.mxu0 0
        %3098 = vmatpush.bf16.msra.mxu0 %v3089
        %3099 = vmatmul.bf16.gmra.mxu0 %v3086
        %v3100 = vpop.f32.mrf.mxu0
        %v3101 = vadd.f32 0.0, %v3100
        %v3102 = vpop.f32.mrf.mxu0
        %3103 = vdwg.mxu0
        %v3104 = vpack.c.bf16 %v3044, %v3044
        %v3105 = vpack.c.bf16 %v3063, %v3063
        %v3106 = vpack.c.bf16 %v3082, %v3082
        %v3107 = vpack.c.bf16 %v3101, %v3101
        %v3109 = vsel %vm1379, %v3104, 0
        %v3112 = vsel %vm1522, %v2531, 0
        %3114 = vmatpush.bf16.msra.mxu0 0
        %3115 = vmatpush.bf16.msra.mxu0 0
        %3116 = vmatpush.bf16.msra.mxu0 0
        %3117 = vmatpush.bf16.msra.mxu0 0
        %3118 = vmatpush.bf16.msra.mxu0 0
        %3119 = vmatpush.bf16.msra.mxu0 0
        %3120 = vmatpush.bf16.msra.mxu0 0
        %3121 = vmatpush.bf16.msra.mxu0 %v3112
        %3122 = vmatmul.bf16.gmra.mxu0 %v3109
        %v3123 = vpop.f32.mrf.mxu0
        %v3124 = vadd.f32 0.0, %v3123
        %v3125 = vpop.f32.mrf.mxu0
        %3126 = vdwg.mxu0
        %v3128 = vsel %vm1379, %v3105, 0
        %v3131 = vsel %vm1522, %v2532, 0
        %3133 = vmatpush.bf16.msra.mxu0 0
        %3134 = vmatpush.bf16.msra.mxu0 0
        %3135 = vmatpush.bf16.msra.mxu0 0
        %3136 = vmatpush.bf16.msra.mxu0 0
        %3137 = vmatpush.bf16.msra.mxu0 0
        %3138 = vmatpush.bf16.msra.mxu0 0
        %3139 = vmatpush.bf16.msra.mxu0 0
        %3140 = vmatpush.bf16.msra.mxu0 %v3131
        %3141 = vmatmul.bf16.gmra.mxu0 %v3128
        %v3142 = vpop.f32.mrf.mxu0
        %v3143 = vadd.f32 0.0, %v3142
        %v3144 = vpop.f32.mrf.mxu0
        %3145 = vdwg.mxu0
        %v3147 = vsel %vm1379, %v3106, 0
        %v3150 = vsel %vm1522, %v2533, 0
        %3152 = vmatpush.bf16.msra.mxu0 0
        %3153 = vmatpush.bf16.msra.mxu0 0
        %3154 = vmatpush.bf16.msra.mxu0 0
        %3155 = vmatpush.bf16.msra.mxu0 0
        %3156 = vmatpush.bf16.msra.mxu0 0
        %3157 = vmatpush.bf16.msra.mxu0 0
        %3158 = vmatpush.bf16.msra.mxu0 0
        %3159 = vmatpush.bf16.msra.mxu0 %v3150
        %3160 = vmatmul.bf16.gmra.mxu0 %v3147
        %v3161 = vpop.f32.mrf.mxu0
        %v3162 = vadd.f32 0.0, %v3161
        %v3163 = vpop.f32.mrf.mxu0
        %3164 = vdwg.mxu0
        %v3166 = vsel %vm1379, %v3107, 0
        %v3169 = vsel %vm1522, %v2534, 0
        %3171 = vmatpush.bf16.msra.mxu0 0
        %3172 = vmatpush.bf16.msra.mxu0 0
        %3173 = vmatpush.bf16.msra.mxu0 0
        %3174 = vmatpush.bf16.msra.mxu0 0
        %3175 = vmatpush.bf16.msra.mxu0 0
        %3176 = vmatpush.bf16.msra.mxu0 0
        %3177 = vmatpush.bf16.msra.mxu0 0
        %3178 = vmatpush.bf16.msra.mxu0 %v3169
        %3179 = vmatmul.bf16.gmra.mxu0 %v3166
        %v3180 = vpop.f32.mrf.mxu0
        %v3181 = vadd.f32 0.0, %v3180
        %v3182 = vpop.f32.mrf.mxu0
        %3183 = vdwg.mxu0
        %v3184 = vsel %vm929, %v3124, 0.0
        %v3185 = vsel %vm929, %v3143, 0.0
        %v3186 = vadd.f32 %v3184, %v3185
        %v3187 = vsel %vm929, %v3162, 0.0
        %v3188 = vadd.f32 %v3186, %v3187
        %v3189 = vsel %vm929, %v3181, 0.0
        %v3190 = vadd.f32 %v3188, %v3189
        %v3192 = vperm.slane %v2535, 0
        %v3194 = vadd.f32 %v3190, %v3192
        %v3195 = vadd.f32 %v2441, %v3194
        %v3196 = vsel %vm929, %v3195, 0.0
        %3197 = vadd.xlane.f32.xlu0 %v3196
        %v3198 = vpop.xlane.xlu0 %3197
        %v3199 = vmul.f32 %v3198, %v939
        %v3200 = vsub.f32 %v3195, %v3199
        %v3201 = vmul.f32 %v3200, %v3200
        %v3202 = vsel %vm929, %v3201, 0.0
        %3203 = vadd.xlane.f32.xlu0 %v3202
        %v3204 = vpop.xlane.xlu0 %3203
        %v3205 = vmul.f32 %v3204, 0.032258064
        %v3206 = vrsqrt.pop %v3205
        %v3207 = vmul.f32 %v3206, %v3205
        %v3208 = vmul.f32 %v3207, %v3206
        %v3209 = vmul.f32 0.5, %v3208
        %v3210 = vsub.f32 1.5, %v3209
        %v3211 = vmul.f32 %v3206, %v3210
        %v3212 = vmul.f32 %v3205, %v3211
        %vm3213 = vcmp.eq.f32.partialorder %v3205, inf
        %v3214 = vsel %vm3213, %v3205, %v3212
        %vm3215 = vcmp.eq.f32.partialorder %v3205, 0.0
        %v3216 = vand.u32 %v3205, 2147483648
        %v3217 = vsel %vm3215, %v3216, %v3214
        %v3218 = vadd.f32 %v3217, 1e-06
        %v3219 = vrcp.pop %v3218
        %v3220 = vmul.f32 %v3200, %v3219
        %v3221 = vperm.slane %v927, 3
        %v3222 = vmul.f32 %v3221, %v3220
        %v3223 = vperm.slane %v928, 3
        %v3224 = vadd.f32 %v3222, %v3223
        %v3225 = vld [vmem:[%s24] sm:$0xff]
        %v3226 = vld [vmem:[%s24 + $0x8] sm:$0xff]
        %v3227 = vld [vmem:[%s24 + $0x10] sm:$0xff]
        %v3228 = vld [vmem:[%s24 + $0x18] sm:$0xff]
        %v3229 = vld [vmem:[%s24 + $0x20] sm:$0xff]
        %v3230 = vld [vmem:[%s24 + $0x28] sm:$0xff]
        %v3231 = vld [vmem:[%s24 + $0x30] sm:$0xff]
        %v3232 = vld [vmem:[%s24 + $0x38] sm:$0xff]
        %v3233 = vld [vmem:[%s24 + $0x40] sm:$0xff]
        %v3234 = vld [vmem:[%s24 + $0x48] sm:$0xff]
        %v3235 = vld [vmem:[%s24 + $0x50] sm:$0xff]
        %v3236 = vld [vmem:[%s24 + $0x58] sm:$0xff]
        %v3237 = vld [vmem:[%s24 + $0x60] sm:$0xff]
        %v3238 = vld [vmem:[%s24 + $0x68] sm:$0xff]
        %v3239 = vld [vmem:[%s24 + $0x70] sm:$0xff]
        %v3240 = vld [vmem:[%s24 + $0x78] sm:$0xff]
        %v3241 = vld [vmem:[%s24 + $0x80] sm:$0xff]
        %v3242 = vld [vmem:[%s24 + $0x88] sm:$0xff]
        %v3243 = vld [vmem:[%s24 + $0x90] sm:$0xff]
        %v3244 = vld [vmem:[%s24 + $0x98] sm:$0xff]
        %v3245 = vld [vmem:[%s24 + $0xa0] sm:$0xff]
        %v3246 = vld [vmem:[%s24 + $0xa8] sm:$0xff]
        %v3247 = vld [vmem:[%s24 + $0xb0] sm:$0xff]
        %v3248 = vld [vmem:[%s24 + $0xb8] sm:$0xff]
        %v3249 = vld [vmem:[%s24 + $0xc0] sm:$0xff]
        %v3250 = vld [vmem:[%s24 + $0xc8] sm:$0xff]
        %v3251 = vld [vmem:[%s24 + $0xd0] sm:$0xff]
        %v3252 = vld [vmem:[%s24 + $0xd8] sm:$0xff]
        %v3253 = vld [vmem:[%s24 + $0xe0] sm:$0xff]
        %v3254 = vld [vmem:[%s24 + $0xe8] sm:$0xff]
        %v3255 = vld [vmem:[%s24 + $0xf0] sm:$0xff]
        %v3256 = vld [vmem:[%s24 + $0xf8] sm:$0xff]
        %v3257 = vld [vmem:[%s25] sm:$0xff]
        %v3258 = vld [vmem:[%s25 + $0x8] sm:$0xff]
        %v3259 = vld [vmem:[%s26] sm:$0xf]
        %v3260 = vld [vmem:[%s26 + $0x4] sm:$0xf]
        %v3261 = vld [vmem:[%s26 + $0x8] sm:$0xf]
        %v3262 = vld [vmem:[%s26 + $0xc] sm:$0xf]
        %v3263 = vld [vmem:[%s26 + $0x10] sm:$0xf]
        %v3264 = vld [vmem:[%s26 + $0x14] sm:$0xf]
        %v3265 = vld [vmem:[%s26 + $0x18] sm:$0xf]
        %v3266 = vld [vmem:[%s26 + $0x1c] sm:$0xf]
        %v3267 = vld [vmem:[%s26 + $0x20] sm:$0xf]
        %v3268 = vld [vmem:[%s26 + $0x24] sm:$0xf]
        %v3269 = vld [vmem:[%s26 + $0x28] sm:$0xf]
        %v3270 = vld [vmem:[%s26 + $0x2c] sm:$0xf]
        %v3271 = vld [vmem:[%s26 + $0x30] sm:$0xf]
        %v3272 = vld [vmem:[%s26 + $0x34] sm:$0xf]
        %v3273 = vld [vmem:[%s26 + $0x38] sm:$0xf]
        %v3274 = vld [vmem:[%s26 + $0x3c] sm:$0xf]
        %v3275 = vld [vmem:[%s26 + $0x40] sm:$0xf]
        %v3276 = vld [vmem:[%s26 + $0x44] sm:$0xf]
        %v3277 = vld [vmem:[%s26 + $0x48] sm:$0xf]
        %v3278 = vld [vmem:[%s26 + $0x4c] sm:$0xf]
        %v3279 = vld [vmem:[%s26 + $0x50] sm:$0xf]
        %v3280 = vld [vmem:[%s26 + $0x54] sm:$0xf]
        %v3281 = vld [vmem:[%s26 + $0x58] sm:$0xf]
        %v3282 = vld [vmem:[%s26 + $0x5c] sm:$0xf]
        %v3283 = vld [vmem:[%s26 + $0x60] sm:$0xf]
        %v3284 = vld [vmem:[%s26 + $0x64] sm:$0xf]
        %v3285 = vld [vmem:[%s26 + $0x68] sm:$0xf]
        %v3286 = vld [vmem:[%s26 + $0x6c] sm:$0xf]
        %v3287 = vld [vmem:[%s26 + $0x70] sm:$0xf]
        %v3288 = vld [vmem:[%s26 + $0x74] sm:$0xf]
        %v3289 = vld [vmem:[%s26 + $0x78] sm:$0xf]
        %v3290 = vld [vmem:[%s26 + $0x7c] sm:$0xf]
        %v3291 = vld [vmem:[%s26 + $0x80] sm:$0xf]
        %v3292 = vld [vmem:[%s26 + $0x84] sm:$0xf]
        %v3293 = vld [vmem:[%s26 + $0x88] sm:$0xf]
        %v3294 = vld [vmem:[%s26 + $0x8c] sm:$0xf]
        %v3295 = vld [vmem:[%s26 + $0x90] sm:$0xf]
        %v3296 = vld [vmem:[%s26 + $0x94] sm:$0xf]
        %v3297 = vld [vmem:[%s26 + $0x98] sm:$0xf]
        %v3298 = vld [vmem:[%s26 + $0x9c] sm:$0xf]
        %v3299 = vld [vmem:[%s26 + $0xa0] sm:$0xf]
        %v3300 = vld [vmem:[%s26 + $0xa4] sm:$0xf]
        %v3301 = vld [vmem:[%s26 + $0xa8] sm:$0xf]
        %v3302 = vld [vmem:[%s26 + $0xac] sm:$0xf]
        %v3303 = vld [vmem:[%s26 + $0xb0] sm:$0xf]
        %v3304 = vld [vmem:[%s26 + $0xb4] sm:$0xf]
        %v3305 = vld [vmem:[%s26 + $0xb8] sm:$0xf]
        %v3306 = vld [vmem:[%s26 + $0xbc] sm:$0xf]
        %v3307 = vld [vmem:[%s26 + $0xc0] sm:$0xf]
        %v3308 = vld [vmem:[%s26 + $0xc4] sm:$0xf]
        %v3309 = vld [vmem:[%s26 + $0xc8] sm:$0xf]
        %v3310 = vld [vmem:[%s26 + $0xcc] sm:$0xf]
        %v3311 = vld [vmem:[%s26 + $0xd0] sm:$0xf]
        %v3312 = vld [vmem:[%s26 + $0xd4] sm:$0xf]
        %v3313 = vld [vmem:[%s26 + $0xd8] sm:$0xf]
        %v3314 = vld [vmem:[%s26 + $0xdc] sm:$0xf]
        %v3315 = vld [vmem:[%s26 + $0xe0] sm:$0xf]
        %v3316 = vld [vmem:[%s26 + $0xe4] sm:$0xf]
        %v3317 = vld [vmem:[%s26 + $0xe8] sm:$0xf]
        %v3318 = vld [vmem:[%s26 + $0xec] sm:$0xf]
        %v3319 = vld [vmem:[%s26 + $0xf0] sm:$0xf]
        %v3320 = vld [vmem:[%s26 + $0xf4] sm:$0xf]
        %v3321 = vld [vmem:[%s26 + $0xf8] sm:$0xf]
        %v3322 = vld [vmem:[%s26 + $0xfc] sm:$0xf]
        %v3323 = vld [vmem:[%s26 + $0x100] sm:$0xf]
        %v3324 = vld [vmem:[%s26 + $0x104] sm:$0xf]
        %v3325 = vld [vmem:[%s26 + $0x108] sm:$0xf]
        %v3326 = vld [vmem:[%s26 + $0x10c] sm:$0xf]
        %v3327 = vld [vmem:[%s26 + $0x110] sm:$0xf]
        %v3328 = vld [vmem:[%s26 + $0x114] sm:$0xf]
        %v3329 = vld [vmem:[%s26 + $0x118] sm:$0xf]
        %v3330 = vld [vmem:[%s26 + $0x11c] sm:$0xf]
        %v3331 = vld [vmem:[%s26 + $0x120] sm:$0xf]
        %v3332 = vld [vmem:[%s26 + $0x124] sm:$0xf]
        %v3333 = vld [vmem:[%s26 + $0x128] sm:$0xf]
        %v3334 = vld [vmem:[%s26 + $0x12c] sm:$0xf]
        %v3335 = vld [vmem:[%s26 + $0x130] sm:$0xf]
        %v3336 = vld [vmem:[%s26 + $0x134] sm:$0xf]
        %v3337 = vld [vmem:[%s26 + $0x138] sm:$0xf]
        %v3338 = vld [vmem:[%s26 + $0x13c] sm:$0xf]
        %v3339 = vld [vmem:[%s26 + $0x140] sm:$0xf]
        %v3340 = vld [vmem:[%s26 + $0x144] sm:$0xf]
        %v3341 = vld [vmem:[%s26 + $0x148] sm:$0xf]
        %v3342 = vld [vmem:[%s26 + $0x14c] sm:$0xf]
        %v3343 = vld [vmem:[%s26 + $0x150] sm:$0xf]
        %v3344 = vld [vmem:[%s26 + $0x154] sm:$0xf]
        %v3345 = vld [vmem:[%s26 + $0x158] sm:$0xf]
        %v3346 = vld [vmem:[%s26 + $0x15c] sm:$0xf]
        %v3347 = vld [vmem:[%s26 + $0x160] sm:$0xf]
        %v3348 = vld [vmem:[%s26 + $0x164] sm:$0xf]
        %v3349 = vld [vmem:[%s26 + $0x168] sm:$0xf]
        %v3350 = vld [vmem:[%s26 + $0x16c] sm:$0xf]
        %v3351 = vld [vmem:[%s26 + $0x170] sm:$0xf]
        %v3352 = vld [vmem:[%s26 + $0x174] sm:$0xf]
        %v3353 = vld [vmem:[%s26 + $0x178] sm:$0xf]
        %v3354 = vld [vmem:[%s26 + $0x17c] sm:$0xf]
        %v3355 = vld [vmem:[%s26 + $0x180] sm:$0xf]
        %v3356 = vld [vmem:[%s26 + $0x184] sm:$0xf]
        %v3357 = vld [vmem:[%s26 + $0x188] sm:$0xf]
        %v3358 = vld [vmem:[%s26 + $0x18c] sm:$0xf]
        %v3359 = vld [vmem:[%s26 + $0x190] sm:$0xf]
        %v3360 = vld [vmem:[%s26 + $0x194] sm:$0xf]
        %v3361 = vld [vmem:[%s26 + $0x198] sm:$0xf]
        %v3362 = vld [vmem:[%s26 + $0x19c] sm:$0xf]
        %v3363 = vld [vmem:[%s26 + $0x1a0] sm:$0xf]
        %v3364 = vld [vmem:[%s26 + $0x1a4] sm:$0xf]
        %v3365 = vld [vmem:[%s26 + $0x1a8] sm:$0xf]
        %v3366 = vld [vmem:[%s26 + $0x1ac] sm:$0xf]
        %v3367 = vld [vmem:[%s26 + $0x1b0] sm:$0xf]
        %v3368 = vld [vmem:[%s26 + $0x1b4] sm:$0xf]
        %v3369 = vld [vmem:[%s26 + $0x1b8] sm:$0xf]
        %v3370 = vld [vmem:[%s26 + $0x1bc] sm:$0xf]
        %v3371 = vld [vmem:[%s26 + $0x1c0] sm:$0xf]
        %v3372 = vld [vmem:[%s26 + $0x1c4] sm:$0xf]
        %v3373 = vld [vmem:[%s26 + $0x1c8] sm:$0xf]
        %v3374 = vld [vmem:[%s26 + $0x1cc] sm:$0xf]
        %v3375 = vld [vmem:[%s26 + $0x1d0] sm:$0xf]
        %v3376 = vld [vmem:[%s26 + $0x1d4] sm:$0xf]
        %v3377 = vld [vmem:[%s26 + $0x1d8] sm:$0xf]
        %v3378 = vld [vmem:[%s26 + $0x1dc] sm:$0xf]
        %v3379 = vld [vmem:[%s26 + $0x1e0] sm:$0xf]
        %v3380 = vld [vmem:[%s26 + $0x1e4] sm:$0xf]
        %v3381 = vld [vmem:[%s26 + $0x1e8] sm:$0xf]
        %v3382 = vld [vmem:[%s26 + $0x1ec] sm:$0xf]
        %v3383 = vld [vmem:[%s26 + $0x1f0] sm:$0xf]
        %v3384 = vld [vmem:[%s26 + $0x1f4] sm:$0xf]
        %v3385 = vld [vmem:[%s26 + $0x1f8] sm:$0xf]
        %v3386 = vld [vmem:[%s26 + $0x1fc] sm:$0xf]
        %v3387 = vld [vmem:[%s26 + $0x200] sm:$0xf]
        %v3388 = vld [vmem:[%s26 + $0x204] sm:$0xf]
        %v3389 = vld [vmem:[%s26 + $0x208] sm:$0xf]
        %v3390 = vld [vmem:[%s26 + $0x20c] sm:$0xf]
        %v3391 = vld [vmem:[%s26 + $0x210] sm:$0xf]
        %v3392 = vld [vmem:[%s26 + $0x214] sm:$0xf]
        %v3393 = vld [vmem:[%s26 + $0x218] sm:$0xf]
        %v3394 = vld [vmem:[%s26 + $0x21c] sm:$0xf]
        %v3395 = vld [vmem:[%s26 + $0x220] sm:$0xf]
        %v3396 = vld [vmem:[%s26 + $0x224] sm:$0xf]
        %v3397 = vld [vmem:[%s26 + $0x228] sm:$0xf]
        %v3398 = vld [vmem:[%s26 + $0x22c] sm:$0xf]
        %v3399 = vld [vmem:[%s26 + $0x230] sm:$0xf]
        %v3400 = vld [vmem:[%s26 + $0x234] sm:$0xf]
        %v3401 = vld [vmem:[%s26 + $0x238] sm:$0xf]
        %v3402 = vld [vmem:[%s26 + $0x23c] sm:$0xf]
        %v3403 = vld [vmem:[%s26 + $0x240] sm:$0xf]
        %v3404 = vld [vmem:[%s26 + $0x244] sm:$0xf]
        %v3405 = vld [vmem:[%s26 + $0x248] sm:$0xf]
        %v3406 = vld [vmem:[%s26 + $0x24c] sm:$0xf]
        %v3407 = vld [vmem:[%s26 + $0x250] sm:$0xf]
        %v3408 = vld [vmem:[%s26 + $0x254] sm:$0xf]
        %v3409 = vld [vmem:[%s26 + $0x258] sm:$0xf]
        %v3410 = vld [vmem:[%s26 + $0x25c] sm:$0xf]
        %v3411 = vld [vmem:[%s26 + $0x260] sm:$0xf]
        %v3412 = vld [vmem:[%s26 + $0x264] sm:$0xf]
        %v3413 = vld [vmem:[%s26 + $0x268] sm:$0xf]
        %v3414 = vld [vmem:[%s26 + $0x26c] sm:$0xf]
        %v3415 = vld [vmem:[%s26 + $0x270] sm:$0xf]
        %v3416 = vld [vmem:[%s26 + $0x274] sm:$0xf]
        %v3417 = vld [vmem:[%s26 + $0x278] sm:$0xf]
        %v3418 = vld [vmem:[%s26 + $0x27c] sm:$0xf]
        %v3419 = vld [vmem:[%s26 + $0x280] sm:$0xf]
        %v3420 = vld [vmem:[%s26 + $0x284] sm:$0xf]
        %v3421 = vld [vmem:[%s26 + $0x288] sm:$0xf]
        %v3422 = vld [vmem:[%s26 + $0x28c] sm:$0xf]
        %v3423 = vld [vmem:[%s26 + $0x290] sm:$0xf]
        %v3424 = vld [vmem:[%s26 + $0x294] sm:$0xf]
        %v3425 = vld [vmem:[%s26 + $0x298] sm:$0xf]
        %v3426 = vld [vmem:[%s26 + $0x29c] sm:$0xf]
        %v3427 = vld [vmem:[%s26 + $0x2a0] sm:$0xf]
        %v3428 = vld [vmem:[%s26 + $0x2a4] sm:$0xf]
        %v3429 = vld [vmem:[%s26 + $0x2a8] sm:$0xf]
        %v3430 = vld [vmem:[%s26 + $0x2ac] sm:$0xf]
        %v3431 = vld [vmem:[%s26 + $0x2b0] sm:$0xf]
        %v3432 = vld [vmem:[%s26 + $0x2b4] sm:$0xf]
        %v3433 = vld [vmem:[%s26 + $0x2b8] sm:$0xf]
        %v3434 = vld [vmem:[%s26 + $0x2bc] sm:$0xf]
        %v3435 = vld [vmem:[%s26 + $0x2c0] sm:$0xf]
        %v3436 = vld [vmem:[%s26 + $0x2c4] sm:$0xf]
        %v3437 = vld [vmem:[%s26 + $0x2c8] sm:$0xf]
        %v3438 = vld [vmem:[%s26 + $0x2cc] sm:$0xf]
        %v3439 = vld [vmem:[%s26 + $0x2d0] sm:$0xf]
        %v3440 = vld [vmem:[%s26 + $0x2d4] sm:$0xf]
        %v3441 = vld [vmem:[%s26 + $0x2d8] sm:$0xf]
        %v3442 = vld [vmem:[%s26 + $0x2dc] sm:$0xf]
        %v3443 = vld [vmem:[%s26 + $0x2e0] sm:$0xf]
        %v3444 = vld [vmem:[%s26 + $0x2e4] sm:$0xf]
        %v3445 = vld [vmem:[%s26 + $0x2e8] sm:$0xf]
        %v3446 = vld [vmem:[%s26 + $0x2ec] sm:$0xf]
        %v3447 = vld [vmem:[%s26 + $0x2f0] sm:$0xf]
        %v3448 = vld [vmem:[%s26 + $0x2f4] sm:$0xf]
        %v3449 = vld [vmem:[%s26 + $0x2f8] sm:$0xf]
        %v3450 = vld [vmem:[%s26 + $0x2fc] sm:$0xf]
        %v3451 = vld [vmem:[%s26 + $0x300] sm:$0xf]
        %v3452 = vld [vmem:[%s26 + $0x304] sm:$0xf]
        %v3453 = vld [vmem:[%s26 + $0x308] sm:$0xf]
        %v3454 = vld [vmem:[%s26 + $0x30c] sm:$0xf]
        %v3455 = vld [vmem:[%s26 + $0x310] sm:$0xf]
        %v3456 = vld [vmem:[%s26 + $0x314] sm:$0xf]
        %v3457 = vld [vmem:[%s26 + $0x318] sm:$0xf]
        %v3458 = vld [vmem:[%s26 + $0x31c] sm:$0xf]
        %v3459 = vld [vmem:[%s26 + $0x320] sm:$0xf]
        %v3460 = vld [vmem:[%s26 + $0x324] sm:$0xf]
        %v3461 = vld [vmem:[%s26 + $0x328] sm:$0xf]
        %v3462 = vld [vmem:[%s26 + $0x32c] sm:$0xf]
        %v3463 = vld [vmem:[%s26 + $0x330] sm:$0xf]
        %v3464 = vld [vmem:[%s26 + $0x334] sm:$0xf]
        %v3465 = vld [vmem:[%s26 + $0x338] sm:$0xf]
        %v3466 = vld [vmem:[%s26 + $0x33c] sm:$0xf]
        %v3467 = vld [vmem:[%s26 + $0x340] sm:$0xf]
        %v3468 = vld [vmem:[%s26 + $0x344] sm:$0xf]
        %v3469 = vld [vmem:[%s26 + $0x348] sm:$0xf]
        %v3470 = vld [vmem:[%s26 + $0x34c] sm:$0xf]
        %v3471 = vld [vmem:[%s26 + $0x350] sm:$0xf]
        %v3472 = vld [vmem:[%s26 + $0x354] sm:$0xf]
        %v3473 = vld [vmem:[%s26 + $0x358] sm:$0xf]
        %v3474 = vld [vmem:[%s26 + $0x35c] sm:$0xf]
        %v3475 = vld [vmem:[%s26 + $0x360] sm:$0xf]
        %v3476 = vld [vmem:[%s26 + $0x364] sm:$0xf]
        %v3477 = vld [vmem:[%s26 + $0x368] sm:$0xf]
        %v3478 = vld [vmem:[%s26 + $0x36c] sm:$0xf]
        %v3479 = vld [vmem:[%s26 + $0x370] sm:$0xf]
        %v3480 = vld [vmem:[%s26 + $0x374] sm:$0xf]
        %v3481 = vld [vmem:[%s26 + $0x378] sm:$0xf]
        %v3482 = vld [vmem:[%s26 + $0x37c] sm:$0xf]
        %v3483 = vld [vmem:[%s26 + $0x380] sm:$0xf]
        %v3484 = vld [vmem:[%s26 + $0x384] sm:$0xf]
        %v3485 = vld [vmem:[%s26 + $0x388] sm:$0xf]
        %v3486 = vld [vmem:[%s26 + $0x38c] sm:$0xf]
        %v3487 = vld [vmem:[%s26 + $0x390] sm:$0xf]
        %v3488 = vld [vmem:[%s26 + $0x394] sm:$0xf]
        %v3489 = vld [vmem:[%s26 + $0x398] sm:$0xf]
        %v3490 = vld [vmem:[%s26 + $0x39c] sm:$0xf]
        %v3491 = vld [vmem:[%s26 + $0x3a0] sm:$0xf]
        %v3492 = vld [vmem:[%s26 + $0x3a4] sm:$0xf]
        %v3493 = vld [vmem:[%s26 + $0x3a8] sm:$0xf]
        %v3494 = vld [vmem:[%s26 + $0x3ac] sm:$0xf]
        %v3495 = vld [vmem:[%s26 + $0x3b0] sm:$0xf]
        %v3496 = vld [vmem:[%s26 + $0x3b4] sm:$0xf]
        %v3497 = vld [vmem:[%s26 + $0x3b8] sm:$0xf]
        %v3498 = vld [vmem:[%s26 + $0x3bc] sm:$0xf]
        %v3499 = vld [vmem:[%s26 + $0x3c0] sm:$0xf]
        %v3500 = vld [vmem:[%s26 + $0x3c4] sm:$0xf]
        %v3501 = vld [vmem:[%s26 + $0x3c8] sm:$0xf]
        %v3502 = vld [vmem:[%s26 + $0x3cc] sm:$0xf]
        %v3503 = vld [vmem:[%s26 + $0x3d0] sm:$0xf]
        %v3504 = vld [vmem:[%s26 + $0x3d4] sm:$0xf]
        %v3505 = vld [vmem:[%s26 + $0x3d8] sm:$0xf]
        %v3506 = vld [vmem:[%s26 + $0x3dc] sm:$0xf]
        %v3507 = vld [vmem:[%s26 + $0x3e0] sm:$0xf]
        %v3508 = vld [vmem:[%s26 + $0x3e4] sm:$0xf]
        %v3509 = vld [vmem:[%s26 + $0x3e8] sm:$0xf]
        %v3510 = vld [vmem:[%s26 + $0x3ec] sm:$0xf]
        %v3511 = vld [vmem:[%s26 + $0x3f0] sm:$0xf]
        %v3512 = vld [vmem:[%s26 + $0x3f4] sm:$0xf]
        %v3513 = vld [vmem:[%s26 + $0x3f8] sm:$0xf]
        %v3514 = vld [vmem:[%s26 + $0x3fc] sm:$0xf]
        %v3515 = vld [vmem:[%s27] sm:$0x1]
        %v3516 = vpack.c.bf16 %v3224, %v3224
        %v3519 = vperm.slane %v3257, 0
        %v3520 = vperm.slane %v3257, 1
        %v3521 = vperm.slane %v3257, 2
        %v3522 = vperm.slane %v3257, 3
        %v3523 = vperm.slane %v3257, 4
        %v3524 = vperm.slane %v3257, 5
        %v3525 = vperm.slane %v3257, 6
        %v3526 = vperm.slane %v3257, 7
        %v3527 = vperm.slane %v3258, 0
        %v3528 = vperm.slane %v3258, 1
        %v3529 = vperm.slane %v3258, 2
        %v3530 = vperm.slane %v3258, 3
        %v3531 = vperm.slane %v3258, 4
        %v3532 = vperm.slane %v3258, 5
        %v3533 = vperm.slane %v3258, 6
        %v3534 = vperm.slane %v3258, 7
        %v3583 = vunpack.c.l.b16 %v3225
        %v3584 = vunpack.c.h.b16 %v3225
        %v3585 = vunpack.c.l.b16 %v3226
        %v3586 = vunpack.c.h.b16 %v3226
        %v3587 = vunpack.c.l.b16 %v3227
        %v3588 = vunpack.c.h.b16 %v3227
        %v3589 = vunpack.c.l.b16 %v3228
        %v3590 = vunpack.c.h.b16 %v3228
        %v3591 = vunpack.c.l.b16 %v3229
        %v3592 = vunpack.c.h.b16 %v3229
        %v3593 = vunpack.c.l.b16 %v3230
        %v3594 = vunpack.c.h.b16 %v3230
        %v3595 = vunpack.c.l.b16 %v3231
        %v3596 = vunpack.c.h.b16 %v3231
        %v3597 = vunpack.c.l.b16 %v3232
        %v3598 = vunpack.c.h.b16 %v3232
        %v3599 = vunpack.c.l.b16 %v3233
        %v3600 = vunpack.c.h.b16 %v3233
        %v3601 = vunpack.c.l.b16 %v3234
        %v3602 = vunpack.c.h.b16 %v3234
        %v3603 = vunpack.c.l.b16 %v3235
        %v3604 = vunpack.c.h.b16 %v3235
        %v3605 = vunpack.c.l.b16 %v3236
        %v3606 = vunpack.c.h.b16 %v3236
        %v3607 = vunpack.c.l.b16 %v3237
        %v3608 = vunpack.c.h.b16 %v3237
        %v3609 = vunpack.c.l.b16 %v3238
        %v3610 = vunpack.c.h.b16 %v3238
        %v3611 = vunpack.c.l.b16 %v3239
        %v3612 = vunpack.c.h.b16 %v3239
        %v3613 = vunpack.c.l.b16 %v3240
        %v3614 = vunpack.c.h.b16 %v3240
        %v3615 = vunpack.c.l.b16 %v3241
        %v3616 = vunpack.c.h.b16 %v3241
        %v3617 = vunpack.c.l.b16 %v3242
        %v3618 = vunpack.c.h.b16 %v3242
        %v3619 = vunpack.c.l.b16 %v3243
        %v3620 = vunpack.c.h.b16 %v3243
        %v3621 = vunpack.c.l.b16 %v3244
        %v3622 = vunpack.c.h.b16 %v3244
        %v3623 = vunpack.c.l.b16 %v3245
        %v3624 = vunpack.c.h.b16 %v3245
        %v3625 = vunpack.c.l.b16 %v3246
        %v3626 = vunpack.c.h.b16 %v3246
        %v3627 = vunpack.c.l.b16 %v3247
        %v3628 = vunpack.c.h.b16 %v3247
        %v3629 = vunpack.c.l.b16 %v3248
        %v3630 = vunpack.c.h.b16 %v3248
        %v3631 = vunpack.c.l.b16 %v3249
        %v3632 = vunpack.c.h.b16 %v3249
        %v3633 = vunpack.c.l.b16 %v3250
        %v3634 = vunpack.c.h.b16 %v3250
        %v3635 = vunpack.c.l.b16 %v3251
        %v3636 = vunpack.c.h.b16 %v3251
        %v3637 = vunpack.c.l.b16 %v3252
        %v3638 = vunpack.c.h.b16 %v3252
        %v3639 = vunpack.c.l.b16 %v3253
        %v3640 = vunpack.c.h.b16 %v3253
        %v3641 = vunpack.c.l.b16 %v3254
        %v3642 = vunpack.c.h.b16 %v3254
        %v3643 = vunpack.c.l.b16 %v3255
        %v3644 = vunpack.c.h.b16 %v3255
        %v3645 = vunpack.c.l.b16 %v3256
        %v3646 = vunpack.c.h.b16 %v3256
        %v3647 = vpack.c.b16 %v3599, %v3583
        %v3648 = vpack.c.b16 %v3600, %v3584
        %v3649 = vpack.c.b16 %v3601, %v3585
        %v3650 = vpack.c.b16 %v3602, %v3586
        %v3651 = vpack.c.b16 %v3603, %v3587
        %v3652 = vpack.c.b16 %v3604, %v3588
        %v3653 = vpack.c.b16 %v3605, %v3589
        %v3654 = vpack.c.b16 %v3606, %v3590
        %v3655 = vpack.c.b16 %v3607, %v3591
        %v3656 = vpack.c.b16 %v3608, %v3592
        %v3657 = vpack.c.b16 %v3609, %v3593
        %v3658 = vpack.c.b16 %v3610, %v3594
        %v3659 = vpack.c.b16 %v3611, %v3595
        %v3660 = vpack.c.b16 %v3612, %v3596
        %v3661 = vpack.c.b16 %v3613, %v3597
        %v3662 = vpack.c.b16 %v3614, %v3598
        %v3663 = vpack.c.b16 %v3631, %v3615
        %v3664 = vpack.c.b16 %v3632, %v3616
        %v3665 = vpack.c.b16 %v3633, %v3617
        %v3666 = vpack.c.b16 %v3634, %v3618
        %v3667 = vpack.c.b16 %v3635, %v3619
        %v3668 = vpack.c.b16 %v3636, %v3620
        %v3669 = vpack.c.b16 %v3637, %v3621
        %v3670 = vpack.c.b16 %v3638, %v3622
        %v3671 = vpack.c.b16 %v3639, %v3623
        %v3672 = vpack.c.b16 %v3640, %v3624
        %v3673 = vpack.c.b16 %v3641, %v3625
        %v3674 = vpack.c.b16 %v3642, %v3626
        %v3675 = vpack.c.b16 %v3643, %v3627
        %v3676 = vpack.c.b16 %v3644, %v3628
        %v3677 = vpack.c.b16 %v3645, %v3629
        %v3678 = vpack.c.b16 %v3646, %v3630
        %v3712 = vsel %vm929, %v3516, 0
        %3714 = vmatpush.bf16.msra.mxu0 0
        %3715 = vmatpush.bf16.msra.mxu0 0
        %3716 = vmatpush.bf16.msra.mxu0 0
        %3717 = vmatpush.bf16.msra.mxu0 0
        %3718 = vmatpush.bf16.msra.mxu0 0
        %3719 = vmatpush.bf16.msra.mxu0 0
        %3720 = vmatpush.bf16.msra.mxu0 %v3663
        %3721 = vmatpush.bf16.msra.mxu0 %v3647
        %3722 = vmatmul.bf16.gmra.mxu0 %v3712
        %v3723 = vpop.f32.mrf.mxu0
        %v3724 = vadd.f32 %v3519, %v3723
        %v3725 = vpop.f32.mrf.mxu0
        %3726 = vdwg.mxu0
        %3727 = vmatpush.bf16.msra.mxu0 0
        %3728 = vmatpush.bf16.msra.mxu0 0
        %3729 = vmatpush.bf16.msra.mxu0 0
        %3730 = vmatpush.bf16.msra.mxu0 0
        %3731 = vmatpush.bf16.msra.mxu0 0
        %3732 = vmatpush.bf16.msra.mxu0 0
        %3733 = vmatpush.bf16.msra.mxu0 %v3664
        %3734 = vmatpush.bf16.msra.mxu0 %v3648
        %3735 = vmatmul.bf16.gmra.mxu0 %v3712
        %v3736 = vpop.f32.mrf.mxu0
        %v3737 = vadd.f32 %v3520, %v3736
        %v3738 = vpop.f32.mrf.mxu0
        %3739 = vdwg.mxu0
        %3740 = vmatpush.bf16.msra.mxu0 0
        %3741 = vmatpush.bf16.msra.mxu0 0
        %3742 = vmatpush.bf16.msra.mxu0 0
        %3743 = vmatpush.bf16.msra.mxu0 0
        %3744 = vmatpush.bf16.msra.mxu0 0
        %3745 = vmatpush.bf16.msra.mxu0 0
        %3746 = vmatpush.bf16.msra.mxu0 %v3665
        %3747 = vmatpush.bf16.msra.mxu0 %v3649
        %3748 = vmatmul.bf16.gmra.mxu0 %v3712
        %v3749 = vpop.f32.mrf.mxu0
        %v3750 = vadd.f32 %v3521, %v3749
        %v3751 = vpop.f32.mrf.mxu0
        %3752 = vdwg.mxu0
        %3753 = vmatpush.bf16.msra.mxu0 0
        %3754 = vmatpush.bf16.msra.mxu0 0
        %3755 = vmatpush.bf16.msra.mxu0 0
        %3756 = vmatpush.bf16.msra.mxu0 0
        %3757 = vmatpush.bf16.msra.mxu0 0
        %3758 = vmatpush.bf16.msra.mxu0 0
        %3759 = vmatpush.bf16.msra.mxu0 %v3666
        %3760 = vmatpush.bf16.msra.mxu0 %v3650
        %3761 = vmatmul.bf16.gmra.mxu0 %v3712
        %v3762 = vpop.f32.mrf.mxu0
        %v3763 = vadd.f32 %v3522, %v3762
        %v3764 = vpop.f32.mrf.mxu0
        %3765 = vdwg.mxu0
        %3766 = vmatpush.bf16.msra.mxu0 0
        %3767 = vmatpush.bf16.msra.mxu0 0
        %3768 = vmatpush.bf16.msra.mxu0 0
        %3769 = vmatpush.bf16.msra.mxu0 0
        %3770 = vmatpush.bf16.msra.mxu0 0
        %3771 = vmatpush.bf16.msra.mxu0 0
        %3772 = vmatpush.bf16.msra.mxu0 %v3667
        %3773 = vmatpush.bf16.msra.mxu0 %v3651
        %3774 = vmatmul.bf16.gmra.mxu0 %v3712
        %v3775 = vpop.f32.mrf.mxu0
        %v3776 = vadd.f32 %v3523, %v3775
        %v3777 = vpop.f32.mrf.mxu0
        %3778 = vdwg.mxu0
        %3779 = vmatpush.bf16.msra.mxu0 0
        %3780 = vmatpush.bf16.msra.mxu0 0
        %3781 = vmatpush.bf16.msra.mxu0 0
        %3782 = vmatpush.bf16.msra.mxu0 0
        %3783 = vmatpush.bf16.msra.mxu0 0
        %3784 = vmatpush.bf16.msra.mxu0 0
        %3785 = vmatpush.bf16.msra.mxu0 %v3668
        %3786 = vmatpush.bf16.msra.mxu0 %v3652
        %3787 = vmatmul.bf16.gmra.mxu0 %v3712
        %v3788 = vpop.f32.mrf.mxu0
        %v3789 = vadd.f32 %v3524, %v3788
        %v3790 = vpop.f32.mrf.mxu0
        %3791 = vdwg.mxu0
        %3792 = vmatpush.bf16.msra.mxu0 0
        %3793 = vmatpush.bf16.msra.mxu0 0
        %3794 = vmatpush.bf16.msra.mxu0 0
        %3795 = vmatpush.bf16.msra.mxu0 0
        %3796 = vmatpush.bf16.msra.mxu0 0
        %3797 = vmatpush.bf16.msra.mxu0 0
        %3798 = vmatpush.bf16.msra.mxu0 %v3669
        %3799 = vmatpush.bf16.msra.mxu0 %v3653
        %3800 = vmatmul.bf16.gmra.mxu0 %v3712
        %v3801 = vpop.f32.mrf.mxu0
        %v3802 = vadd.f32 %v3525, %v3801
        %v3803 = vpop.f32.mrf.mxu0
        %3804 = vdwg.mxu0
        %3805 = vmatpush.bf16.msra.mxu0 0
        %3806 = vmatpush.bf16.msra.mxu0 0
        %3807 = vmatpush.bf16.msra.mxu0 0
        %3808 = vmatpush.bf16.msra.mxu0 0
        %3809 = vmatpush.bf16.msra.mxu0 0
        %3810 = vmatpush.bf16.msra.mxu0 0
        %3811 = vmatpush.bf16.msra.mxu0 %v3670
        %3812 = vmatpush.bf16.msra.mxu0 %v3654
        %3813 = vmatmul.bf16.gmra.mxu0 %v3712
        %v3814 = vpop.f32.mrf.mxu0
        %v3815 = vadd.f32 %v3526, %v3814
        %v3816 = vpop.f32.mrf.mxu0
        %3817 = vdwg.mxu0
        %3818 = vmatpush.bf16.msra.mxu0 0
        %3819 = vmatpush.bf16.msra.mxu0 0
        %3820 = vmatpush.bf16.msra.mxu0 0
        %3821 = vmatpush.bf16.msra.mxu0 0
        %3822 = vmatpush.bf16.msra.mxu0 0
        %3823 = vmatpush.bf16.msra.mxu0 0
        %3824 = vmatpush.bf16.msra.mxu0 %v3671
        %3825 = vmatpush.bf16.msra.mxu0 %v3655
        %3826 = vmatmul.bf16.gmra.mxu0 %v3712
        %v3827 = vpop.f32.mrf.mxu0
        %v3828 = vadd.f32 %v3527, %v3827
        %v3829 = vpop.f32.mrf.mxu0
        %3830 = vdwg.mxu0
        %3831 = vmatpush.bf16.msra.mxu0 0
        %3832 = vmatpush.bf16.msra.mxu0 0
        %3833 = vmatpush.bf16.msra.mxu0 0
        %3834 = vmatpush.bf16.msra.mxu0 0
        %3835 = vmatpush.bf16.msra.mxu0 0
        %3836 = vmatpush.bf16.msra.mxu0 0
        %3837 = vmatpush.bf16.msra.mxu0 %v3672
        %3838 = vmatpush.bf16.msra.mxu0 %v3656
        %3839 = vmatmul.bf16.gmra.mxu0 %v3712
        %v3840 = vpop.f32.mrf.mxu0
        %v3841 = vadd.f32 %v3528, %v3840
        %v3842 = vpop.f32.mrf.mxu0
        %3843 = vdwg.mxu0
        %3844 = vmatpush.bf16.msra.mxu0 0
        %3845 = vmatpush.bf16.msra.mxu0 0
        %3846 = vmatpush.bf16.msra.mxu0 0
        %3847 = vmatpush.bf16.msra.mxu0 0
        %3848 = vmatpush.bf16.msra.mxu0 0
        %3849 = vmatpush.bf16.msra.mxu0 0
        %3850 = vmatpush.bf16.msra.mxu0 %v3673
        %3851 = vmatpush.bf16.msra.mxu0 %v3657
        %3852 = vmatmul.bf16.gmra.mxu0 %v3712
        %v3853 = vpop.f32.mrf.mxu0
        %v3854 = vadd.f32 %v3529, %v3853
        %v3855 = vpop.f32.mrf.mxu0
        %3856 = vdwg.mxu0
        %3857 = vmatpush.bf16.msra.mxu0 0
        %3858 = vmatpush.bf16.msra.mxu0 0
        %3859 = vmatpush.bf16.msra.mxu0 0
        %3860 = vmatpush.bf16.msra.mxu0 0
        %3861 = vmatpush.bf16.msra.mxu0 0
        %3862 = vmatpush.bf16.msra.mxu0 0
        %3863 = vmatpush.bf16.msra.mxu0 %v3674
        %3864 = vmatpush.bf16.msra.mxu0 %v3658
        %3865 = vmatmul.bf16.gmra.mxu0 %v3712
        %v3866 = vpop.f32.mrf.mxu0
        %v3867 = vadd.f32 %v3530, %v3866
        %v3868 = vpop.f32.mrf.mxu0
        %3869 = vdwg.mxu0
        %3870 = vmatpush.bf16.msra.mxu0 0
        %3871 = vmatpush.bf16.msra.mxu0 0
        %3872 = vmatpush.bf16.msra.mxu0 0
        %3873 = vmatpush.bf16.msra.mxu0 0
        %3874 = vmatpush.bf16.msra.mxu0 0
        %3875 = vmatpush.bf16.msra.mxu0 0
        %3876 = vmatpush.bf16.msra.mxu0 %v3675
        %3877 = vmatpush.bf16.msra.mxu0 %v3659
        %3878 = vmatmul.bf16.gmra.mxu0 %v3712
        %v3879 = vpop.f32.mrf.mxu0
        %v3880 = vadd.f32 %v3531, %v3879
        %v3881 = vpop.f32.mrf.mxu0
        %3882 = vdwg.mxu0
        %3883 = vmatpush.bf16.msra.mxu0 0
        %3884 = vmatpush.bf16.msra.mxu0 0
        %3885 = vmatpush.bf16.msra.mxu0 0
        %3886 = vmatpush.bf16.msra.mxu0 0
        %3887 = vmatpush.bf16.msra.mxu0 0
        %3888 = vmatpush.bf16.msra.mxu0 0
        %3889 = vmatpush.bf16.msra.mxu0 %v3676
        %3890 = vmatpush.bf16.msra.mxu0 %v3660
        %3891 = vmatmul.bf16.gmra.mxu0 %v3712
        %v3892 = vpop.f32.mrf.mxu0
        %v3893 = vadd.f32 %v3532, %v3892
        %v3894 = vpop.f32.mrf.mxu0
        %3895 = vdwg.mxu0
        %3896 = vmatpush.bf16.msra.mxu0 0
        %3897 = vmatpush.bf16.msra.mxu0 0
        %3898 = vmatpush.bf16.msra.mxu0 0
        %3899 = vmatpush.bf16.msra.mxu0 0
        %3900 = vmatpush.bf16.msra.mxu0 0
        %3901 = vmatpush.bf16.msra.mxu0 0
        %3902 = vmatpush.bf16.msra.mxu0 %v3677
        %3903 = vmatpush.bf16.msra.mxu0 %v3661
        %3904 = vmatmul.bf16.gmra.mxu0 %v3712
        %v3905 = vpop.f32.mrf.mxu0
        %v3906 = vadd.f32 %v3533, %v3905
        %v3907 = vpop.f32.mrf.mxu0
        %3908 = vdwg.mxu0
        %3909 = vmatpush.bf16.msra.mxu0 0
        %3910 = vmatpush.bf16.msra.mxu0 0
        %3911 = vmatpush.bf16.msra.mxu0 0
        %3912 = vmatpush.bf16.msra.mxu0 0
        %3913 = vmatpush.bf16.msra.mxu0 0
        %3914 = vmatpush.bf16.msra.mxu0 0
        %3915 = vmatpush.bf16.msra.mxu0 %v3678
        %3916 = vmatpush.bf16.msra.mxu0 %v3662
        %3917 = vmatmul.bf16.gmra.mxu0 %v3712
        %v3918 = vpop.f32.mrf.mxu0
        %v3919 = vadd.f32 %v3534, %v3918
        %v3920 = vpop.f32.mrf.mxu0
        %3921 = vdwg.mxu0
        %v3922 = vmax.f32 %v3724, 0.0
        %v3923 = vmax.f32 %v3737, 0.0
        %v3924 = vmax.f32 %v3750, 0.0
        %v3925 = vmax.f32 %v3763, 0.0
        %v3926 = vmax.f32 %v3776, 0.0
        %v3927 = vmax.f32 %v3789, 0.0
        %v3928 = vmax.f32 %v3802, 0.0
        %v3929 = vmax.f32 %v3815, 0.0
        %v3930 = vmax.f32 %v3828, 0.0
        %v3931 = vmax.f32 %v3841, 0.0
        %v3932 = vmax.f32 %v3854, 0.0
        %v3933 = vmax.f32 %v3867, 0.0
        %v3934 = vmax.f32 %v3880, 0.0
        %v3935 = vmax.f32 %v3893, 0.0
        %v3936 = vmax.f32 %v3906, 0.0
        %v3937 = vmax.f32 %v3919, 0.0
        %v3938 = vpack.c.bf16 %v3922, %v3922
        %v3939 = vpack.c.bf16 %v3923, %v3923
        %v3940 = vpack.c.bf16 %v3924, %v3924
        %v3941 = vpack.c.bf16 %v3925, %v3925
        %v3942 = vpack.c.bf16 %v3926, %v3926
        %v3943 = vpack.c.bf16 %v3927, %v3927
        %v3944 = vpack.c.bf16 %v3928, %v3928
        %v3945 = vpack.c.bf16 %v3929, %v3929
        %v3946 = vpack.c.bf16 %v3930, %v3930
        %v3947 = vpack.c.bf16 %v3931, %v3931
        %v3948 = vpack.c.bf16 %v3932, %v3932
        %v3949 = vpack.c.bf16 %v3933, %v3933
        %v3950 = vpack.c.bf16 %v3934, %v3934
        %v3951 = vpack.c.bf16 %v3935, %v3935
        %v3952 = vpack.c.bf16 %v3936, %v3936
        %v3953 = vpack.c.bf16 %v3937, %v3937
        %v3955 = vperm.slane %v3515, 0
        %v4213 = vunpack.c.l.b16 %v3259
        %v4214 = vunpack.c.l.b16 %v3260
        %v4215 = vunpack.c.l.b16 %v3261
        %v4216 = vunpack.c.l.b16 %v3262
        %v4217 = vunpack.c.l.b16 %v3263
        %v4218 = vunpack.c.l.b16 %v3264
        %v4219 = vunpack.c.l.b16 %v3265
        %v4220 = vunpack.c.l.b16 %v3266
        %v4221 = vunpack.c.l.b16 %v3267
        %v4222 = vunpack.c.l.b16 %v3268
        %v4223 = vunpack.c.l.b16 %v3269
        %v4224 = vunpack.c.l.b16 %v3270
        %v4225 = vunpack.c.l.b16 %v3271
        %v4226 = vunpack.c.l.b16 %v3272
        %v4227 = vunpack.c.l.b16 %v3273
        %v4228 = vunpack.c.l.b16 %v3274
        %v4229 = vunpack.c.l.b16 %v3275
        %v4230 = vunpack.c.l.b16 %v3276
        %v4231 = vunpack.c.l.b16 %v3277
        %v4232 = vunpack.c.l.b16 %v3278
        %v4233 = vunpack.c.l.b16 %v3279
        %v4234 = vunpack.c.l.b16 %v3280
        %v4235 = vunpack.c.l.b16 %v3281
        %v4236 = vunpack.c.l.b16 %v3282
        %v4237 = vunpack.c.l.b16 %v3283
        %v4238 = vunpack.c.l.b16 %v3284
        %v4239 = vunpack.c.l.b16 %v3285
        %v4240 = vunpack.c.l.b16 %v3286
        %v4241 = vunpack.c.l.b16 %v3287
        %v4242 = vunpack.c.l.b16 %v3288
        %v4243 = vunpack.c.l.b16 %v3289
        %v4244 = vunpack.c.l.b16 %v3290
        %v4245 = vunpack.c.l.b16 %v3291
        %v4246 = vunpack.c.l.b16 %v3292
        %v4247 = vunpack.c.l.b16 %v3293
        %v4248 = vunpack.c.l.b16 %v3294
        %v4249 = vunpack.c.l.b16 %v3295
        %v4250 = vunpack.c.l.b16 %v3296
        %v4251 = vunpack.c.l.b16 %v3297
        %v4252 = vunpack.c.l.b16 %v3298
        %v4253 = vunpack.c.l.b16 %v3299
        %v4254 = vunpack.c.l.b16 %v3300
        %v4255 = vunpack.c.l.b16 %v3301
        %v4256 = vunpack.c.l.b16 %v3302
        %v4257 = vunpack.c.l.b16 %v3303
        %v4258 = vunpack.c.l.b16 %v3304
        %v4259 = vunpack.c.l.b16 %v3305
        %v4260 = vunpack.c.l.b16 %v3306
        %v4261 = vunpack.c.l.b16 %v3307
        %v4262 = vunpack.c.l.b16 %v3308
        %v4263 = vunpack.c.l.b16 %v3309
        %v4264 = vunpack.c.l.b16 %v3310
        %v4265 = vunpack.c.l.b16 %v3311
        %v4266 = vunpack.c.l.b16 %v3312
        %v4267 = vunpack.c.l.b16 %v3313
        %v4268 = vunpack.c.l.b16 %v3314
        %v4269 = vunpack.c.l.b16 %v3315
        %v4270 = vunpack.c.l.b16 %v3316
        %v4271 = vunpack.c.l.b16 %v3317
        %v4272 = vunpack.c.l.b16 %v3318
        %v4273 = vunpack.c.l.b16 %v3319
        %v4274 = vunpack.c.l.b16 %v3320
        %v4275 = vunpack.c.l.b16 %v3321
        %v4276 = vunpack.c.l.b16 %v3322
        %v4277 = vunpack.c.l.b16 %v3323
        %v4278 = vunpack.c.l.b16 %v3324
        %v4279 = vunpack.c.l.b16 %v3325
        %v4280 = vunpack.c.l.b16 %v3326
        %v4281 = vunpack.c.l.b16 %v3327
        %v4282 = vunpack.c.l.b16 %v3328
        %v4283 = vunpack.c.l.b16 %v3329
        %v4284 = vunpack.c.l.b16 %v3330
        %v4285 = vunpack.c.l.b16 %v3331
        %v4286 = vunpack.c.l.b16 %v3332
        %v4287 = vunpack.c.l.b16 %v3333
        %v4288 = vunpack.c.l.b16 %v3334
        %v4289 = vunpack.c.l.b16 %v3335
        %v4290 = vunpack.c.l.b16 %v3336
        %v4291 = vunpack.c.l.b16 %v3337
        %v4292 = vunpack.c.l.b16 %v3338
        %v4293 = vunpack.c.l.b16 %v3339
        %v4294 = vunpack.c.l.b16 %v3340
        %v4295 = vunpack.c.l.b16 %v3341
        %v4296 = vunpack.c.l.b16 %v3342
        %v4297 = vunpack.c.l.b16 %v3343
        %v4298 = vunpack.c.l.b16 %v3344
        %v4299 = vunpack.c.l.b16 %v3345
        %v4300 = vunpack.c.l.b16 %v3346
        %v4301 = vunpack.c.l.b16 %v3347
        %v4302 = vunpack.c.l.b16 %v3348
        %v4303 = vunpack.c.l.b16 %v3349
        %v4304 = vunpack.c.l.b16 %v3350
        %v4305 = vunpack.c.l.b16 %v3351
        %v4306 = vunpack.c.l.b16 %v3352
        %v4307 = vunpack.c.l.b16 %v3353
        %v4308 = vunpack.c.l.b16 %v3354
        %v4309 = vunpack.c.l.b16 %v3355
        %v4310 = vunpack.c.l.b16 %v3356
        %v4311 = vunpack.c.l.b16 %v3357
        %v4312 = vunpack.c.l.b16 %v3358
        %v4313 = vunpack.c.l.b16 %v3359
        %v4314 = vunpack.c.l.b16 %v3360
        %v4315 = vunpack.c.l.b16 %v3361
        %v4316 = vunpack.c.l.b16 %v3362
        %v4317 = vunpack.c.l.b16 %v3363
        %v4318 = vunpack.c.l.b16 %v3364
        %v4319 = vunpack.c.l.b16 %v3365
        %v4320 = vunpack.c.l.b16 %v3366
        %v4321 = vunpack.c.l.b16 %v3367
        %v4322 = vunpack.c.l.b16 %v3368
        %v4323 = vunpack.c.l.b16 %v3369
        %v4324 = vunpack.c.l.b16 %v3370
        %v4325 = vunpack.c.l.b16 %v3371
        %v4326 = vunpack.c.l.b16 %v3372
        %v4327 = vunpack.c.l.b16 %v3373
        %v4328 = vunpack.c.l.b16 %v3374
        %v4329 = vunpack.c.l.b16 %v3375
        %v4330 = vunpack.c.l.b16 %v3376
        %v4331 = vunpack.c.l.b16 %v3377
        %v4332 = vunpack.c.l.b16 %v3378
        %v4333 = vunpack.c.l.b16 %v3379
        %v4334 = vunpack.c.l.b16 %v3380
        %v4335 = vunpack.c.l.b16 %v3381
        %v4336 = vunpack.c.l.b16 %v3382
        %v4337 = vunpack.c.l.b16 %v3383
        %v4338 = vunpack.c.l.b16 %v3384
        %v4339 = vunpack.c.l.b16 %v3385
        %v4340 = vunpack.c.l.b16 %v3386
        %v4341 = vunpack.c.l.b16 %v3387
        %v4342 = vunpack.c.l.b16 %v3388
        %v4343 = vunpack.c.l.b16 %v3389
        %v4344 = vunpack.c.l.b16 %v3390
        %v4345 = vunpack.c.l.b16 %v3391
        %v4346 = vunpack.c.l.b16 %v3392
        %v4347 = vunpack.c.l.b16 %v3393
        %v4348 = vunpack.c.l.b16 %v3394
        %v4349 = vunpack.c.l.b16 %v3395
        %v4350 = vunpack.c.l.b16 %v3396
        %v4351 = vunpack.c.l.b16 %v3397
        %v4352 = vunpack.c.l.b16 %v3398
        %v4353 = vunpack.c.l.b16 %v3399
        %v4354 = vunpack.c.l.b16 %v3400
        %v4355 = vunpack.c.l.b16 %v3401
        %v4356 = vunpack.c.l.b16 %v3402
        %v4357 = vunpack.c.l.b16 %v3403
        %v4358 = vunpack.c.l.b16 %v3404
        %v4359 = vunpack.c.l.b16 %v3405
        %v4360 = vunpack.c.l.b16 %v3406
        %v4361 = vunpack.c.l.b16 %v3407
        %v4362 = vunpack.c.l.b16 %v3408
        %v4363 = vunpack.c.l.b16 %v3409
        %v4364 = vunpack.c.l.b16 %v3410
        %v4365 = vunpack.c.l.b16 %v3411
        %v4366 = vunpack.c.l.b16 %v3412
        %v4367 = vunpack.c.l.b16 %v3413
        %v4368 = vunpack.c.l.b16 %v3414
        %v4369 = vunpack.c.l.b16 %v3415
        %v4370 = vunpack.c.l.b16 %v3416
        %v4371 = vunpack.c.l.b16 %v3417
        %v4372 = vunpack.c.l.b16 %v3418
        %v4373 = vunpack.c.l.b16 %v3419
        %v4374 = vunpack.c.l.b16 %v3420
        %v4375 = vunpack.c.l.b16 %v3421
        %v4376 = vunpack.c.l.b16 %v3422
        %v4377 = vunpack.c.l.b16 %v3423
        %v4378 = vunpack.c.l.b16 %v3424
        %v4379 = vunpack.c.l.b16 %v3425
        %v4380 = vunpack.c.l.b16 %v3426
        %v4381 = vunpack.c.l.b16 %v3427
        %v4382 = vunpack.c.l.b16 %v3428
        %v4383 = vunpack.c.l.b16 %v3429
        %v4384 = vunpack.c.l.b16 %v3430
        %v4385 = vunpack.c.l.b16 %v3431
        %v4386 = vunpack.c.l.b16 %v3432
        %v4387 = vunpack.c.l.b16 %v3433
        %v4388 = vunpack.c.l.b16 %v3434
        %v4389 = vunpack.c.l.b16 %v3435
        %v4390 = vunpack.c.l.b16 %v3436
        %v4391 = vunpack.c.l.b16 %v3437
        %v4392 = vunpack.c.l.b16 %v3438
        %v4393 = vunpack.c.l.b16 %v3439
        %v4394 = vunpack.c.l.b16 %v3440
        %v4395 = vunpack.c.l.b16 %v3441
        %v4396 = vunpack.c.l.b16 %v3442
        %v4397 = vunpack.c.l.b16 %v3443
        %v4398 = vunpack.c.l.b16 %v3444
        %v4399 = vunpack.c.l.b16 %v3445
        %v4400 = vunpack.c.l.b16 %v3446
        %v4401 = vunpack.c.l.b16 %v3447
        %v4402 = vunpack.c.l.b16 %v3448
        %v4403 = vunpack.c.l.b16 %v3449
        %v4404 = vunpack.c.l.b16 %v3450
        %v4405 = vunpack.c.l.b16 %v3451
        %v4406 = vunpack.c.l.b16 %v3452
        %v4407 = vunpack.c.l.b16 %v3453
        %v4408 = vunpack.c.l.b16 %v3454
        %v4409 = vunpack.c.l.b16 %v3455
        %v4410 = vunpack.c.l.b16 %v3456
        %v4411 = vunpack.c.l.b16 %v3457
        %v4412 = vunpack.c.l.b16 %v3458
        %v4413 = vunpack.c.l.b16 %v3459
        %v4414 = vunpack.c.l.b16 %v3460
        %v4415 = vunpack.c.l.b16 %v3461
        %v4416 = vunpack.c.l.b16 %v3462
        %v4417 = vunpack.c.l.b16 %v3463
        %v4418 = vunpack.c.l.b16 %v3464
        %v4419 = vunpack.c.l.b16 %v3465
        %v4420 = vunpack.c.l.b16 %v3466
        %v4421 = vunpack.c.l.b16 %v3467
        %v4422 = vunpack.c.l.b16 %v3468
        %v4423 = vunpack.c.l.b16 %v3469
        %v4424 = vunpack.c.l.b16 %v3470
        %v4425 = vunpack.c.l.b16 %v3471
        %v4426 = vunpack.c.l.b16 %v3472
        %v4427 = vunpack.c.l.b16 %v3473
        %v4428 = vunpack.c.l.b16 %v3474
        %v4429 = vunpack.c.l.b16 %v3475
        %v4430 = vunpack.c.l.b16 %v3476
        %v4431 = vunpack.c.l.b16 %v3477
        %v4432 = vunpack.c.l.b16 %v3478
        %v4433 = vunpack.c.l.b16 %v3479
        %v4434 = vunpack.c.l.b16 %v3480
        %v4435 = vunpack.c.l.b16 %v3481
        %v4436 = vunpack.c.l.b16 %v3482
        %v4437 = vunpack.c.l.b16 %v3483
        %v4438 = vunpack.c.l.b16 %v3484
        %v4439 = vunpack.c.l.b16 %v3485
        %v4440 = vunpack.c.l.b16 %v3486
        %v4441 = vunpack.c.l.b16 %v3487
        %v4442 = vunpack.c.l.b16 %v3488
        %v4443 = vunpack.c.l.b16 %v3489
        %v4444 = vunpack.c.l.b16 %v3490
        %v4445 = vunpack.c.l.b16 %v3491
        %v4446 = vunpack.c.l.b16 %v3492
        %v4447 = vunpack.c.l.b16 %v3493
        %v4448 = vunpack.c.l.b16 %v3494
        %v4449 = vunpack.c.l.b16 %v3495
        %v4450 = vunpack.c.l.b16 %v3496
        %v4451 = vunpack.c.l.b16 %v3497
        %v4452 = vunpack.c.l.b16 %v3498
        %v4453 = vunpack.c.l.b16 %v3499
        %v4454 = vunpack.c.l.b16 %v3500
        %v4455 = vunpack.c.l.b16 %v3501
        %v4456 = vunpack.c.l.b16 %v3502
        %v4457 = vunpack.c.l.b16 %v3503
        %v4458 = vunpack.c.l.b16 %v3504
        %v4459 = vunpack.c.l.b16 %v3505
        %v4460 = vunpack.c.l.b16 %v3506
        %v4461 = vunpack.c.l.b16 %v3507
        %v4462 = vunpack.c.l.b16 %v3508
        %v4463 = vunpack.c.l.b16 %v3509
        %v4464 = vunpack.c.l.b16 %v3510
        %v4465 = vunpack.c.l.b16 %v3511
        %v4466 = vunpack.c.l.b16 %v3512
        %v4467 = vunpack.c.l.b16 %v3513
        %v4468 = vunpack.c.l.b16 %v3514
        %v4469 = vpack.c.b16 %v4214, %v4213
        %v4470 = vpack.c.b16 %v4216, %v4215
        %v4471 = vpack.c.b16 %v4218, %v4217
        %v4472 = vpack.c.b16 %v4220, %v4219
        %v4473 = vpack.c.b16 %v4222, %v4221
        %v4474 = vpack.c.b16 %v4224, %v4223
        %v4475 = vpack.c.b16 %v4226, %v4225
        %v4476 = vpack.c.b16 %v4228, %v4227
        %v4477 = vpack.c.b16 %v4230, %v4229
        %v4478 = vpack.c.b16 %v4232, %v4231
        %v4479 = vpack.c.b16 %v4234, %v4233
        %v4480 = vpack.c.b16 %v4236, %v4235
        %v4481 = vpack.c.b16 %v4238, %v4237
        %v4482 = vpack.c.b16 %v4240, %v4239
        %v4483 = vpack.c.b16 %v4242, %v4241
        %v4484 = vpack.c.b16 %v4244, %v4243
        %v4485 = vpack.c.b16 %v4246, %v4245
        %v4486 = vpack.c.b16 %v4248, %v4247
        %v4487 = vpack.c.b16 %v4250, %v4249
        %v4488 = vpack.c.b16 %v4252, %v4251
        %v4489 = vpack.c.b16 %v4254, %v4253
        %v4490 = vpack.c.b16 %v4256, %v4255
        %v4491 = vpack.c.b16 %v4258, %v4257
        %v4492 = vpack.c.b16 %v4260, %v4259
        %v4493 = vpack.c.b16 %v4262, %v4261
        %v4494 = vpack.c.b16 %v4264, %v4263
        %v4495 = vpack.c.b16 %v4266, %v4265
        %v4496 = vpack.c.b16 %v4268, %v4267
        %v4497 = vpack.c.b16 %v4270, %v4269
        %v4498 = vpack.c.b16 %v4272, %v4271
        %v4499 = vpack.c.b16 %v4274, %v4273
        %v4500 = vpack.c.b16 %v4276, %v4275
        %v4501 = vpack.c.b16 %v4278, %v4277
        %v4502 = vpack.c.b16 %v4280, %v4279
        %v4503 = vpack.c.b16 %v4282, %v4281
        %v4504 = vpack.c.b16 %v4284, %v4283
        %v4505 = vpack.c.b16 %v4286, %v4285
        %v4506 = vpack.c.b16 %v4288, %v4287
        %v4507 = vpack.c.b16 %v4290, %v4289
        %v4508 = vpack.c.b16 %v4292, %v4291
        %v4509 = vpack.c.b16 %v4294, %v4293
        %v4510 = vpack.c.b16 %v4296, %v4295
        %v4511 = vpack.c.b16 %v4298, %v4297
        %v4512 = vpack.c.b16 %v4300, %v4299
        %v4513 = vpack.c.b16 %v4302, %v4301
        %v4514 = vpack.c.b16 %v4304, %v4303
        %v4515 = vpack.c.b16 %v4306, %v4305
        %v4516 = vpack.c.b16 %v4308, %v4307
        %v4517 = vpack.c.b16 %v4310, %v4309
        %v4518 = vpack.c.b16 %v4312, %v4311
        %v4519 = vpack.c.b16 %v4314, %v4313
        %v4520 = vpack.c.b16 %v4316, %v4315
        %v4521 = vpack.c.b16 %v4318, %v4317
        %v4522 = vpack.c.b16 %v4320, %v4319
        %v4523 = vpack.c.b16 %v4322, %v4321
        %v4524 = vpack.c.b16 %v4324, %v4323
        %v4525 = vpack.c.b16 %v4326, %v4325
        %v4526 = vpack.c.b16 %v4328, %v4327
        %v4527 = vpack.c.b16 %v4330, %v4329
        %v4528 = vpack.c.b16 %v4332, %v4331
        %v4529 = vpack.c.b16 %v4334, %v4333
        %v4530 = vpack.c.b16 %v4336, %v4335
        %v4531 = vpack.c.b16 %v4338, %v4337
        %v4532 = vpack.c.b16 %v4340, %v4339
        %v4533 = vpack.c.b16 %v4342, %v4341
        %v4534 = vpack.c.b16 %v4344, %v4343
        %v4535 = vpack.c.b16 %v4346, %v4345
        %v4536 = vpack.c.b16 %v4348, %v4347
        %v4537 = vpack.c.b16 %v4350, %v4349
        %v4538 = vpack.c.b16 %v4352, %v4351
        %v4539 = vpack.c.b16 %v4354, %v4353
        %v4540 = vpack.c.b16 %v4356, %v4355
        %v4541 = vpack.c.b16 %v4358, %v4357
        %v4542 = vpack.c.b16 %v4360, %v4359
        %v4543 = vpack.c.b16 %v4362, %v4361
        %v4544 = vpack.c.b16 %v4364, %v4363
        %v4545 = vpack.c.b16 %v4366, %v4365
        %v4546 = vpack.c.b16 %v4368, %v4367
        %v4547 = vpack.c.b16 %v4370, %v4369
        %v4548 = vpack.c.b16 %v4372, %v4371
        %v4549 = vpack.c.b16 %v4374, %v4373
        %v4550 = vpack.c.b16 %v4376, %v4375
        %v4551 = vpack.c.b16 %v4378, %v4377
        %v4552 = vpack.c.b16 %v4380, %v4379
        %v4553 = vpack.c.b16 %v4382, %v4381
        %v4554 = vpack.c.b16 %v4384, %v4383
        %v4555 = vpack.c.b16 %v4386, %v4385
        %v4556 = vpack.c.b16 %v4388, %v4387
        %v4557 = vpack.c.b16 %v4390, %v4389
        %v4558 = vpack.c.b16 %v4392, %v4391
        %v4559 = vpack.c.b16 %v4394, %v4393
        %v4560 = vpack.c.b16 %v4396, %v4395
        %v4561 = vpack.c.b16 %v4398, %v4397
        %v4562 = vpack.c.b16 %v4400, %v4399
        %v4563 = vpack.c.b16 %v4402, %v4401
        %v4564 = vpack.c.b16 %v4404, %v4403
        %v4565 = vpack.c.b16 %v4406, %v4405
        %v4566 = vpack.c.b16 %v4408, %v4407
        %v4567 = vpack.c.b16 %v4410, %v4409
        %v4568 = vpack.c.b16 %v4412, %v4411
        %v4569 = vpack.c.b16 %v4414, %v4413
        %v4570 = vpack.c.b16 %v4416, %v4415
        %v4571 = vpack.c.b16 %v4418, %v4417
        %v4572 = vpack.c.b16 %v4420, %v4419
        %v4573 = vpack.c.b16 %v4422, %v4421
        %v4574 = vpack.c.b16 %v4424, %v4423
        %v4575 = vpack.c.b16 %v4426, %v4425
        %v4576 = vpack.c.b16 %v4428, %v4427
        %v4577 = vpack.c.b16 %v4430, %v4429
        %v4578 = vpack.c.b16 %v4432, %v4431
        %v4579 = vpack.c.b16 %v4434, %v4433
        %v4580 = vpack.c.b16 %v4436, %v4435
        %v4581 = vpack.c.b16 %v4438, %v4437
        %v4582 = vpack.c.b16 %v4440, %v4439
        %v4583 = vpack.c.b16 %v4442, %v4441
        %v4584 = vpack.c.b16 %v4444, %v4443
        %v4585 = vpack.c.b16 %v4446, %v4445
        %v4586 = vpack.c.b16 %v4448, %v4447
        %v4587 = vpack.c.b16 %v4450, %v4449
        %v4588 = vpack.c.b16 %v4452, %v4451
        %v4589 = vpack.c.b16 %v4454, %v4453
        %v4590 = vpack.c.b16 %v4456, %v4455
        %v4591 = vpack.c.b16 %v4458, %v4457
        %v4592 = vpack.c.b16 %v4460, %v4459
        %v4593 = vpack.c.b16 %v4462, %v4461
        %v4594 = vpack.c.b16 %v4464, %v4463
        %v4595 = vpack.c.b16 %v4466, %v4465
        %v4596 = vpack.c.b16 %v4468, %v4467
        %4725 = vmatpush.bf16.msra.mxu0 %v4476
        %4726 = vmatpush.bf16.msra.mxu0 %v4475
        %4727 = vmatpush.bf16.msra.mxu0 %v4474
        %4728 = vmatpush.bf16.msra.mxu0 %v4473
        %4729 = vmatpush.bf16.msra.mxu0 %v4472
        %4730 = vmatpush.bf16.msra.mxu0 %v4471
        %4731 = vmatpush.bf16.msra.mxu0 %v4470
        %4732 = vmatpush.bf16.msra.mxu0 %v4469
        %4733 = vmatmul.bf16.gmra.mxu0 %v3938
        %v4734 = vpop.f32.mrf.mxu0
        %v4735 = vadd.f32 %v3955, %v4734
        %v4736 = vpop.f32.mrf.mxu0
        %4737 = vdwg.mxu0
        %4738 = vmatpush.bf16.msra.mxu0 %v4484
        %4739 = vmatpush.bf16.msra.mxu0 %v4483
        %4740 = vmatpush.bf16.msra.mxu0 %v4482
        %4741 = vmatpush.bf16.msra.mxu0 %v4481
        %4742 = vmatpush.bf16.msra.mxu0 %v4480
        %4743 = vmatpush.bf16.msra.mxu0 %v4479
        %4744 = vmatpush.bf16.msra.mxu0 %v4478
        %4745 = vmatpush.bf16.msra.mxu0 %v4477
        %4746 = vmatmul.bf16.gmra.mxu0 %v3939
        %v4747 = vpop.f32.mrf.mxu0
        %v4748 = vadd.f32 %v4735, %v4747
        %v4749 = vpop.f32.mrf.mxu0
        %4750 = vdwg.mxu0
        %4751 = vmatpush.bf16.msra.mxu0 %v4492
        %4752 = vmatpush.bf16.msra.mxu0 %v4491
        %4753 = vmatpush.bf16.msra.mxu0 %v4490
        %4754 = vmatpush.bf16.msra.mxu0 %v4489
        %4755 = vmatpush.bf16.msra.mxu0 %v4488
        %4756 = vmatpush.bf16.msra.mxu0 %v4487
        %4757 = vmatpush.bf16.msra.mxu0 %v4486
        %4758 = vmatpush.bf16.msra.mxu0 %v4485
        %4759 = vmatmul.bf16.gmra.mxu0 %v3940
        %v4760 = vpop.f32.mrf.mxu0
        %v4761 = vadd.f32 %v4748, %v4760
        %v4762 = vpop.f32.mrf.mxu0
        %4763 = vdwg.mxu0
        %4764 = vmatpush.bf16.msra.mxu0 %v4500
        %4765 = vmatpush.bf16.msra.mxu0 %v4499
        %4766 = vmatpush.bf16.msra.mxu0 %v4498
        %4767 = vmatpush.bf16.msra.mxu0 %v4497
        %4768 = vmatpush.bf16.msra.mxu0 %v4496
        %4769 = vmatpush.bf16.msra.mxu0 %v4495
        %4770 = vmatpush.bf16.msra.mxu0 %v4494
        %4771 = vmatpush.bf16.msra.mxu0 %v4493
        %4772 = vmatmul.bf16.gmra.mxu0 %v3941
        %v4773 = vpop.f32.mrf.mxu0
        %v4774 = vadd.f32 %v4761, %v4773
        %v4775 = vpop.f32.mrf.mxu0
        %4776 = vdwg.mxu0
        %4777 = vmatpush.bf16.msra.mxu0 %v4508
        %4778 = vmatpush.bf16.msra.mxu0 %v4507
        %4779 = vmatpush.bf16.msra.mxu0 %v4506
        %4780 = vmatpush.bf16.msra.mxu0 %v4505
        %4781 = vmatpush.bf16.msra.mxu0 %v4504
        %4782 = vmatpush.bf16.msra.mxu0 %v4503
        %4783 = vmatpush.bf16.msra.mxu0 %v4502
        %4784 = vmatpush.bf16.msra.mxu0 %v4501
        %4785 = vmatmul.bf16.gmra.mxu0 %v3942
        %v4786 = vpop.f32.mrf.mxu0
        %v4787 = vadd.f32 %v4774, %v4786
        %v4788 = vpop.f32.mrf.mxu0
        %4789 = vdwg.mxu0
        %4790 = vmatpush.bf16.msra.mxu0 %v4516
        %4791 = vmatpush.bf16.msra.mxu0 %v4515
        %4792 = vmatpush.bf16.msra.mxu0 %v4514
        %4793 = vmatpush.bf16.msra.mxu0 %v4513
        %4794 = vmatpush.bf16.msra.mxu0 %v4512
        %4795 = vmatpush.bf16.msra.mxu0 %v4511
        %4796 = vmatpush.bf16.msra.mxu0 %v4510
        %4797 = vmatpush.bf16.msra.mxu0 %v4509
        %4798 = vmatmul.bf16.gmra.mxu0 %v3943
        %v4799 = vpop.f32.mrf.mxu0
        %v4800 = vadd.f32 %v4787, %v4799
        %v4801 = vpop.f32.mrf.mxu0
        %4802 = vdwg.mxu0
        %4803 = vmatpush.bf16.msra.mxu0 %v4524
        %4804 = vmatpush.bf16.msra.mxu0 %v4523
        %4805 = vmatpush.bf16.msra.mxu0 %v4522
        %4806 = vmatpush.bf16.msra.mxu0 %v4521
        %4807 = vmatpush.bf16.msra.mxu0 %v4520
        %4808 = vmatpush.bf16.msra.mxu0 %v4519
        %4809 = vmatpush.bf16.msra.mxu0 %v4518
        %4810 = vmatpush.bf16.msra.mxu0 %v4517
        %4811 = vmatmul.bf16.gmra.mxu0 %v3944
        %v4812 = vpop.f32.mrf.mxu0
        %v4813 = vadd.f32 %v4800, %v4812
        %v4814 = vpop.f32.mrf.mxu0
        %4815 = vdwg.mxu0
        %4816 = vmatpush.bf16.msra.mxu0 %v4532
        %4817 = vmatpush.bf16.msra.mxu0 %v4531
        %4818 = vmatpush.bf16.msra.mxu0 %v4530
        %4819 = vmatpush.bf16.msra.mxu0 %v4529
        %4820 = vmatpush.bf16.msra.mxu0 %v4528
        %4821 = vmatpush.bf16.msra.mxu0 %v4527
        %4822 = vmatpush.bf16.msra.mxu0 %v4526
        %4823 = vmatpush.bf16.msra.mxu0 %v4525
        %4824 = vmatmul.bf16.gmra.mxu0 %v3945
        %v4825 = vpop.f32.mrf.mxu0
        %v4826 = vadd.f32 %v4813, %v4825
        %v4827 = vpop.f32.mrf.mxu0
        %4828 = vdwg.mxu0
        %4829 = vmatpush.bf16.msra.mxu0 %v4540
        %4830 = vmatpush.bf16.msra.mxu0 %v4539
        %4831 = vmatpush.bf16.msra.mxu0 %v4538
        %4832 = vmatpush.bf16.msra.mxu0 %v4537
        %4833 = vmatpush.bf16.msra.mxu0 %v4536
        %4834 = vmatpush.bf16.msra.mxu0 %v4535
        %4835 = vmatpush.bf16.msra.mxu0 %v4534
        %4836 = vmatpush.bf16.msra.mxu0 %v4533
        %4837 = vmatmul.bf16.gmra.mxu0 %v3946
        %v4838 = vpop.f32.mrf.mxu0
        %v4839 = vadd.f32 %v4826, %v4838
        %v4840 = vpop.f32.mrf.mxu0
        %4841 = vdwg.mxu0
        %4842 = vmatpush.bf16.msra.mxu0 %v4548
        %4843 = vmatpush.bf16.msra.mxu0 %v4547
        %4844 = vmatpush.bf16.msra.mxu0 %v4546
        %4845 = vmatpush.bf16.msra.mxu0 %v4545
        %4846 = vmatpush.bf16.msra.mxu0 %v4544
        %4847 = vmatpush.bf16.msra.mxu0 %v4543
        %4848 = vmatpush.bf16.msra.mxu0 %v4542
        %4849 = vmatpush.bf16.msra.mxu0 %v4541
        %4850 = vmatmul.bf16.gmra.mxu0 %v3947
        %v4851 = vpop.f32.mrf.mxu0
        %v4852 = vadd.f32 %v4839, %v4851
        %v4853 = vpop.f32.mrf.mxu0
        %4854 = vdwg.mxu0
        %4855 = vmatpush.bf16.msra.mxu0 %v4556
        %4856 = vmatpush.bf16.msra.mxu0 %v4555
        %4857 = vmatpush.bf16.msra.mxu0 %v4554
        %4858 = vmatpush.bf16.msra.mxu0 %v4553
        %4859 = vmatpush.bf16.msra.mxu0 %v4552
        %4860 = vmatpush.bf16.msra.mxu0 %v4551
        %4861 = vmatpush.bf16.msra.mxu0 %v4550
        %4862 = vmatpush.bf16.msra.mxu0 %v4549
        %4863 = vmatmul.bf16.gmra.mxu0 %v3948
        %v4864 = vpop.f32.mrf.mxu0
        %v4865 = vadd.f32 %v4852, %v4864
        %v4866 = vpop.f32.mrf.mxu0
        %4867 = vdwg.mxu0
        %4868 = vmatpush.bf16.msra.mxu0 %v4564
        %4869 = vmatpush.bf16.msra.mxu0 %v4563
        %4870 = vmatpush.bf16.msra.mxu0 %v4562
        %4871 = vmatpush.bf16.msra.mxu0 %v4561
        %4872 = vmatpush.bf16.msra.mxu0 %v4560
        %4873 = vmatpush.bf16.msra.mxu0 %v4559
        %4874 = vmatpush.bf16.msra.mxu0 %v4558
        %4875 = vmatpush.bf16.msra.mxu0 %v4557
        %4876 = vmatmul.bf16.gmra.mxu0 %v3949
        %v4877 = vpop.f32.mrf.mxu0
        %v4878 = vadd.f32 %v4865, %v4877
        %v4879 = vpop.f32.mrf.mxu0
        %4880 = vdwg.mxu0
        %4881 = vmatpush.bf16.msra.mxu0 %v4572
        %4882 = vmatpush.bf16.msra.mxu0 %v4571
        %4883 = vmatpush.bf16.msra.mxu0 %v4570
        %4884 = vmatpush.bf16.msra.mxu0 %v4569
        %4885 = vmatpush.bf16.msra.mxu0 %v4568
        %4886 = vmatpush.bf16.msra.mxu0 %v4567
        %4887 = vmatpush.bf16.msra.mxu0 %v4566
        %4888 = vmatpush.bf16.msra.mxu0 %v4565
        %4889 = vmatmul.bf16.gmra.mxu0 %v3950
        %v4890 = vpop.f32.mrf.mxu0
        %v4891 = vadd.f32 %v4878, %v4890
        %v4892 = vpop.f32.mrf.mxu0
        %4893 = vdwg.mxu0
        %4894 = vmatpush.bf16.msra.mxu0 %v4580
        %4895 = vmatpush.bf16.msra.mxu0 %v4579
        %4896 = vmatpush.bf16.msra.mxu0 %v4578
        %4897 = vmatpush.bf16.msra.mxu0 %v4577
        %4898 = vmatpush.bf16.msra.mxu0 %v4576
        %4899 = vmatpush.bf16.msra.mxu0 %v4575
        %4900 = vmatpush.bf16.msra.mxu0 %v4574
        %4901 = vmatpush.bf16.msra.mxu0 %v4573
        %4902 = vmatmul.bf16.gmra.mxu0 %v3951
        %v4903 = vpop.f32.mrf.mxu0
        %v4904 = vadd.f32 %v4891, %v4903
        %v4905 = vpop.f32.mrf.mxu0
        %4906 = vdwg.mxu0
        %4907 = vmatpush.bf16.msra.mxu0 %v4588
        %4908 = vmatpush.bf16.msra.mxu0 %v4587
        %4909 = vmatpush.bf16.msra.mxu0 %v4586
        %4910 = vmatpush.bf16.msra.mxu0 %v4585
        %4911 = vmatpush.bf16.msra.mxu0 %v4584
        %4912 = vmatpush.bf16.msra.mxu0 %v4583
        %4913 = vmatpush.bf16.msra.mxu0 %v4582
        %4914 = vmatpush.bf16.msra.mxu0 %v4581
        %4915 = vmatmul.bf16.gmra.mxu0 %v3952
        %v4916 = vpop.f32.mrf.mxu0
        %v4917 = vadd.f32 %v4904, %v4916
        %v4918 = vpop.f32.mrf.mxu0
        %4919 = vdwg.mxu0
        %4920 = vmatpush.bf16.msra.mxu0 %v4596
        %4921 = vmatpush.bf16.msra.mxu0 %v4595
        %4922 = vmatpush.bf16.msra.mxu0 %v4594
        %4923 = vmatpush.bf16.msra.mxu0 %v4593
        %4924 = vmatpush.bf16.msra.mxu0 %v4592
        %4925 = vmatpush.bf16.msra.mxu0 %v4591
        %4926 = vmatpush.bf16.msra.mxu0 %v4590
        %4927 = vmatpush.bf16.msra.mxu0 %v4589
        %4928 = vmatmul.bf16.gmra.mxu0 %v3953
        %v4929 = vpop.f32.mrf.mxu0
        %v4930 = vadd.f32 %v4917, %v4929
        %v4931 = vpop.f32.mrf.mxu0
        %4932 = vdwg.mxu0
        %v4933 = vadd.f32 %v3195, %v4930
        %4934 = vst.msk [vmem:[%s897] sm:$0xff] %vm929, %v4933
        %s4935 = sand.u32 %s668, 1
        %s4936 = scalar_lea.sflag [#allocation3], %s4935
        %s4937 = sand.u32 %s668, 1
        %s4938 = smul.addr %s4937, 8
        %s4939 = scalar_lea.vmem [#allocation2], %s4938
        // Predicated region
        $region133: #{tpu_custom_call.1} parent=131 // pred_check
          %p4940 = pneg %p678
        $region134: #{tpu_custom_call.1} parent=131 // pred_check_branch
          %4942 = sbr.rel (%p4940) target = $region136
        $region135: #{tpu_custom_call.1} parent=131 // pred_region
          %4944 = vsyncadd %s4936, 0
          %s4945 = smul.addr %s42, 8
          %s4946 = scalar_lea.hbm %s28, %s4945
          %s4948 = sshll.u32 %s4939, 4
          %s4949 = int_to_ptr.vmem [resolvable:$true] %s4948
          %s4950 = sshll.u32 %s4946, 4
          %s4951 = int_to_ptr.hbm [resolvable:$true] %s4950
          %4953 = dma.vmem_to_hbm [thread:$0]  %s4949, 128, %s4951, %s4936
        $region136: #{tpu_custom_call.1} parent=131 // pred_fallthru
          _
      $region132: #{tpu_custom_call.1} parent=5 // pred_fallthru
        _
      %p4954 = scmp.le.s32.totalorder 2, %s37
      // Predicated region
      $region137: #{tpu_custom_call.1} parent=5 // pred_check
        %p4955 = pneg %p4954
      $region138: #{tpu_custom_call.1} parent=5 // pred_check_branch
        %4957 = sbr.rel (%p4955) target = $region140
      $region139: #{tpu_custom_call.1} parent=5 // pred_region
        %s4958 = ssub.s32 %s37, 2
        // Predicated region
        $region141: #{tpu_custom_call.1} parent=139 // pred_check
          %p4959 = pneg %p684
        $region142: #{tpu_custom_call.1} parent=139 // pred_check_branch
          %4961 = sbr.rel (%p4959) target = $region144
        $region143: #{tpu_custom_call.1} parent=139 // pred_region
          %s4962 = sand.u32 %s669, 1
          %s4963 = scalar_lea.sflag [#allocation3], %s4962
          %s4964 = sand.u32 %s669, 1
          %s4965 = smul.addr %s4964, 8
          %s4966 = scalar_lea.vmem [#allocation2], %s4965
          %4968 = dma.done %s4963, 128
        $region144: #{tpu_custom_call.1} parent=139 // pred_fallthru
          _
      $region140: #{tpu_custom_call.1} parent=5 // pred_fallthru
        _
    $region6: #{tpu_custom_call.1} parent=1 // loop_footer
      %s41 = sadd.s32 1, %s37
    $region7: #{tpu_custom_call.1} parent=1 // loop_footer_branch
      %36 = sbr.rel target = $region3
    $region8: #{tpu_custom_call.1} parent=1 // loop_exit
      _
    %4969 = vsyncpa [#allocation3], 1
    %s4970 = scalar_lea.sflag [#allocation3], 1
    %4971 = vsyncpa %s4970, 1

</llo_original>
